<compile_context>
chip_gen: v6e
topology: v6e:2x2x1
jax: 0.10.0
libtpu: 0.0.40
codegen_flags: <defaults>
</compile_context>

<pallas_src>
import functools

import jax
import jax.numpy as jnp
import numpy as np
from jax.experimental import pallas as pl
from jax.experimental.pallas import tpu as pltpu

LANES = 128            # every matmul output is padded to this lane width
STEM_C = 16            # stem output channels
BRANCH_C = 8           # channels of each inception branch
_MAX_SINGLE_K = 1024   # largest K handled by the single-tile fast path


def _round_up(x, m):
    return (x + m - 1) // m * m


def _pick_tiles_m(m):
    """Two 'parallel' M tiles (keeps both v7x TensorCores busy); one for tiny M."""
    if m <= 16:
        mp = _round_up(m, 8)
        return mp, mp
    tm = _round_up(-(-m // 2), 8)
    return tm, 2 * tm


# ----------------------------------------------------------------------------
# Pallas kernels
# ----------------------------------------------------------------------------
def _matmul_bias_act_kernel(a_ref, w_ref, b_ref, o_ref, *, relu):
    """Single-K-tile matmul with fused bias + optional ReLU (no accumulator)."""
    out = jnp.dot(a_ref[...], w_ref[...], preferred_element_type=jnp.float32)
    out = out + b_ref[...]
    if relu:
        out = jnp.maximum(out, 0.0)
    o_ref[...] = out.astype(o_ref.dtype)


def _matmul_bias_act_acc_kernel(a_ref, w_ref, b_ref, o_ref, acc_ref, *, relu):
    """K-tiled fallback (K > _MAX_SINGLE_K): f32 VMEM accumulator + finalize."""
    k = pl.program_id(1)

    @pl.when(k == 0)
    def _():
        acc_ref[...] = jnp.zeros_like(acc_ref)

    acc_ref[...] += jnp.dot(a_ref[...], w_ref[...],
                            preferred_element_type=jnp.float32)

    @pl.when(k == pl.num_programs(1) - 1)
    def _():
        out = acc_ref[...] + b_ref[...]
        if relu:
            out = jnp.maximum(out, 0.0)
        o_ref[...] = out.astype(o_ref.dtype)


def _avg_pool3x3_kernel(xp_ref, o_ref, *, H, W):
    """Separable 3x3 avg pool: 3 vertical + 3 horizontal adds, all in VMEM."""
    x = xp_ref[...].astype(jnp.float32)                       # (1, H+2, W+2, C)
    v = x[:, 0:H, :, :] + x[:, 1:H + 1, :, :] + x[:, 2:H + 2, :, :]
    o = v[:, :, 0:W, :] + v[:, :, 1:W + 1, :] + v[:, :, 2:W + 2, :]
    o_ref[...] = (o * (1.0 / 9.0)).astype(o_ref.dtype)


def _gap_concat_kernel(f_ref, b2_ref, b3_ref, o_ref, *, n_img, hw):
    """Fused concat + global average pool over the 2-D matmul outputs.

    f_ref : fused 1x1 matmul output; rows [0, n_img*hw) are the x rows
            (lanes 0:8 = branch-1), rows [n_img*hw, 2*n_img*hw) are the
            avg-pooled rows (lanes 24:32 = pool branch).
    b2/b3 : 3x3 / 5x5 branch matmul outputs (real channels in lanes 0:8).
    o_ref : (4*n_img, 128) f32; row (branch*n_img + n) = per-image channel mean.
    Padded M rows of the matmul outputs are never read (only rows [0, hw) per
    image), so they cannot pollute the means.
    """
    inv = 1.0 / hw
    for n in range(n_img):
        r0 = n * hw
        br1 = jnp.sum(f_ref[r0:r0 + hw, :].astype(jnp.float32),
                      axis=0, keepdims=True) * inv
        br2 = jnp.sum(b2_ref[r0:r0 + hw, :].astype(jnp.float32),
                      axis=0, keepdims=True) * inv
        br3 = jnp.sum(b3_ref[r0:r0 + hw, :].astype(jnp.float32),
                      axis=0, keepdims=True) * inv
        p0 = n_img * hw + r0
        br4 = jnp.sum(f_ref[p0:p0 + hw, :].astype(jnp.float32),
                      axis=0, keepdims=True) * inv
        o_ref[0 * n_img + n:0 * n_img + n + 1, :] = br1
        o_ref[1 * n_img + n:1 * n_img + n + 1, :] = br2
        o_ref[2 * n_img + n:2 * n_img + n + 1, :] = br3
        o_ref[3 * n_img + n:3 * n_img + n + 1, :] = br4


# ----------------------------------------------------------------------------
# Pallas wrappers
# ----------------------------------------------------------------------------
def pallas_matmul_bias_act(a, w, b, relu=True):
    """a: (M, K) bf16 (K unpadded), w: (K, N_pad) bf16 prepped, b: (1, N_pad) f32.

    Returns the full (M_pad, N_pad) bf16 output (lane-dense; padded rows carry
    relu(bias) garbage and must be ignored by the caller).
    """
    M, K = a.shape
    Kw, N_pad = w.shape
    assert Kw == K, (Kw, K)
    assert N_pad % LANES == 0
    tm, M_pad = _pick_tiles_m(M)
    if M_pad != M:
        a = jnp.pad(a, ((0, M_pad - M), (0, 0)))

    if K <= _MAX_SINGLE_K:
        # Fast path: one K tile -> write relu(dot + bias) directly, no scratch.
        return pl.pallas_call(
            functools.partial(_matmul_bias_act_kernel, relu=relu),
            out_shape=jax.ShapeDtypeStruct((M_pad, N_pad), jnp.bfloat16),
            grid=(M_pad // tm,),
            in_specs=[
                pl.BlockSpec((tm, K), lambda i: (i, 0)),
                pl.BlockSpec((K, N_pad), lambda i: (0, 0)),
                pl.BlockSpec((1, N_pad), lambda i: (0, 0)),
            ],
            out_specs=pl.BlockSpec((tm, N_pad), lambda i: (i, 0)),
            compiler_params=pltpu.CompilerParams(
                dimension_semantics=("parallel",)),
        )(a, w, b)

    # K-tiled accumulator fallback (not hit at these channel widths).
    # TODO(synk): for real InceptionV3 widths also add an N grid axis and
    # re-derive tiles for v7x's 64 MiB VMEM.
    tk = 512
    K_pad = _round_up(K, tk)
    a = jnp.pad(a, ((0, 0), (0, K_pad - K)))
    w = jnp.pad(w, ((0, K_pad - K), (0, 0)))
    return pl.pallas_call(
        functools.partial(_matmul_bias_act_acc_kernel, relu=relu),
        out_shape=jax.ShapeDtypeStruct((M_pad, N_pad), jnp.bfloat16),
        grid=(M_pad // tm, K_pad // tk),
        in_specs=[
            pl.BlockSpec((tm, tk), lambda i, k: (i, k)),
            pl.BlockSpec((tk, N_pad), lambda i, k: (k, 0)),
            pl.BlockSpec((1, N_pad), lambda i, k: (0, 0)),
        ],
        out_specs=pl.BlockSpec((tm, N_pad), lambda i, k: (i, 0)),
        scratch_shapes=[pltpu.VMEM((tm, N_pad), jnp.float32)],
        compiler_params=pltpu.CompilerParams(
            dimension_semantics=("parallel", "arbitrary")),
    )(a, w, b)


def pallas_avg_pool3x3_same(x):
    """3x3, stride 1, padding 1 avg pool (count_include_pad=True), NHWC bf16."""
    N, H, W, C = x.shape
    xp = jnp.pad(x, ((0, 0), (1, 1), (1, 1), (0, 0)))
    return pl.pallas_call(
        functools.partial(_avg_pool3x3_kernel, H=H, W=W),
        out_shape=jax.ShapeDtypeStruct((N, H, W, C), x.dtype),
        grid=(N,),
        in_specs=[pl.BlockSpec((1, H + 2, W + 2, C), lambda n: (n, 0, 0, 0))],
        out_specs=pl.BlockSpec((1, H, W, C), lambda n: (n, 0, 0, 0)),
        compiler_params=pltpu.CompilerParams(
            dimension_semantics=("parallel",)),
    )(xp)


def pallas_gap_concat(fused, c3, c5, n_img, hw):
    """One launch: per-branch global average pools straight off the 2-D outputs."""
    g = pl.pallas_call(
        functools.partial(_gap_concat_kernel, n_img=n_img, hw=hw),
        out_shape=jax.ShapeDtypeStruct((4 * n_img, LANES), jnp.float32),
    )(fused, c3, c5)
    return g.reshape(4, n_img, LANES)


# ----------------------------------------------------------------------------
# Glue: im2col (parameter plumbing stays in JAX)
# ----------------------------------------------------------------------------
def im2col(x, kh, kw, stride, padding):
    """x: (N, H, W, C) -> (N*Ho*Wo, kh*kw*C) patch rows, feature order (i, j, c).

    TODO(synk): patches are still formed in XLA/HBM (kh*kw byte expansion); a
    fully fused conv would DMA the NHWC tile + halo and form rows in VMEM --
    this matters on v5e at real InceptionV3 resolutions.
    """
    N, H, W, C = x.shape
    if padding:
        x = jnp.pad(x, ((0, 0), (padding, padding), (padding, padding), (0, 0)))
    Ho = (H + 2 * padding - kh) // stride + 1
    Wo = (W + 2 * padding - kw) // stride + 1
    cols = []
    for i in range(kh):
        for j in range(kw):
            cols.append(x[:, i:i + Ho * stride:stride,
                          j:j + Wo * stride:stride, :])
    patches = jnp.concatenate(cols, axis=-1)                # (N, Ho, Wo, kh*kw*C)
    return patches.reshape(N * Ho * Wo, kh * kw * C), (N, Ho, Wo)


# ----------------------------------------------------------------------------
# Deterministic parameter construction + one-time kernel-layout preparation
# ----------------------------------------------------------------------------
def make_conv_params(key, kh, kw, cin, cout):
    k1, k2 = jax.random.split(key)
    fan_in = kh * kw * cin
    w = jax.random.normal(k1, (kh, kw, cin, cout), jnp.float32) / np.sqrt(fan_in)
    b = 0.01 * jax.random.normal(k2, (cout,), jnp.float32)
    return w, b


def make_params(key):
    keys = jax.random.split(key, 7)
    return {
        # stem: 3 -> 16 channels, 3x3 stride 2 (Inception-style stem conv)
        "stem": make_conv_params(keys[0], 3, 3, 3, STEM_C),
        # InceptionA-like block on 16 channels, 4 branches of 8 -> concat 32
        "b1x1": make_conv_params(keys[1], 1, 1, STEM_C, BRANCH_C),
        "b3x3_reduce": make_conv_params(keys[2], 1, 1, STEM_C, BRANCH_C),
        "b3x3": make_conv_params(keys[3], 3, 3, BRANCH_C, BRANCH_C),
        "b5x5_reduce": make_conv_params(keys[4], 1, 1, STEM_C, BRANCH_C),
        "b5x5": make_conv_params(keys[5], 5, 5, BRANCH_C, BRANCH_C),
        "bpool": make_conv_params(keys[6], 1, 1, STEM_C, BRANCH_C),
    }


def _prep_conv(w, b, k_pad_to=None):
    """(kh,kw,cin,cout) -> (K_pad, N_pad) bf16 weight + (1, N_pad) f32 bias."""
    kh, kw, cin, cout = w.shape
    K = kh * kw * cin
    k_pad_to = K if k_pad_to is None else max(k_pad_to, K)
    n_pad_to = _round_up(cout, LANES)
    wm = jnp.pad(w.reshape(K, cout),
                 ((0, k_pad_to - K), (0, n_pad_to - cout))).astype(jnp.bfloat16)
    bm = jnp.pad(b, (0, n_pad_to - cout)).astype(jnp.float32).reshape(1, n_pad_to)
    return wm, bm


def prepare_params(params):
    """Hoisted, one-time reshape + pad + bf16 cast of all conv weights."""
    prep = {}
    prep["stem_w"], prep["stem_b"] = _prep_conv(*params["stem"])
    # Fuse the four 1x1 convs (b1x1 | b3x3_reduce | b5x5_reduce | bpool) into a
    # single weight; K padded to 128 so it consumes the lane-dense stem output
    # (padded input lanes are exact zeros, so results are unchanged).
    w1, b1 = params["b1x1"]
    w2, b2 = params["b3x3_reduce"]
    w3, b3 = params["b5x5_reduce"]
    w4, b4 = params["bpool"]
    wf = jnp.concatenate([w1, w2, w3, w4], axis=-1)          # (1,1,16,32)
    bf = jnp.concatenate([b1, b2, b3, b4], axis=-1)          # (32,)
    prep["fused_w"], prep["fused_b"] = _prep_conv(wf, bf, k_pad_to=LANES)
    prep["b3x3_w"], prep["b3x3_b"] = _prep_conv(*params["b3x3"])
    prep["b5x5_w"], prep["b5x5_b"] = _prep_conv(*params["b5x5"])
    return prep


# ----------------------------------------------------------------------------
# FeatureExtractor forward (fc = Identity)
# ----------------------------------------------------------------------------
def feature_extractor(x_nchw, prep):
    # PyTorch semantics: NCHW image batch in -> pooled feature matrix out.
    n_img = x_nchw.shape[0]
    x = jnp.transpose(x_nchw, (0, 2, 3, 1)).astype(jnp.bfloat16)  # NHWC, bf16 once

    # Stem conv: 3x3 stride 2, valid, ReLU.
    patches, (_, Ho, Wo) = im2col(x, 3, 3, stride=2, padding=0)
    stem = pallas_matmul_bias_act(patches, prep["stem_w"], prep["stem_b"])
    hw = Ho * Wo
    m_x = n_img * hw
    stem_sp = stem[:m_x].reshape(n_img, Ho, Wo, LANES)  # lanes 16:128 are zeros

    # 3x3 avg pool (stride 1, same) on the lane-dense stem activation.
    pooled_sp = pallas_avg_pool3x3_same(stem_sp)

    # ONE fused 1x1 matmul for all four 1x1 branch convs: rows of x and of the
    # avg-pooled x stacked along M, output lanes [0:8|8:16|16:24|24:32] =
    # b1x1 | b3x3_reduce | b5x5_reduce | bpool.
    x_rows = stem_sp.reshape(m_x, LANES)
    p_rows = pooled_sp.reshape(m_x, LANES)
    fused_in = jnp.concatenate([x_rows, p_rows], axis=0)          # (2*m_x, 128)
    fused = pallas_matmul_bias_act(fused_in, prep["fused_w"], prep["fused_b"])

    # Branch 3x3 / 5x5 convs on their 8-channel reducer outputs.
    br2_in = fused[:m_x, 1 * BRANCH_C:2 * BRANCH_C].reshape(n_img, Ho, Wo, BRANCH_C)
    br3_in = fused[:m_x, 2 * BRANCH_C:3 * BRANCH_C].reshape(n_img, Ho, Wo, BRANCH_C)
    p2, _ = im2col(br2_in, 3, 3, stride=1, padding=1)
    c3 = pallas_matmul_bias_act(p2, prep["b3x3_w"], prep["b3x3_b"])
    p3, _ = im2col(br3_in, 5, 5, stride=1, padding=2)
    c5 = pallas_matmul_bias_act(p3, prep["b5x5_w"], prep["b5x5_b"])

    # Fused concat + global average pool (GAP(concat) == concat(GAP)); the
    # (N, H, W, 32) concat tensor is never materialized.
    g = pallas_gap_concat(fused, c3, c5, n_img, hw)          # (4, n_img, 128) f32
    feats = jnp.concatenate(
        [g[0, :, 0:BRANCH_C],                 # branch 1 (1x1)
         g[1, :, 0:BRANCH_C],                 # branch 2 (3x3)
         g[2, :, 0:BRANCH_C],                 # branch 3 (5x5)
         g[3, :, 3 * BRANCH_C:4 * BRANCH_C]], # branch 4 (pool)
        axis=-1)                              # (n_img, 32)
    return feats  # Identity fc


if __name__ == "__main__":
    key = jax.random.PRNGKey(0)
    k_x, k_p = jax.random.split(key)

    # Small InceptionV3-like input: batch=2, 3 channels, 32x32 spatial (NCHW)
    x = jax.random.normal(k_x, (2, 3, 32, 32), jnp.float32)
    params = make_params(k_p)
    prep = prepare_params(params)   # pad + bf16 cast done ONCE, outside the hot path

    fwd = jax.jit(feature_extractor)
    feats = jax.block_until_ready(fwd(x, prep))

    assert feats.shape == (2, 4 * BRANCH_C), feats.shape
    assert bool(jnp.all(jnp.isfinite(feats)))
    print("KERNEL_OK")
</pallas_src>

<mosaic_0001>
module attributes {stable_mosaic.version = 11 : i64} {
  func.func @_matmul_bias_act_kernel(%arg0: i32, %arg1: memref<232x27xbf16, #tpu.memory_space<vmem>>, %arg2: memref<27x128xbf16, #tpu.memory_space<vmem>>, %arg3: memref<1x128xf32, #tpu.memory_space<vmem>>, %arg4: memref<232x128xbf16, #tpu.memory_space<vmem>>) attributes {dimension_semantics = [#tpu.dimension_semantics<parallel>], iteration_bounds = array<i64: 2>, scalar_prefetch = 0 : i64, scratch_operands = 0 : i64, tpu.core_type = #tpu.core_type<tc>, window_params = [{transform_indices = @transform_0, window_bounds = array<i64: 232, 27>}, {pipeline_mode = #tpu.pipeline_mode<synchronous>, transform_indices = @transform_1, window_bounds = array<i64: 27, 128>}, {pipeline_mode = #tpu.pipeline_mode<synchronous>, transform_indices = @transform_2, window_bounds = array<i64: 1, 128>}, {transform_indices = @transform_3, window_bounds = array<i64: 232, 128>}]} {
    %c0 = arith.constant 0 : index
    %c0_0 = arith.constant 0 : index
    %0 = vector.load %arg1[%c0, %c0_0] : memref<232x27xbf16, #tpu.memory_space<vmem>>, vector<232x27xbf16>
    %c0_1 = arith.constant 0 : index
    %c0_2 = arith.constant 0 : index
    %1 = vector.load %arg2[%c0_1, %c0_2] : memref<27x128xbf16, #tpu.memory_space<vmem>>, vector<27x128xbf16>
    %cst = arith.constant dense<0.000000e+00> : vector<232x128xf32>
    %2 = tpu.matmul %0, %1, %cst {dimension_numbers = #tpu.dot_dimension_numbers<[1], [0], [0], [1], [0, 0, 1, 1], [], []>} : vector<232x27xbf16>, vector<27x128xbf16>, vector<232x128xf32> -> vector<232x128xf32>
    %c0_3 = arith.constant 0 : index
    %c0_4 = arith.constant 0 : index
    %3 = vector.load %arg3[%c0_3, %c0_4] : memref<1x128xf32, #tpu.memory_space<vmem>>, vector<1x128xf32>
    %4 = vector.broadcast %3 : vector<1x128xf32> to vector<232x128xf32>
    %5 = arith.addf %2, %4 : vector<232x128xf32>
    %cst_5 = arith.constant 0.000000e+00 : f32
    %6 = vector.broadcast %cst_5 : f32 to vector<232x128xf32>
    %7 = arith.maximumf %5, %6 : vector<232x128xf32>
    %8 = arith.truncf %7 : vector<232x128xf32> to vector<232x128xbf16>
    %c0_6 = arith.constant 0 : index
    %c0_7 = arith.constant 0 : index
    %9 = vector.load %arg4[%c0_6, %c0_7] : memref<232x128xbf16, #tpu.memory_space<vmem>>, vector<232x128xbf16>
    tpu.vector_store %arg4[%c0_6, %c0_7], %8 {strides = array<i32>} : memref<232x128xbf16, #tpu.memory_space<vmem>>, vector<232x128xbf16>,
    return
  }
  func.func @transform_0(%arg0: i32) -> (i32, i32) {
    %c0_i32 = arith.constant 0 : i32
    %c0_i32_0 = arith.constant 0 : i32
    return %arg0, %c0_i32 : i32, i32
  }
  func.func @transform_1(%arg0: i32) -> (i32, i32) {
    %c0_i32 = arith.constant 0 : i32
    %c0_i32_0 = arith.constant 0 : i32
    %c0_i32_1 = arith.constant 0 : i32
    return %c0_i32, %c0_i32_0 : i32, i32
  }
  func.func @transform_2(%arg0: i32) -> (i32, i32) {
    %c0_i32 = arith.constant 0 : i32
    %c0_i32_0 = arith.constant 0 : i32
    %c0_i32_1 = arith.constant 0 : i32
    return %c0_i32, %c0_i32_0 : i32, i32
  }
  func.func @transform_3(%arg0: i32) -> (i32, i32) {
    %c0_i32 = arith.constant 0 : i32
    %c0_i32_0 = arith.constant 0 : i32
    return %arg0, %c0_i32 : i32, i32
  }
}

module attributes {stable_mosaic.version = 11 : i64} {
  func.func @_avg_pool3x3_kernel(%arg0: i32, %arg1: memref<1x17x17x128xbf16, #tpu.memory_space<vmem>>, %arg2: memref<1x15x15x128xbf16, #tpu.memory_space<vmem>>) attributes {dimension_semantics = [#tpu.dimension_semantics<parallel>], iteration_bounds = array<i64: 2>, scalar_prefetch = 0 : i64, scratch_operands = 0 : i64, tpu.core_type = #tpu.core_type<tc>, window_params = [{transform_indices = @transform_0, window_bounds = array<i64: 1, 17, 17, 128>}, {transform_indices = @transform_1, window_bounds = array<i64: 1, 15, 15, 128>}]} {
    %c0 = arith.constant 0 : index
    %c0_0 = arith.constant 0 : index
    %c0_1 = arith.constant 0 : index
    %c0_2 = arith.constant 0 : index
    %0 = vector.load %arg1[%c0, %c0_0, %c0_1, %c0_2] : memref<1x17x17x128xbf16, #tpu.memory_space<vmem>>, vector<1x17x17x128xbf16>
    %1 = arith.extf %0 : vector<1x17x17x128xbf16> to vector<1x17x17x128xf32>
    %2 = vector.extract_strided_slice %1 {offsets = [0, 0, 0, 0], sizes = [1, 15, 17, 128], strides = [1, 1, 1, 1]} : vector<1x17x17x128xf32> to vector<1x15x17x128xf32>
    %3 = vector.extract_strided_slice %1 {offsets = [0, 1, 0, 0], sizes = [1, 15, 17, 128], strides = [1, 1, 1, 1]} : vector<1x17x17x128xf32> to vector<1x15x17x128xf32>
    %4 = arith.addf %2, %3 : vector<1x15x17x128xf32>
    %5 = vector.extract_strided_slice %1 {offsets = [0, 2, 0, 0], sizes = [1, 15, 17, 128], strides = [1, 1, 1, 1]} : vector<1x17x17x128xf32> to vector<1x15x17x128xf32>
    %6 = arith.addf %4, %5 : vector<1x15x17x128xf32>
    %7 = vector.extract_strided_slice %6 {offsets = [0, 0, 0, 0], sizes = [1, 15, 15, 128], strides = [1, 1, 1, 1]} : vector<1x15x17x128xf32> to vector<1x15x15x128xf32>
    %8 = vector.extract_strided_slice %6 {offsets = [0, 0, 1, 0], sizes = [1, 15, 15, 128], strides = [1, 1, 1, 1]} : vector<1x15x17x128xf32> to vector<1x15x15x128xf32>
    %9 = arith.addf %7, %8 : vector<1x15x15x128xf32>
    %10 = vector.extract_strided_slice %6 {offsets = [0, 0, 2, 0], sizes = [1, 15, 15, 128], strides = [1, 1, 1, 1]} : vector<1x15x17x128xf32> to vector<1x15x15x128xf32>
    %11 = arith.addf %9, %10 : vector<1x15x15x128xf32>
    %cst = arith.constant 0.111111112 : f32
    %12 = vector.broadcast %cst : f32 to vector<1x15x15x128xf32>
    %13 = arith.mulf %11, %12 : vector<1x15x15x128xf32>
    %14 = arith.truncf %13 : vector<1x15x15x128xf32> to vector<1x15x15x128xbf16>
    %c0_3 = arith.constant 0 : index
    %c0_4 = arith.constant 0 : index
    %c0_5 = arith.constant 0 : index
    %c0_6 = arith.constant 0 : index
    %15 = vector.load %arg2[%c0_3, %c0_4, %c0_5, %c0_6] : memref<1x15x15x128xbf16, #tpu.memory_space<vmem>>, vector<1x15x15x128xbf16>
    tpu.vector_store %arg2[%c0_3, %c0_4, %c0_5, %c0_6], %14 {strides = array<i32>} : memref<1x15x15x128xbf16, #tpu.memory_space<vmem>>, vector<1x15x15x128xbf16>,
    return
  }
  func.func @transform_0(%arg0: i32) -> (i32, i32, i32, i32) {
    %c0_i32 = arith.constant 0 : i32
    %c0_i32_0 = arith.constant 0 : i32
    %c0_i32_1 = arith.constant 0 : i32
    %c0_i32_2 = arith.constant 0 : i32
    return %arg0, %c0_i32, %c0_i32_0, %c0_i32_1 : i32, i32, i32, i32
  }
  func.func @transform_1(%arg0: i32) -> (i32, i32, i32, i32) {
    %c0_i32 = arith.constant 0 : i32
    %c0_i32_0 = arith.constant 0 : i32
    %c0_i32_1 = arith.constant 0 : i32
    %c0_i32_2 = arith.constant 0 : i32
    return %arg0, %c0_i32, %c0_i32_0, %c0_i32_1 : i32, i32, i32, i32
  }
}

module attributes {stable_mosaic.version = 11 : i64} {
  func.func @_matmul_bias_act_kernel(%arg0: i32, %arg1: memref<456x128xbf16, #tpu.memory_space<vmem>>, %arg2: memref<128x128xbf16, #tpu.memory_space<vmem>>, %arg3: memref<1x128xf32, #tpu.memory_space<vmem>>, %arg4: memref<456x128xbf16, #tpu.memory_space<vmem>>) attributes {dimension_semantics = [#tpu.dimension_semantics<parallel>], iteration_bounds = array<i64: 2>, scalar_prefetch = 0 : i64, scratch_operands = 0 : i64, tpu.core_type = #tpu.core_type<tc>, window_params = [{transform_indices = @transform_0, window_bounds = array<i64: 456, 128>}, {pipeline_mode = #tpu.pipeline_mode<synchronous>, transform_indices = @transform_1, window_bounds = array<i64: 128, 128>}, {pipeline_mode = #tpu.pipeline_mode<synchronous>, transform_indices = @transform_2, window_bounds = array<i64: 1, 128>}, {transform_indices = @transform_3, window_bounds = array<i64: 456, 128>}]} {
    %c0 = arith.constant 0 : index
    %c0_0 = arith.constant 0 : index
    %0 = vector.load %arg1[%c0, %c0_0] : memref<456x128xbf16, #tpu.memory_space<vmem>>, vector<456x128xbf16>
    %c0_1 = arith.constant 0 : index
    %c0_2 = arith.constant 0 : index
    %1 = vector.load %arg2[%c0_1, %c0_2] : memref<128x128xbf16, #tpu.memory_space<vmem>>, vector<128x128xbf16>
    %cst = arith.constant dense<0.000000e+00> : vector<456x128xf32>
    %2 = tpu.matmul %0, %1, %cst {dimension_numbers = #tpu.dot_dimension_numbers<[1], [0], [0], [1], [0, 0, 1, 1], [], []>} : vector<456x128xbf16>, vector<128x128xbf16>, vector<456x128xf32> -> vector<456x128xf32>
    %c0_3 = arith.constant 0 : index
    %c0_4 = arith.constant 0 : index
    %3 = vector.load %arg3[%c0_3, %c0_4] : memref<1x128xf32, #tpu.memory_space<vmem>>, vector<1x128xf32>
    %4 = vector.broadcast %3 : vector<1x128xf32> to vector<456x128xf32>
    %5 = arith.addf %2, %4 : vector<456x128xf32>
    %cst_5 = arith.constant 0.000000e+00 : f32
    %6 = vector.broadcast %cst_5 : f32 to vector<456x128xf32>
    %7 = arith.maximumf %5, %6 : vector<456x128xf32>
    %8 = arith.truncf %7 : vector<456x128xf32> to vector<456x128xbf16>
    %c0_6 = arith.constant 0 : index
    %c0_7 = arith.constant 0 : index
    %9 = vector.load %arg4[%c0_6, %c0_7] : memref<456x128xbf16, #tpu.memory_space<vmem>>, vector<456x128xbf16>
    tpu.vector_store %arg4[%c0_6, %c0_7], %8 {strides = array<i32>} : memref<456x128xbf16, #tpu.memory_space<vmem>>, vector<456x128xbf16>,
    return
  }
  func.func @transform_0(%arg0: i32) -> (i32, i32) {
    %c0_i32 = arith.constant 0 : i32
    %c0_i32_0 = arith.constant 0 : i32
    return %arg0, %c0_i32 : i32, i32
  }
  func.func @transform_1(%arg0: i32) -> (i32, i32) {
    %c0_i32 = arith.constant 0 : i32
    %c0_i32_0 = arith.constant 0 : i32
    %c0_i32_1 = arith.constant 0 : i32
    return %c0_i32, %c0_i32_0 : i32, i32
  }
  func.func @transform_2(%arg0: i32) -> (i32, i32) {
    %c0_i32 = arith.constant 0 : i32
    %c0_i32_0 = arith.constant 0 : i32
    %c0_i32_1 = arith.constant 0 : i32
    return %c0_i32, %c0_i32_0 : i32, i32
  }
  func.func @transform_3(%arg0: i32) -> (i32, i32) {
    %c0_i32 = arith.constant 0 : i32
    %c0_i32_0 = arith.constant 0 : i32
    return %arg0, %c0_i32 : i32, i32
  }
}

module attributes {stable_mosaic.version = 11 : i64} {
  func.func @_matmul_bias_act_kernel(%arg0: i32, %arg1: memref<232x200xbf16, #tpu.memory_space<vmem>>, %arg2: memref<200x128xbf16, #tpu.memory_space<vmem>>, %arg3: memref<1x128xf32, #tpu.memory_space<vmem>>, %arg4: memref<232x128xbf16, #tpu.memory_space<vmem>>) attributes {dimension_semantics = [#tpu.dimension_semantics<parallel>], iteration_bounds = array<i64: 2>, scalar_prefetch = 0 : i64, scratch_operands = 0 : i64, tpu.core_type = #tpu.core_type<tc>, window_params = [{transform_indices = @transform_0, window_bounds = array<i64: 232, 200>}, {pipeline_mode = #tpu.pipeline_mode<synchronous>, transform_indices = @transform_1, window_bounds = array<i64: 200, 128>}, {pipeline_mode = #tpu.pipeline_mode<synchronous>, transform_indices = @transform_2, window_bounds = array<i64: 1, 128>}, {transform_indices = @transform_3, window_bounds = array<i64: 232, 128>}]} {
    %c0 = arith.constant 0 : index
    %c0_0 = arith.constant 0 : index
    %0 = vector.load %arg1[%c0, %c0_0] : memref<232x200xbf16, #tpu.memory_space<vmem>>, vector<232x200xbf16>
    %c0_1 = arith.constant 0 : index
    %c0_2 = arith.constant 0 : index
    %1 = vector.load %arg2[%c0_1, %c0_2] : memref<200x128xbf16, #tpu.memory_space<vmem>>, vector<200x128xbf16>
    %cst = arith.constant dense<0.000000e+00> : vector<232x128xf32>
    %2 = tpu.matmul %0, %1, %cst {dimension_numbers = #tpu.dot_dimension_numbers<[1], [0], [0], [1], [0, 0, 1, 1], [], []>} : vector<232x200xbf16>, vector<200x128xbf16>, vector<232x128xf32> -> vector<232x128xf32>
    %c0_3 = arith.constant 0 : index
    %c0_4 = arith.constant 0 : index
    %3 = vector.load %arg3[%c0_3, %c0_4] : memref<1x128xf32, #tpu.memory_space<vmem>>, vector<1x128xf32>
    %4 = vector.broadcast %3 : vector<1x128xf32> to vector<232x128xf32>
    %5 = arith.addf %2, %4 : vector<232x128xf32>
    %cst_5 = arith.constant 0.000000e+00 : f32
    %6 = vector.broadcast %cst_5 : f32 to vector<232x128xf32>
    %7 = arith.maximumf %5, %6 : vector<232x128xf32>
    %8 = arith.truncf %7 : vector<232x128xf32> to vector<232x128xbf16>
    %c0_6 = arith.constant 0 : index
    %c0_7 = arith.constant 0 : index
    %9 = vector.load %arg4[%c0_6, %c0_7] : memref<232x128xbf16, #tpu.memory_space<vmem>>, vector<232x128xbf16>
    tpu.vector_store %arg4[%c0_6, %c0_7], %8 {strides = array<i32>} : memref<232x128xbf16, #tpu.memory_space<vmem>>, vector<232x128xbf16>,
    return
  }
  func.func @transform_0(%arg0: i32) -> (i32, i32) {
    %c0_i32 = arith.constant 0 : i32
    %c0_i32_0 = arith.constant 0 : i32
    return %arg0, %c0_i32 : i32, i32
  }
  func.func @transform_1(%arg0: i32) -> (i32, i32) {
    %c0_i32 = arith.constant 0 : i32
    %c0_i32_0 = arith.constant 0 : i32
    %c0_i32_1 = arith.constant 0 : i32
    return %c0_i32, %c0_i32_0 : i32, i32
  }
  func.func @transform_2(%arg0: i32) -> (i32, i32) {
    %c0_i32 = arith.constant 0 : i32
    %c0_i32_0 = arith.constant 0 : i32
    %c0_i32_1 = arith.constant 0 : i32
    return %c0_i32, %c0_i32_0 : i32, i32
  }
  func.func @transform_3(%arg0: i32) -> (i32, i32) {
    %c0_i32 = arith.constant 0 : i32
    %c0_i32_0 = arith.constant 0 : i32
    return %arg0, %c0_i32 : i32, i32
  }
}

module attributes {stable_mosaic.version = 11 : i64} {
  func.func @_matmul_bias_act_kernel(%arg0: i32, %arg1: memref<232x72xbf16, #tpu.memory_space<vmem>>, %arg2: memref<72x128xbf16, #tpu.memory_space<vmem>>, %arg3: memref<1x128xf32, #tpu.memory_space<vmem>>, %arg4: memref<232x128xbf16, #tpu.memory_space<vmem>>) attributes {dimension_semantics = [#tpu.dimension_semantics<parallel>], iteration_bounds = array<i64: 2>, scalar_prefetch = 0 : i64, scratch_operands = 0 : i64, tpu.core_type = #tpu.core_type<tc>, window_params = [{transform_indices = @transform_0, window_bounds = array<i64: 232, 72>}, {pipeline_mode = #tpu.pipeline_mode<synchronous>, transform_indices = @transform_1, window_bounds = array<i64: 72, 128>}, {pipeline_mode = #tpu.pipeline_mode<synchronous>, transform_indices = @transform_2, window_bounds = array<i64: 1, 128>}, {transform_indices = @transform_3, window_bounds = array<i64: 232, 128>}]} {
    %c0 = arith.constant 0 : index
    %c0_0 = arith.constant 0 : index
    %0 = vector.load %arg1[%c0, %c0_0] : memref<232x72xbf16, #tpu.memory_space<vmem>>, vector<232x72xbf16>
    %c0_1 = arith.constant 0 : index
    %c0_2 = arith.constant 0 : index
    %1 = vector.load %arg2[%c0_1, %c0_2] : memref<72x128xbf16, #tpu.memory_space<vmem>>, vector<72x128xbf16>
    %cst = arith.constant dense<0.000000e+00> : vector<232x128xf32>
    %2 = tpu.matmul %0, %1, %cst {dimension_numbers = #tpu.dot_dimension_numbers<[1], [0], [0], [1], [0, 0, 1, 1], [], []>} : vector<232x72xbf16>, vector<72x128xbf16>, vector<232x128xf32> -> vector<232x128xf32>
    %c0_3 = arith.constant 0 : index
    %c0_4 = arith.constant 0 : index
    %3 = vector.load %arg3[%c0_3, %c0_4] : memref<1x128xf32, #tpu.memory_space<vmem>>, vector<1x128xf32>
    %4 = vector.broadcast %3 : vector<1x128xf32> to vector<232x128xf32>
    %5 = arith.addf %2, %4 : vector<232x128xf32>
    %cst_5 = arith.constant 0.000000e+00 : f32
    %6 = vector.broadcast %cst_5 : f32 to vector<232x128xf32>
    %7 = arith.maximumf %5, %6 : vector<232x128xf32>
    %8 = arith.truncf %7 : vector<232x128xf32> to vector<232x128xbf16>
    %c0_6 = arith.constant 0 : index
    %c0_7 = arith.constant 0 : index
    %9 = vector.load %arg4[%c0_6, %c0_7] : memref<232x128xbf16, #tpu.memory_space<vmem>>, vector<232x128xbf16>
    tpu.vector_store %arg4[%c0_6, %c0_7], %8 {strides = array<i32>} : memref<232x128xbf16, #tpu.memory_space<vmem>>, vector<232x128xbf16>,
    return
  }
  func.func @transform_0(%arg0: i32) -> (i32, i32) {
    %c0_i32 = arith.constant 0 : i32
    %c0_i32_0 = arith.constant 0 : i32
    return %arg0, %c0_i32 : i32, i32
  }
  func.func @transform_1(%arg0: i32) -> (i32, i32) {
    %c0_i32 = arith.constant 0 : i32
    %c0_i32_0 = arith.constant 0 : i32
    %c0_i32_1 = arith.constant 0 : i32
    return %c0_i32, %c0_i32_0 : i32, i32
  }
  func.func @transform_2(%arg0: i32) -> (i32, i32) {
    %c0_i32 = arith.constant 0 : i32
    %c0_i32_0 = arith.constant 0 : i32
    %c0_i32_1 = arith.constant 0 : i32
    return %c0_i32, %c0_i32_0 : i32, i32
  }
  func.func @transform_3(%arg0: i32) -> (i32, i32) {
    %c0_i32 = arith.constant 0 : i32
    %c0_i32_0 = arith.constant 0 : i32
    return %arg0, %c0_i32 : i32, i32
  }
}

module attributes {stable_mosaic.version = 11 : i64} {
  func.func @_gap_concat_kernel(%arg0: memref<912x128xbf16, #tpu.memory_space<vmem>>, %arg1: memref<464x128xbf16, #tpu.memory_space<vmem>>, %arg2: memref<464x128xbf16, #tpu.memory_space<vmem>>, %arg3: memref<8x128xf32, #tpu.memory_space<vmem>>) attributes {dimension_semantics = [], scalar_prefetch = 0 : i64, scratch_operands = 0 : i64, tpu.core_type = #tpu.core_type<tc>} {
    %c0 = arith.constant 0 : index
    %c0_0 = arith.constant 0 : index
    %0 = vector.load %arg0[%c0, %c0_0] : memref<912x128xbf16, #tpu.memory_space<vmem>>, vector<225x128xbf16>
    %1 = arith.extf %0 : vector<225x128xbf16> to vector<225x128xf32>
    %cst = arith.constant dense<0.000000e+00> : vector<128xf32>
    %2 = vector.multi_reduction <add>, %1, %cst [0] : vector<225x128xf32> to vector<128xf32>
    %3 = vector.shape_cast %2 : vector<128xf32> to vector<1x128xf32>
    %cst_1 = arith.constant 0.00444444455 : f32
    %4 = vector.broadcast %cst_1 : f32 to vector<1x128xf32>
    %5 = arith.mulf %3, %4 : vector<1x128xf32>
    %c0_2 = arith.constant 0 : index
    %c0_3 = arith.constant 0 : index
    %6 = vector.load %arg1[%c0_2, %c0_3] : memref<464x128xbf16, #tpu.memory_space<vmem>>, vector<225x128xbf16>
    %7 = arith.extf %6 : vector<225x128xbf16> to vector<225x128xf32>
    %cst_4 = arith.constant dense<0.000000e+00> : vector<128xf32>
    %8 = vector.multi_reduction <add>, %7, %cst_4 [0] : vector<225x128xf32> to vector<128xf32>
    %9 = vector.shape_cast %8 : vector<128xf32> to vector<1x128xf32>
    %cst_5 = arith.constant 0.00444444455 : f32
    %10 = vector.broadcast %cst_5 : f32 to vector<1x128xf32>
    %11 = arith.mulf %9, %10 : vector<1x128xf32>
    %c0_6 = arith.constant 0 : index
    %c0_7 = arith.constant 0 : index
    %12 = vector.load %arg2[%c0_6, %c0_7] : memref<464x128xbf16, #tpu.memory_space<vmem>>, vector<225x128xbf16>
    %13 = arith.extf %12 : vector<225x128xbf16> to vector<225x128xf32>
    %cst_8 = arith.constant dense<0.000000e+00> : vector<128xf32>
    %14 = vector.multi_reduction <add>, %13, %cst_8 [0] : vector<225x128xf32> to vector<128xf32>
    %15 = vector.shape_cast %14 : vector<128xf32> to vector<1x128xf32>
    %cst_9 = arith.constant 0.00444444455 : f32
    %16 = vector.broadcast %cst_9 : f32 to vector<1x128xf32>
    %17 = arith.mulf %15, %16 : vector<1x128xf32>
    %c450 = arith.constant 450 : index
    %c0_10 = arith.constant 0 : index
    %18 = vector.load %arg0[%c450, %c0_10] : memref<912x128xbf16, #tpu.memory_space<vmem>>, vector<225x128xbf16>
    %19 = arith.extf %18 : vector<225x128xbf16> to vector<225x128xf32>
    %cst_11 = arith.constant dense<0.000000e+00> : vector<128xf32>
    %20 = vector.multi_reduction <add>, %19, %cst_11 [0] : vector<225x128xf32> to vector<128xf32>
    %21 = vector.shape_cast %20 : vector<128xf32> to vector<1x128xf32>
    %cst_12 = arith.constant 0.00444444455 : f32
    %22 = vector.broadcast %cst_12 : f32 to vector<1x128xf32>
    %23 = arith.mulf %21, %22 : vector<1x128xf32>
    %c0_13 = arith.constant 0 : index
    %c0_14 = arith.constant 0 : index
    %24 = vector.load %arg3[%c0_13, %c0_14] : memref<8x128xf32, #tpu.memory_space<vmem>>, vector<1x128xf32>
    tpu.vector_store %arg3[%c0_13, %c0_14], %5 {strides = array<i32>} : memref<8x128xf32, #tpu.memory_space<vmem>>, vector<1x128xf32>,
    %c2 = arith.constant 2 : index
    %c0_15 = arith.constant 0 : index
    %25 = vector.load %arg3[%c2, %c0_15] : memref<8x128xf32, #tpu.memory_space<vmem>>, vector<1x128xf32>
    tpu.vector_store %arg3[%c2, %c0_15], %11 {strides = array<i32>} : memref<8x128xf32, #tpu.memory_space<vmem>>, vector<1x128xf32>,
    %c4 = arith.constant 4 : index
    %c0_16 = arith.constant 0 : index
    %26 = vector.load %arg3[%c4, %c0_16] : memref<8x128xf32, #tpu.memory_space<vmem>>, vector<1x128xf32>
    tpu.vector_store %arg3[%c4, %c0_16], %17 {strides = array<i32>} : memref<8x128xf32, #tpu.memory_space<vmem>>, vector<1x128xf32>,
    %c6 = arith.constant 6 : index
    %c0_17 = arith.constant 0 : index
    %27 = vector.load %arg3[%c6, %c0_17] : memref<8x128xf32, #tpu.memory_space<vmem>>, vector<1x128xf32>
    tpu.vector_store %arg3[%c6, %c0_17], %23 {strides = array<i32>} : memref<8x128xf32, #tpu.memory_space<vmem>>, vector<1x128xf32>,
    %c225 = arith.constant 225 : index
    %c0_18 = arith.constant 0 : index
    %28 = vector.load %arg0[%c225, %c0_18] : memref<912x128xbf16, #tpu.memory_space<vmem>>, vector<225x128xbf16>
    %29 = arith.extf %28 : vector<225x128xbf16> to vector<225x128xf32>
    %cst_19 = arith.constant dense<0.000000e+00> : vector<128xf32>
    %30 = vector.multi_reduction <add>, %29, %cst_19 [0] : vector<225x128xf32> to vector<128xf32>
    %31 = vector.shape_cast %30 : vector<128xf32> to vector<1x128xf32>
    %cst_20 = arith.constant 0.00444444455 : f32
    %32 = vector.broadcast %cst_20 : f32 to vector<1x128xf32>
    %33 = arith.mulf %31, %32 : vector<1x128xf32>
    %c225_21 = arith.constant 225 : index
    %c0_22 = arith.constant 0 : index
    %34 = vector.load %arg1[%c225_21, %c0_22] : memref<464x128xbf16, #tpu.memory_space<vmem>>, vector<225x128xbf16>
    %35 = arith.extf %34 : vector<225x128xbf16> to vector<225x128xf32>
    %cst_23 = arith.constant dense<0.000000e+00> : vector<128xf32>
    %36 = vector.multi_reduction <add>, %35, %cst_23 [0] : vector<225x128xf32> to vector<128xf32>
    %37 = vector.shape_cast %36 : vector<128xf32> to vector<1x128xf32>
    %cst_24 = arith.constant 0.00444444455 : f32
    %38 = vector.broadcast %cst_24 : f32 to vector<1x128xf32>
    %39 = arith.mulf %37, %38 : vector<1x128xf32>
    %c225_25 = arith.constant 225 : index
    %c0_26 = arith.constant 0 : index
    %40 = vector.load %arg2[%c225_25, %c0_26] : memref<464x128xbf16, #tpu.memory_space<vmem>>, vector<225x128xbf16>
    %41 = arith.extf %40 : vector<225x128xbf16> to vector<225x128xf32>
    %cst_27 = arith.constant dense<0.000000e+00> : vector<128xf32>
    %42 = vector.multi_reduction <add>, %41, %cst_27 [0] : vector<225x128xf32> to vector<128xf32>
    %43 = vector.shape_cast %42 : vector<128xf32> to vector<1x128xf32>
    %cst_28 = arith.constant 0.00444444455 : f32
    %44 = vector.broadcast %cst_28 : f32 to vector<1x128xf32>
    %45 = arith.mulf %43, %44 : vector<1x128xf32>
    %c675 = arith.constant 675 : index
    %c0_29 = arith.constant 0 : index
    %46 = vector.load %arg0[%c675, %c0_29] : memref<912x128xbf16, #tpu.memory_space<vmem>>, vector<225x128xbf16>
    %47 = arith.extf %46 : vector<225x128xbf16> to vector<225x128xf32>
    %cst_30 = arith.constant dense<0.000000e+00> : vector<128xf32>
    %48 = vector.multi_reduction <add>, %47, %cst_30 [0] : vector<225x128xf32> to vector<128xf32>
    %49 = vector.shape_cast %48 : vector<128xf32> to vector<1x128xf32>
    %cst_31 = arith.constant 0.00444444455 : f32
    %50 = vector.broadcast %cst_31 : f32 to vector<1x128xf32>
    %51 = arith.mulf %49, %50 : vector<1x128xf32>
    %c1 = arith.constant 1 : index
    %c0_32 = arith.constant 0 : index
    %52 = vector.load %arg3[%c1, %c0_32] : memref<8x128xf32, #tpu.memory_space<vmem>>, vector<1x128xf32>
    tpu.vector_store %arg3[%c1, %c0_32], %33 {strides = array<i32>} : memref<8x128xf32, #tpu.memory_space<vmem>>, vector<1x128xf32>,
    %c3 = arith.constant 3 : index
    %c0_33 = arith.constant 0 : index
    %53 = vector.load %arg3[%c3, %c0_33] : memref<8x128xf32, #tpu.memory_space<vmem>>, vector<1x128xf32>
    tpu.vector_store %arg3[%c3, %c0_33], %39 {strides = array<i32>} : memref<8x128xf32, #tpu.memory_space<vmem>>, vector<1x128xf32>,
    %c5 = arith.constant 5 : index
    %c0_34 = arith.constant 0 : index
    %54 = vector.load %arg3[%c5, %c0_34] : memref<8x128xf32, #tpu.memory_space<vmem>>, vector<1x128xf32>
    tpu.vector_store %arg3[%c5, %c0_34], %45 {strides = array<i32>} : memref<8x128xf32, #tpu.memory_space<vmem>>, vector<1x128xf32>,
    %c7 = arith.constant 7 : index
    %c0_35 = arith.constant 0 : index
    %55 = vector.load %arg3[%c7, %c0_35] : memref<8x128xf32, #tpu.memory_space<vmem>>, vector<1x128xf32>
    tpu.vector_store %arg3[%c7, %c0_35], %51 {strides = array<i32>} : memref<8x128xf32, #tpu.memory_space<vmem>>, vector<1x128xf32>,
    return
  }
}

</mosaic_0001>

<llo_original>
// kernel: feature_extractor.6
$region0: #{feature_extractor.6}
  #allocation0 [shape = 'u32[]', space=smem, size = 0x4, offset = 0x4, fixed_abs, tag = 'smem constant byte address 0x4 - core index']
  #allocation1 [shape = 'u32[144,128]{1,0:T(1,128)}', space=vmem, size = 0x12000, scoped, tag = 'internal scratch']
  %s0 = inlined_call_operand.vmem [shape: bf16[464,27], index: 0, kind: input, shape index: {}]
  %s1 = inlined_call_operand.vmem [shape: bf16[27,128], index: 1, kind: input, shape index: {}]
  %s2 = inlined_call_operand.vmem [shape: f32[1,128], index: 2, kind: input, shape index: {}]
  %s3 = inlined_call_operand.vmem [shape: bf16[464,128], index: 3, kind: output, shape index: {}]
  %s4 = sld [smem:[#allocation0]]
  $region45: #{feature_extractor.6} parent=0
    _
  %s6 = ssub.s32 1, %s4
  %s7 = scalar_select 0, %s6, %s4
  loop: start=0, step=1, limit=4
  $region2: #{feature_extractor.6} parent=0 // loop_pre_header
    _
  $region3: #{feature_extractor.6} parent=0 // loop_header
    %s9 = sphi 0, %s13
    %p10 = scmp.ge.s32.totalorder %s9, 4
    %s19 = sphi 0, %s21
    %s22 = sphi 0, %s19
    %s23 = sphi 0, %s22
    %s39 = sphi 0, %s23
    %s43 = sphi 0, %s43
    %s45 = sphi 0, %s43
    %s46 = sphi 0, %s45
    %s60 = sphi 0, %s46
    %s64 = sphi 0, %s64
    %s66 = sphi 0, %s64
    %s67 = sphi 0, %s66
    %s81 = sphi 0, %s67
    %s87 = sphi 0, %s89
    %s90 = sphi 0, %s87
    %s91 = sphi 0, %s90
    %s107 = sphi 0, %s91
  $region4: #{feature_extractor.6} parent=0 // loop_header_branch
    %12 = sbr.rel (%p10) target = $region8
  $region5: #{feature_extractor.6} parent=0 // loop_body
    %s14 = ssub.s32 %s9, 1
    %s15 = ssub.s32 %s9, 2
    %s16 = sadd.s32 %s9, 1
    %s17 = ssub.s32 %s9, %s16
    %p18 = scmp.eq.s32.totalorder %s17, 0
    %s20 = sadd.s32 %s19, 1
    %s21 = scalar_select %p18, %s19, %s20
    %p24 = pneg %p18
    %p25 = scmp.eq.s32.totalorder %s9, 1
    %p26 = por %p24, %p25
    %p27 = scmp.ne.s32.totalorder %s19, %s22
    %p28 = scmp.eq.s32.totalorder %s9, 0
    %p29 = por %p27, %p28
    %p30 = scmp.ne.s32.totalorder %s19, %s22
    %p31 = scmp.eq.s32.totalorder %s14, 1
    %p32 = por %p30, %p31
    %p33 = scmp.ne.s32.totalorder %s22, %s23
    %p34 = scmp.eq.s32.totalorder %s14, 0
    %p35 = por %p33, %p34
    %p36 = scmp.ne.s32.totalorder %s22, %s23
    %p37 = scmp.eq.s32.totalorder %s15, 1
    %p38 = por %p36, %p37
    %p40 = scmp.ne.s32.totalorder %s23, %s39
    %p41 = scmp.eq.s32.totalorder %s15, 0
    %p42 = por %p40, %p41
    %s44 = sadd.s32 %s43, 1
    %p47 = scmp.eq.s32.totalorder %s9, 1
    %p48 = scmp.ne.s32.totalorder %s43, %s45
    %p49 = scmp.eq.s32.totalorder %s9, 0
    %p50 = por %p48, %p49
    %p51 = scmp.ne.s32.totalorder %s43, %s45
    %p52 = scmp.eq.s32.totalorder %s14, 1
    %p53 = por %p51, %p52
    %p54 = scmp.ne.s32.totalorder %s45, %s46
    %p55 = scmp.eq.s32.totalorder %s14, 0
    %p56 = por %p54, %p55
    %p57 = scmp.ne.s32.totalorder %s45, %s46
    %p58 = scmp.eq.s32.totalorder %s15, 1
    %p59 = por %p57, %p58
    %p61 = scmp.ne.s32.totalorder %s46, %s60
    %p62 = scmp.eq.s32.totalorder %s15, 0
    %p63 = por %p61, %p62
    %s65 = sadd.s32 %s64, 1
    %p68 = scmp.eq.s32.totalorder %s9, 1
    %p69 = scmp.ne.s32.totalorder %s64, %s66
    %p70 = scmp.eq.s32.totalorder %s9, 0
    %p71 = por %p69, %p70
    %p72 = scmp.ne.s32.totalorder %s64, %s66
    %p73 = scmp.eq.s32.totalorder %s14, 1
    %p74 = por %p72, %p73
    %p75 = scmp.ne.s32.totalorder %s66, %s67
    %p76 = scmp.eq.s32.totalorder %s14, 0
    %p77 = por %p75, %p76
    %p78 = scmp.ne.s32.totalorder %s66, %s67
    %p79 = scmp.eq.s32.totalorder %s15, 1
    %p80 = por %p78, %p79
    %p82 = scmp.ne.s32.totalorder %s67, %s81
    %p83 = scmp.eq.s32.totalorder %s15, 0
    %p84 = por %p82, %p83
    %s85 = ssub.s32 %s9, %s16
    %p86 = scmp.eq.s32.totalorder %s85, 0
    %s88 = sadd.s32 %s87, 1
    %s89 = scalar_select %p86, %s87, %s88
    %p92 = pneg %p86
    %p93 = scmp.eq.s32.totalorder %s9, 1
    %p94 = por %p92, %p93
    %p95 = scmp.ne.s32.totalorder %s87, %s90
    %p96 = scmp.eq.s32.totalorder %s9, 0
    %p97 = por %p95, %p96
    %p98 = scmp.ne.s32.totalorder %s87, %s90
    %p99 = scmp.eq.s32.totalorder %s14, 1
    %p100 = por %p98, %p99
    %p101 = scmp.ne.s32.totalorder %s90, %s91
    %p102 = scmp.eq.s32.totalorder %s14, 0
    %p103 = por %p101, %p102
    %p104 = scmp.ne.s32.totalorder %s90, %s91
    %p105 = scmp.eq.s32.totalorder %s15, 1
    %p106 = por %p104, %p105
    %p108 = scmp.ne.s32.totalorder %s91, %s107
    %p109 = scmp.eq.s32.totalorder %s15, 0
    %p110 = por %p108, %p109
    %p111 = scmp.le.s32.totalorder 1, %s9
    %p112 = scmp.lt.s32.totalorder %s9, 3
    %p113 = pnand %p111, %p112
    %p114 = pneg %p113
    // Predicated region
    $region9: #{feature_extractor.6} parent=5 // pred_check
      _
    $region10: #{feature_extractor.6} parent=5 // pred_check_branch
      %116 = sbr.rel (%p113) target = $region12
    $region11: #{feature_extractor.6} parent=5 // pred_region
      %s117 = ssub.s32 %s9, 1
      // Predicated region
      $region13: #{feature_extractor.6} parent=11 // pred_check
        %p118 = pneg %p56
      $region14: #{feature_extractor.6} parent=11 // pred_check_branch
        %120 = sbr.rel (%p118) target = $region16
      $region15: #{feature_extractor.6} parent=11 // pred_region
        _
      $region16: #{feature_extractor.6} parent=11 // pred_fallthru
        _
      // Predicated region
      $region17: #{feature_extractor.6} parent=11 // pred_check
        %p121 = pneg %p77
      $region18: #{feature_extractor.6} parent=11 // pred_check_branch
        %123 = sbr.rel (%p121) target = $region20
      $region19: #{feature_extractor.6} parent=11 // pred_region
        _
      $region20: #{feature_extractor.6} parent=11 // pred_fallthru
        _
    $region12: #{feature_extractor.6} parent=5 // pred_fallthru
      _
    %p124 = scmp.lt.s32.totalorder %s9, 2
    // Predicated region
    $region21: #{feature_extractor.6} parent=5 // pred_check
      %p125 = pneg %p124
    $region22: #{feature_extractor.6} parent=5 // pred_check_branch
      %127 = sbr.rel (%p125) target = $region24
    $region23: #{feature_extractor.6} parent=5 // pred_region
      // Predicated region
      $region25: #{feature_extractor.6} parent=23 // pred_check
        %p128 = pneg %p29
      $region26: #{feature_extractor.6} parent=23 // pred_check_branch
        %130 = sbr.rel (%p128) target = $region28
      $region27: #{feature_extractor.6} parent=23 // pred_region
        %s131 = smul.u32 29, %s9
        %p132 = scmp.lt.s32.totalorder %s131, 57
        %s133 = scalar_select %p132, %s131, 57
        %s134 = smul.addr %s133, 4
        %s135 = scalar_lea.vmem %s0, %s134
        %s136 = smul.u32 29, %s9
      $region28: #{feature_extractor.6} parent=23 // pred_fallthru
        _
    $region24: #{feature_extractor.6} parent=5 // pred_fallthru
      _
    %p137 = scmp.le.s32.totalorder 1, %s9
    %p138 = scmp.lt.s32.totalorder %s9, 3
    %p139 = pnand %p137, %p138
    %p140 = pneg %p139
    // Predicated region
    $region29: #{feature_extractor.6} parent=5 // pred_check
      _
    $region30: #{feature_extractor.6} parent=5 // pred_check_branch
      %142 = sbr.rel (%p139) target = $region32
    $region31: #{feature_extractor.6} parent=5 // pred_region
      %s143 = ssub.s32 %s9, 1
      %s144 = smul.u32 29, %s14
      %p145 = scmp.lt.s32.totalorder %s144, 57
      %s146 = scalar_select %p145, %s144, 57
      %s147 = smul.addr %s146, 4
      %s148 = scalar_lea.vmem %s0, %s147
      %p149 = pneg %p35
      %p150 = pneg %p32
      %p151 = pneg %p56
      %p152 = pneg %p53
      %p153 = pneg %p77
      %p154 = pneg %p74
      %p155 = pneg %p103
      %p156 = pneg %p100
      %s157 = smul.u32 29, %s14
      %p158 = scmp.lt.s32.totalorder %s157, 57
      %s159 = scalar_select %p158, %s157, 57
      %s160 = smul.addr %s159, 4
      %s161 = scalar_lea.vmem %s3, %s160
      %s162 = smul.u32 29, %s14
      %p163 = scmp.lt.s32.totalorder %s162, 57
      %s164 = scalar_select %p163, %s162, 57
      %s165 = smul.addr %s164, 4
      %s166 = scalar_lea.vmem %s0, %s165
      %s167 = smul.u32 29, %s14
      %s168 = smul.u32 29, %s14
      %p169 = scmp.lt.s32.totalorder %s168, 57
      %s170 = scalar_select %p169, %s168, 57
      %s171 = smul.addr %s170, 4
      %s172 = scalar_lea.vmem %s3, %s171
      %s173 = smul.u32 29, %s14
      %v175 = vld [vmem:[%s166] sm:$0xf]
      %v176 = vld [vmem:[%s166 + $0x4] sm:$0xf]
      %v177 = vld [vmem:[%s166 + $0x8] sm:$0xf]
      %v178 = vld [vmem:[%s166 + $0xc] sm:$0xf]
      %v179 = vld [vmem:[%s166 + $0x10] sm:$0xf]
      %v180 = vld [vmem:[%s166 + $0x14] sm:$0xf]
      %v181 = vld [vmem:[%s166 + $0x18] sm:$0xf]
      %v182 = vld [vmem:[%s166 + $0x1c] sm:$0xf]
      %v183 = vld [vmem:[%s166 + $0x20] sm:$0xf]
      %v184 = vld [vmem:[%s166 + $0x24] sm:$0xf]
      %v185 = vld [vmem:[%s166 + $0x28] sm:$0xf]
      %v186 = vld [vmem:[%s166 + $0x2c] sm:$0xf]
      %v187 = vld [vmem:[%s166 + $0x30] sm:$0xf]
      %v188 = vld [vmem:[%s166 + $0x34] sm:$0xf]
      %v189 = vld [vmem:[%s166 + $0x38] sm:$0xf]
      %v190 = vld [vmem:[%s166 + $0x3c] sm:$0xf]
      %v191 = vld [vmem:[%s166 + $0x40] sm:$0xf]
      %v192 = vld [vmem:[%s166 + $0x44] sm:$0xf]
      %v193 = vld [vmem:[%s166 + $0x48] sm:$0xf]
      %v194 = vld [vmem:[%s166 + $0x4c] sm:$0xf]
      %v195 = vld [vmem:[%s166 + $0x50] sm:$0xf]
      %v196 = vld [vmem:[%s166 + $0x54] sm:$0xf]
      %v197 = vld [vmem:[%s166 + $0x58] sm:$0xf]
      %v198 = vld [vmem:[%s166 + $0x5c] sm:$0xf]
      %v199 = vld [vmem:[%s166 + $0x60] sm:$0xf]
      %v200 = vld [vmem:[%s166 + $0x64] sm:$0xf]
      %v201 = vld [vmem:[%s166 + $0x68] sm:$0xf]
      %v202 = vld [vmem:[%s166 + $0x6c] sm:$0xf]
      %v203 = vld [vmem:[%s166 + $0x70] sm:$0xf]
      %v204 = vld [vmem:[%s1] sm:$0xf]
      %v205 = vld [vmem:[%s1 + $0x4] sm:$0xf]
      %v206 = vld [vmem:[%s1 + $0x8] sm:$0xf]
      %v207 = vld [vmem:[%s1 + $0xc] sm:$0x3]
      %v208 = vld [vmem:[%s2] sm:$0x1]
      %v210 = vlaneseq
      %v211 = vshrl.u32 %v210, 7
      %v212 = vsub.s32 0, %v211
      %v213 = vrot.slane %v208, %v212
      %v244 = vunpack.c.l.b16 %v175
      %v245 = vunpack.c.l.b16 %v176
      %v246 = vunpack.c.l.b16 %v177
      %v247 = vunpack.c.l.b16 %v178
      %v248 = vunpack.c.l.b16 %v179
      %v249 = vunpack.c.l.b16 %v180
      %v250 = vunpack.c.l.b16 %v181
      %v251 = vunpack.c.l.b16 %v182
      %v252 = vunpack.c.l.b16 %v183
      %v253 = vunpack.c.l.b16 %v184
      %v254 = vunpack.c.l.b16 %v185
      %v255 = vunpack.c.l.b16 %v186
      %v256 = vunpack.c.l.b16 %v187
      %v257 = vunpack.c.l.b16 %v188
      %v258 = vunpack.c.l.b16 %v189
      %v259 = vunpack.c.l.b16 %v190
      %v260 = vunpack.c.l.b16 %v191
      %v261 = vunpack.c.l.b16 %v192
      %v262 = vunpack.c.l.b16 %v193
      %v263 = vunpack.c.l.b16 %v194
      %v264 = vunpack.c.l.b16 %v195
      %v265 = vunpack.c.l.b16 %v196
      %v266 = vunpack.c.l.b16 %v197
      %v267 = vunpack.c.l.b16 %v198
      %v268 = vunpack.c.l.b16 %v199
      %v269 = vunpack.c.l.b16 %v200
      %v270 = vunpack.c.l.b16 %v201
      %v271 = vunpack.c.l.b16 %v202
      %v272 = vunpack.c.l.b16 %v203
      %v273 = vpack.c.b16 %v245, %v244
      %v274 = vpack.c.b16 %v247, %v246
      %v275 = vpack.c.b16 %v249, %v248
      %v276 = vpack.c.b16 %v251, %v250
      %v277 = vpack.c.b16 %v253, %v252
      %v278 = vpack.c.b16 %v255, %v254
      %v279 = vpack.c.b16 %v257, %v256
      %v280 = vpack.c.b16 %v259, %v258
      %v281 = vpack.c.b16 %v261, %v260
      %v282 = vpack.c.b16 %v263, %v262
      %v283 = vpack.c.b16 %v265, %v264
      %v284 = vpack.c.b16 %v267, %v266
      %v285 = vpack.c.b16 %v269, %v268
      %v286 = vpack.c.b16 %v271, %v270
      %v287 = vpack.c.b16 %v272, %v272
      %v292 = vunpack.c.l.b16 %v204
      %v293 = vunpack.c.l.b16 %v205
      %v294 = vunpack.c.l.b16 %v206
      %v295 = vunpack.c.l.b16 %v207
      %v296 = vpack.c.b16 %v293, %v292
      %v297 = vpack.c.b16 %v295, %v294
      %vm299 = vcmask 220160
      %v301 = vsel %vm299, %v273, 0
      %v304 = vsel %vm299, %v274, 0
      %v307 = vsel %vm299, %v275, 0
      %v310 = vsel %vm299, %v276, 0
      %v313 = vsel %vm299, %v277, 0
      %v316 = vsel %vm299, %v278, 0
      %v319 = vsel %vm299, %v279, 0
      %v322 = vsel %vm299, %v280, 0
      %v325 = vsel %vm299, %v281, 0
      %v328 = vsel %vm299, %v282, 0
      %v331 = vsel %vm299, %v283, 0
      %v334 = vsel %vm299, %v284, 0
      %v337 = vsel %vm299, %v285, 0
      %v340 = vsel %vm299, %v286, 0
      %v343 = vsel %vm299, %v287, 0
      %vm345 = vcmask 1044480
      %vm346 = vcmask 1045504
      %v347 = vsel %vm345, 4294967295, 65535
      %v348 = vsel %vm346, %v347, 0
      %v350 = vand.u32 %v297, %v348
      %352 = vmatprep.subr.bf16.mxu0 0
      %353 = vmatpush1.bf16.msra.mxu0 0
      %354 = vmatprep.subr.bf16.mxu0 0
      %355 = vmatpush1.bf16.msra.mxu0 0
      %356 = vmatprep.subr.bf16.mxu0 0
      %357 = vmatpush1.bf16.msra.mxu0 0
      %358 = vmatprep.subr.bf16.mxu0 0
      %359 = vmatpush1.bf16.msra.mxu0 0
      %360 = vmatprep.subr.bf16.mxu0 0
      %361 = vmatpush1.bf16.msra.mxu0 0
      %362 = vmatprep.subr.bf16.mxu0 0
      %363 = vmatpush1.bf16.msra.mxu0 0
      %364 = vmatprep.subr.bf16.mxu0 0
      %365 = vmatpush1.bf16.msra.mxu0 %v350
      %366 = vmatprep.subr.bf16.mxu0 0
      %367 = vmatpush1.bf16.msra.mxu0 %v296
      %368 = vmatprep.subr.bf16.mxu0 0
      %369 = vmatpush2.bf16.msra.mxu0 0
      %370 = vmatprep.subr.bf16.mxu0 0
      %371 = vmatpush2.bf16.msra.mxu0 0
      %372 = vmatprep.subr.bf16.mxu0 0
      %373 = vmatpush2.bf16.msra.mxu0 0
      %374 = vmatprep.subr.bf16.mxu0 0
      %375 = vmatpush2.bf16.msra.mxu0 0
      %376 = vmatprep.subr.bf16.mxu0 0
      %377 = vmatpush2.bf16.msra.mxu0 0
      %378 = vmatprep.subr.bf16.mxu0 0
      %379 = vmatpush2.bf16.msra.mxu0 0
      %380 = vmatprep.subr.bf16.mxu0 0
      %381 = vmatpush2.bf16.msra.mxu0 0
      %382 = vmatprep.subr.bf16.mxu0 0
      %383 = vmatpush2.bf16.msra.mxu0 0
      %384 = vmatprep.mubr.bf16.mxu0 0
      %385 = vmatmul.mubr.bf16.gmra.mxu0 %v301
      %v386 = vpop.f32.mrf.mxu0
      %v387 = vadd.f32 %v213, %v386
      %v388 = vpop.f32.mrf.mxu0
      %v389 = vpop.f32.mrf.mxu0
      %v390 = vadd.f32 %v213, %v389
      %v391 = vpop.f32.mrf.mxu0
      %392 = vmatprep.mubr.bf16.mxu0 0
      %393 = vmatmul.mubr.bf16.gmra.mxu0 %v304
      %v394 = vpop.f32.mrf.mxu0
      %v395 = vadd.f32 %v213, %v394
      %v396 = vpop.f32.mrf.mxu0
      %v397 = vpop.f32.mrf.mxu0
      %v398 = vadd.f32 %v213, %v397
      %v399 = vpop.f32.mrf.mxu0
      %400 = vmatprep.mubr.bf16.mxu0 0
      %401 = vmatmul.mubr.bf16.gmra.mxu0 %v307
      %v402 = vpop.f32.mrf.mxu0
      %v403 = vadd.f32 %v213, %v402
      %v404 = vpop.f32.mrf.mxu0
      %v405 = vpop.f32.mrf.mxu0
      %v406 = vadd.f32 %v213, %v405
      %v407 = vpop.f32.mrf.mxu0
      %408 = vmatprep.mubr.bf16.mxu0 0
      %409 = vmatmul.mubr.bf16.gmra.mxu0 %v310
      %v410 = vpop.f32.mrf.mxu0
      %v411 = vadd.f32 %v213, %v410
      %v412 = vpop.f32.mrf.mxu0
      %v413 = vpop.f32.mrf.mxu0
      %v414 = vadd.f32 %v213, %v413
      %v415 = vpop.f32.mrf.mxu0
      %416 = vmatprep.mubr.bf16.mxu0 0
      %417 = vmatmul.mubr.bf16.gmra.mxu0 %v313
      %v418 = vpop.f32.mrf.mxu0
      %v419 = vadd.f32 %v213, %v418
      %v420 = vpop.f32.mrf.mxu0
      %v421 = vpop.f32.mrf.mxu0
      %v422 = vadd.f32 %v213, %v421
      %v423 = vpop.f32.mrf.mxu0
      %424 = vmatprep.mubr.bf16.mxu0 0
      %425 = vmatmul.mubr.bf16.gmra.mxu0 %v316
      %v426 = vpop.f32.mrf.mxu0
      %v427 = vadd.f32 %v213, %v426
      %v428 = vpop.f32.mrf.mxu0
      %v429 = vpop.f32.mrf.mxu0
      %v430 = vadd.f32 %v213, %v429
      %v431 = vpop.f32.mrf.mxu0
      %432 = vmatprep.mubr.bf16.mxu0 0
      %433 = vmatmul.mubr.bf16.gmra.mxu0 %v319
      %v434 = vpop.f32.mrf.mxu0
      %v435 = vadd.f32 %v213, %v434
      %v436 = vpop.f32.mrf.mxu0
      %v437 = vpop.f32.mrf.mxu0
      %v438 = vadd.f32 %v213, %v437
      %v439 = vpop.f32.mrf.mxu0
      %440 = vmatprep.mubr.bf16.mxu0 0
      %441 = vmatmul.mubr.bf16.gmra.mxu0 %v322
      %v442 = vpop.f32.mrf.mxu0
      %v443 = vadd.f32 %v213, %v442
      %v444 = vpop.f32.mrf.mxu0
      %v445 = vpop.f32.mrf.mxu0
      %v446 = vadd.f32 %v213, %v445
      %v447 = vpop.f32.mrf.mxu0
      %448 = vmatprep.mubr.bf16.mxu0 0
      %449 = vmatmul.mubr.bf16.gmra.mxu0 %v325
      %v450 = vpop.f32.mrf.mxu0
      %v451 = vadd.f32 %v213, %v450
      %v452 = vpop.f32.mrf.mxu0
      %v453 = vpop.f32.mrf.mxu0
      %v454 = vadd.f32 %v213, %v453
      %v455 = vpop.f32.mrf.mxu0
      %456 = vmatprep.mubr.bf16.mxu0 0
      %457 = vmatmul.mubr.bf16.gmra.mxu0 %v328
      %v458 = vpop.f32.mrf.mxu0
      %v459 = vadd.f32 %v213, %v458
      %v460 = vpop.f32.mrf.mxu0
      %v461 = vpop.f32.mrf.mxu0
      %v462 = vadd.f32 %v213, %v461
      %v463 = vpop.f32.mrf.mxu0
      %464 = vmatprep.mubr.bf16.mxu0 0
      %465 = vmatmul.mubr.bf16.gmra.mxu0 %v331
      %v466 = vpop.f32.mrf.mxu0
      %v467 = vadd.f32 %v213, %v466
      %v468 = vpop.f32.mrf.mxu0
      %v469 = vpop.f32.mrf.mxu0
      %v470 = vadd.f32 %v213, %v469
      %v471 = vpop.f32.mrf.mxu0
      %472 = vmatprep.mubr.bf16.mxu0 0
      %473 = vmatmul.mubr.bf16.gmra.mxu0 %v334
      %v474 = vpop.f32.mrf.mxu0
      %v475 = vadd.f32 %v213, %v474
      %v476 = vpop.f32.mrf.mxu0
      %v477 = vpop.f32.mrf.mxu0
      %v478 = vadd.f32 %v213, %v477
      %v479 = vpop.f32.mrf.mxu0
      %480 = vmatprep.mubr.bf16.mxu0 0
      %481 = vmatmul.mubr.bf16.gmra.mxu0 %v337
      %v482 = vpop.f32.mrf.mxu0
      %v483 = vadd.f32 %v213, %v482
      %v484 = vpop.f32.mrf.mxu0
      %v485 = vpop.f32.mrf.mxu0
      %v486 = vadd.f32 %v213, %v485
      %v487 = vpop.f32.mrf.mxu0
      %488 = vmatprep.mubr.bf16.mxu0 0
      %489 = vmatmul.mubr.bf16.gmra.mxu0 %v340
      %v490 = vpop.f32.mrf.mxu0
      %v491 = vadd.f32 %v213, %v490
      %v492 = vpop.f32.mrf.mxu0
      %v493 = vpop.f32.mrf.mxu0
      %v494 = vadd.f32 %v213, %v493
      %v495 = vpop.f32.mrf.mxu0
      %496 = vmatprep.mubr.bf16.mxu0 0
      %497 = vmatmul.mubr.bf16.gmra.mxu0 %v343
      %v498 = vpop.f32.mrf.mxu0
      %v499 = vadd.f32 %v213, %v498
      %v500 = vpop.f32.mrf.mxu0
      %v501 = vpop.f32.mrf.mxu0
      %v502 = vpop.f32.mrf.mxu0
      %503 = vdwg.mxu0
      %v504 = vmax.f32 %v387, 0.0
      %v505 = vmax.f32 %v390, 0.0
      %v506 = vmax.f32 %v395, 0.0
      %v507 = vmax.f32 %v398, 0.0
      %v508 = vmax.f32 %v403, 0.0
      %v509 = vmax.f32 %v406, 0.0
      %v510 = vmax.f32 %v411, 0.0
      %v511 = vmax.f32 %v414, 0.0
      %v512 = vmax.f32 %v419, 0.0
      %v513 = vmax.f32 %v422, 0.0
      %v514 = vmax.f32 %v427, 0.0
      %v515 = vmax.f32 %v430, 0.0
      %v516 = vmax.f32 %v435, 0.0
      %v517 = vmax.f32 %v438, 0.0
      %v518 = vmax.f32 %v443, 0.0
      %v519 = vmax.f32 %v446, 0.0
      %v520 = vmax.f32 %v451, 0.0
      %v521 = vmax.f32 %v454, 0.0
      %v522 = vmax.f32 %v459, 0.0
      %v523 = vmax.f32 %v462, 0.0
      %v524 = vmax.f32 %v467, 0.0
      %v525 = vmax.f32 %v470, 0.0
      %v526 = vmax.f32 %v475, 0.0
      %v527 = vmax.f32 %v478, 0.0
      %v528 = vmax.f32 %v483, 0.0
      %v529 = vmax.f32 %v486, 0.0
      %v530 = vmax.f32 %v491, 0.0
      %v531 = vmax.f32 %v494, 0.0
      %v532 = vmax.f32 %v499, 0.0
      %v533 = vpack.c.bf16 %v505, %v504
      %v534 = vpack.c.bf16 %v507, %v506
      %v535 = vpack.c.bf16 %v509, %v508
      %v536 = vpack.c.bf16 %v511, %v510
      %v537 = vpack.c.bf16 %v513, %v512
      %v538 = vpack.c.bf16 %v515, %v514
      %v539 = vpack.c.bf16 %v517, %v516
      %v540 = vpack.c.bf16 %v519, %v518
      %v541 = vpack.c.bf16 %v521, %v520
      %v542 = vpack.c.bf16 %v523, %v522
      %v543 = vpack.c.bf16 %v525, %v524
      %v544 = vpack.c.bf16 %v527, %v526
      %v545 = vpack.c.bf16 %v529, %v528
      %v546 = vpack.c.bf16 %v531, %v530
      %v547 = vpack.c.bf16 %v532, %v532
      %v563 = vunpack.c.l.b16 %v533
      %v564 = vunpack.c.h.b16 %v533
      %v565 = vunpack.c.l.b16 %v534
      %v566 = vunpack.c.h.b16 %v534
      %v567 = vunpack.c.l.b16 %v535
      %v568 = vunpack.c.h.b16 %v535
      %v569 = vunpack.c.l.b16 %v536
      %v570 = vunpack.c.h.b16 %v536
      %v571 = vunpack.c.l.b16 %v537
      %v572 = vunpack.c.h.b16 %v537
      %v573 = vunpack.c.l.b16 %v538
      %v574 = vunpack.c.h.b16 %v538
      %v575 = vunpack.c.l.b16 %v539
      %v576 = vunpack.c.h.b16 %v539
      %v577 = vunpack.c.l.b16 %v540
      %v578 = vunpack.c.h.b16 %v540
      %v579 = vunpack.c.l.b16 %v541
      %v580 = vunpack.c.h.b16 %v541
      %v581 = vunpack.c.l.b16 %v542
      %v582 = vunpack.c.h.b16 %v542
      %v583 = vunpack.c.l.b16 %v543
      %v584 = vunpack.c.h.b16 %v543
      %v585 = vunpack.c.l.b16 %v544
      %v586 = vunpack.c.h.b16 %v544
      %v587 = vunpack.c.l.b16 %v545
      %v588 = vunpack.c.h.b16 %v545
      %v589 = vunpack.c.l.b16 %v546
      %v590 = vunpack.c.h.b16 %v546
      %v591 = vunpack.c.l.b16 %v547
      %v592 = vpack.c.b16 %v563, %v563
      %v593 = vpack.c.b16 %v564, %v564
      %v594 = vpack.c.b16 %v565, %v565
      %v595 = vpack.c.b16 %v566, %v566
      %v596 = vpack.c.b16 %v567, %v567
      %v597 = vpack.c.b16 %v568, %v568
      %v598 = vpack.c.b16 %v569, %v569
      %v599 = vpack.c.b16 %v570, %v570
      %v600 = vpack.c.b16 %v571, %v571
      %v601 = vpack.c.b16 %v572, %v572
      %v602 = vpack.c.b16 %v573, %v573
      %v603 = vpack.c.b16 %v574, %v574
      %v604 = vpack.c.b16 %v575, %v575
      %v605 = vpack.c.b16 %v576, %v576
      %v606 = vpack.c.b16 %v577, %v577
      %v607 = vpack.c.b16 %v578, %v578
      %v608 = vpack.c.b16 %v579, %v579
      %v609 = vpack.c.b16 %v580, %v580
      %v610 = vpack.c.b16 %v581, %v581
      %v611 = vpack.c.b16 %v582, %v582
      %v612 = vpack.c.b16 %v583, %v583
      %v613 = vpack.c.b16 %v584, %v584
      %v614 = vpack.c.b16 %v585, %v585
      %v615 = vpack.c.b16 %v586, %v586
      %v616 = vpack.c.b16 %v587, %v587
      %v617 = vpack.c.b16 %v588, %v588
      %v618 = vpack.c.b16 %v589, %v589
      %v619 = vpack.c.b16 %v590, %v590
      %v620 = vpack.c.b16 %v591, %v591
      %650 = vst [vmem:[%s172] sm:$0xf] %v592
      %651 = vst [vmem:[%s172 + $0x4] sm:$0xf] %v593
      %652 = vst [vmem:[%s172 + $0x8] sm:$0xf] %v594
      %653 = vst [vmem:[%s172 + $0xc] sm:$0xf] %v595
      %654 = vst [vmem:[%s172 + $0x10] sm:$0xf] %v596
      %655 = vst [vmem:[%s172 + $0x14] sm:$0xf] %v597
      %656 = vst [vmem:[%s172 + $0x18] sm:$0xf] %v598
      %657 = vst [vmem:[%s172 + $0x1c] sm:$0xf] %v599
      %658 = vst [vmem:[%s172 + $0x20] sm:$0xf] %v600
      %659 = vst [vmem:[%s172 + $0x24] sm:$0xf] %v601
      %660 = vst [vmem:[%s172 + $0x28] sm:$0xf] %v602
      %661 = vst [vmem:[%s172 + $0x2c] sm:$0xf] %v603
      %662 = vst [vmem:[%s172 + $0x30] sm:$0xf] %v604
      %663 = vst [vmem:[%s172 + $0x34] sm:$0xf] %v605
      %664 = vst [vmem:[%s172 + $0x38] sm:$0xf] %v606
      %665 = vst [vmem:[%s172 + $0x3c] sm:$0xf] %v607
      %666 = vst [vmem:[%s172 + $0x40] sm:$0xf] %v608
      %667 = vst [vmem:[%s172 + $0x44] sm:$0xf] %v609
      %668 = vst [vmem:[%s172 + $0x48] sm:$0xf] %v610
      %669 = vst [vmem:[%s172 + $0x4c] sm:$0xf] %v611
      %670 = vst [vmem:[%s172 + $0x50] sm:$0xf] %v612
      %671 = vst [vmem:[%s172 + $0x54] sm:$0xf] %v613
      %672 = vst [vmem:[%s172 + $0x58] sm:$0xf] %v614
      %673 = vst [vmem:[%s172 + $0x5c] sm:$0xf] %v615
      %674 = vst [vmem:[%s172 + $0x60] sm:$0xf] %v616
      %675 = vst [vmem:[%s172 + $0x64] sm:$0xf] %v617
      %676 = vst [vmem:[%s172 + $0x68] sm:$0xf] %v618
      %677 = vst [vmem:[%s172 + $0x6c] sm:$0xf] %v619
      %678 = vst [vmem:[%s172 + $0x70] sm:$0xf] %v620
      %s679 = smul.u32 29, %s14
      %p680 = scmp.lt.s32.totalorder %s679, 57
      %s681 = scalar_select %p680, %s679, 57
      %s682 = smul.addr %s681, 4
      %s683 = scalar_lea.vmem %s3, %s682
      // Predicated region
      $region33: #{feature_extractor.6} parent=31 // pred_check
        %p684 = pneg %p100
      $region34: #{feature_extractor.6} parent=31 // pred_check_branch
        %686 = sbr.rel (%p684) target = $region36
      $region35: #{feature_extractor.6} parent=31 // pred_region
        %s687 = smul.u32 29, %s14
      $region36: #{feature_extractor.6} parent=31 // pred_fallthru
        _
    $region32: #{feature_extractor.6} parent=5 // pred_fallthru
      _
    %p688 = scmp.le.s32.totalorder 2, %s9
    // Predicated region
    $region37: #{feature_extractor.6} parent=5 // pred_check
      %p689 = pneg %p688
    $region38: #{feature_extractor.6} parent=5 // pred_check_branch
      %691 = sbr.rel (%p689) target = $region40
    $region39: #{feature_extractor.6} parent=5 // pred_region
      %s692 = ssub.s32 %s9, 2
      // Predicated region
      $region41: #{feature_extractor.6} parent=39 // pred_check
        %p693 = pneg %p106
      $region42: #{feature_extractor.6} parent=39 // pred_check_branch
        %695 = sbr.rel (%p693) target = $region44
      $region43: #{feature_extractor.6} parent=39 // pred_region
        %s696 = smul.u32 29, %s15
        %p697 = scmp.lt.s32.totalorder %s696, 57
        %s698 = scalar_select %p697, %s696, 57
        %s699 = smul.addr %s698, 4
        %s700 = scalar_lea.vmem %s3, %s699
      $region44: #{feature_extractor.6} parent=39 // pred_fallthru
        _
    $region40: #{feature_extractor.6} parent=5 // pred_fallthru
      _
  $region6: #{feature_extractor.6} parent=0 // loop_footer
    %s13 = sadd.s32 1, %s9
  $region7: #{feature_extractor.6} parent=0 // loop_footer_branch
    %8 = sbr.rel target = $region3
  $region8: #{feature_extractor.6} parent=0 // loop_exit
    _

// kernel: feature_extractor.7
$region0: #{feature_extractor.7}
  #allocation0 [shape = 'u32[]', space=smem, size = 0x4, offset = 0x4, fixed_abs, tag = 'smem constant byte address 0x4 - core index']
  #allocation1 [shape = 'u32[144,128]{1,0:T(1,128)}', space=vmem, size = 0x12000, scoped, tag = 'internal scratch']
  %s0 = inlined_call_operand.vmem [shape: bf16[2,17,17,128], index: 0, kind: input, shape index: {}]
  %s1 = inlined_call_operand.vmem [shape: bf16[2,15,15,128], index: 1, kind: output, shape index: {}]
  %s2 = sld [smem:[#allocation0]]
  $region37: #{feature_extractor.7} parent=0
    _
  %s4 = ssub.s32 1, %s2
  %s5 = scalar_select 0, %s4, %s2
  loop: start=0, step=1, limit=4
  $region2: #{feature_extractor.7} parent=0 // loop_pre_header
    _
  $region3: #{feature_extractor.7} parent=0 // loop_header
    %s7 = sphi 0, %s11
    %p8 = scmp.ge.s32.totalorder %s7, 4
    %s17 = sphi 0, %s19
    %s20 = sphi 0, %s17
    %s21 = sphi 0, %s20
    %s37 = sphi 0, %s21
    %s43 = sphi 0, %s45
    %s46 = sphi 0, %s43
    %s47 = sphi 0, %s46
    %s63 = sphi 0, %s47
  $region4: #{feature_extractor.7} parent=0 // loop_header_branch
    %10 = sbr.rel (%p8) target = $region8
  $region5: #{feature_extractor.7} parent=0 // loop_body
    %s12 = ssub.s32 %s7, 1
    %s13 = ssub.s32 %s7, 2
    %s14 = sadd.s32 %s7, 1
    %s15 = ssub.s32 %s7, %s14
    %p16 = scmp.eq.s32.totalorder %s15, 0
    %s18 = sadd.s32 %s17, 1
    %s19 = scalar_select %p16, %s17, %s18
    %p22 = pneg %p16
    %p23 = scmp.eq.s32.totalorder %s7, 1
    %p24 = por %p22, %p23
    %p25 = scmp.ne.s32.totalorder %s17, %s20
    %p26 = scmp.eq.s32.totalorder %s7, 0
    %p27 = por %p25, %p26
    %p28 = scmp.ne.s32.totalorder %s17, %s20
    %p29 = scmp.eq.s32.totalorder %s12, 1
    %p30 = por %p28, %p29
    %p31 = scmp.ne.s32.totalorder %s20, %s21
    %p32 = scmp.eq.s32.totalorder %s12, 0
    %p33 = por %p31, %p32
    %p34 = scmp.ne.s32.totalorder %s20, %s21
    %p35 = scmp.eq.s32.totalorder %s13, 1
    %p36 = por %p34, %p35
    %p38 = scmp.ne.s32.totalorder %s21, %s37
    %p39 = scmp.eq.s32.totalorder %s13, 0
    %p40 = por %p38, %p39
    %s41 = ssub.s32 %s7, %s14
    %p42 = scmp.eq.s32.totalorder %s41, 0
    %s44 = sadd.s32 %s43, 1
    %s45 = scalar_select %p42, %s43, %s44
    %p48 = pneg %p42
    %p49 = scmp.eq.s32.totalorder %s7, 1
    %p50 = por %p48, %p49
    %p51 = scmp.ne.s32.totalorder %s43, %s46
    %p52 = scmp.eq.s32.totalorder %s7, 0
    %p53 = por %p51, %p52
    %p54 = scmp.ne.s32.totalorder %s43, %s46
    %p55 = scmp.eq.s32.totalorder %s12, 1
    %p56 = por %p54, %p55
    %p57 = scmp.ne.s32.totalorder %s46, %s47
    %p58 = scmp.eq.s32.totalorder %s12, 0
    %p59 = por %p57, %p58
    %p60 = scmp.ne.s32.totalorder %s46, %s47
    %p61 = scmp.eq.s32.totalorder %s13, 1
    %p62 = por %p60, %p61
    %p64 = scmp.ne.s32.totalorder %s47, %s63
    %p65 = scmp.eq.s32.totalorder %s13, 0
    %p66 = por %p64, %p65
    %p67 = scmp.le.s32.totalorder 1, %s7
    %p68 = scmp.lt.s32.totalorder %s7, 3
    %p69 = pnand %p67, %p68
    %p70 = pneg %p69
    // Predicated region
    $region9: #{feature_extractor.7} parent=5 // pred_check
      _
    $region10: #{feature_extractor.7} parent=5 // pred_check_branch
      %72 = sbr.rel (%p69) target = $region12
    $region11: #{feature_extractor.7} parent=5 // pred_region
      %s73 = ssub.s32 %s7, 1
    $region12: #{feature_extractor.7} parent=5 // pred_fallthru
      _
    %p74 = scmp.lt.s32.totalorder %s7, 2
    // Predicated region
    $region13: #{feature_extractor.7} parent=5 // pred_check
      %p75 = pneg %p74
    $region14: #{feature_extractor.7} parent=5 // pred_check_branch
      %77 = sbr.rel (%p75) target = $region16
    $region15: #{feature_extractor.7} parent=5 // pred_region
      // Predicated region
      $region17: #{feature_extractor.7} parent=15 // pred_check
        %p78 = pneg %p27
      $region18: #{feature_extractor.7} parent=15 // pred_check_branch
        %80 = sbr.rel (%p78) target = $region20
      $region19: #{feature_extractor.7} parent=15 // pred_region
        %p81 = scmp.lt.s32.totalorder %s7, 1
        %s82 = scalar_select %p81, %s7, 1
        %s83 = smul.addr %s82, 51
        %s84 = smul.addr %s83, 4
        %s85 = scalar_lea.vmem %s0, %s84
      $region20: #{feature_extractor.7} parent=15 // pred_fallthru
        _
    $region16: #{feature_extractor.7} parent=5 // pred_fallthru
      _
    %p86 = scmp.le.s32.totalorder 1, %s7
    %p87 = scmp.lt.s32.totalorder %s7, 3
    %p88 = pnand %p86, %p87
    %p89 = pneg %p88
    // Predicated region
    $region21: #{feature_extractor.7} parent=5 // pred_check
      _
    $region22: #{feature_extractor.7} parent=5 // pred_check_branch
      %91 = sbr.rel (%p88) target = $region24
    $region23: #{feature_extractor.7} parent=5 // pred_region
      %s92 = ssub.s32 %s7, 1
      %p93 = scmp.lt.s32.totalorder %s12, 1
      %s94 = scalar_select %p93, %s12, 1
      %s95 = smul.addr %s94, 51
      %s96 = smul.addr %s95, 4
      %s97 = scalar_lea.vmem %s0, %s96
      %p98 = pneg %p33
      %p99 = pneg %p30
      %p100 = pneg %p59
      %p101 = pneg %p56
      %p102 = scmp.lt.s32.totalorder %s12, 1
      %s103 = scalar_select %p102, %s12, 1
      %s104 = smul.addr %s103, 30
      %s105 = smul.addr %s104, 4
      %s106 = scalar_lea.vmem %s1, %s105
      %p107 = scmp.lt.s32.totalorder %s12, 1
      %s108 = scalar_select %p107, %s12, 1
      %s109 = smul.addr %s108, 51
      %s110 = smul.addr %s109, 4
      %s111 = scalar_lea.vmem %s0, %s110
      %p112 = scmp.lt.s32.totalorder %s12, 1
      %s113 = scalar_select %p112, %s12, 1
      %s114 = smul.addr %s113, 30
      %s115 = smul.addr %s114, 4
      %s116 = scalar_lea.vmem %s1, %s115
      %v117 = vld [vmem:[%s111] sm:$0xf]
      %v118 = vld [vmem:[%s111 + $0x4] sm:$0xf]
      %v119 = vld [vmem:[%s111 + $0x8] sm:$0x1]
      %v120 = vld [vmem:[%s111 + $0xc] sm:$0xf]
      %v121 = vld [vmem:[%s111 + $0x10] sm:$0xf]
      %v122 = vld [vmem:[%s111 + $0x14] sm:$0x1]
      %v123 = vld [vmem:[%s111 + $0x18] sm:$0xf]
      %v124 = vld [vmem:[%s111 + $0x1c] sm:$0xf]
      %v125 = vld [vmem:[%s111 + $0x20] sm:$0x1]
      %v126 = vld [vmem:[%s111 + $0x24] sm:$0xf]
      %v127 = vld [vmem:[%s111 + $0x28] sm:$0xf]
      %v128 = vld [vmem:[%s111 + $0x2c] sm:$0x1]
      %v129 = vld [vmem:[%s111 + $0x30] sm:$0xf]
      %v130 = vld [vmem:[%s111 + $0x34] sm:$0xf]
      %v131 = vld [vmem:[%s111 + $0x38] sm:$0x1]
      %v132 = vld [vmem:[%s111 + $0x3c] sm:$0xf]
      %v133 = vld [vmem:[%s111 + $0x40] sm:$0xf]
      %v134 = vld [vmem:[%s111 + $0x44] sm:$0x1]
      %v135 = vld [vmem:[%s111 + $0x48] sm:$0xf]
      %v136 = vld [vmem:[%s111 + $0x4c] sm:$0xf]
      %v137 = vld [vmem:[%s111 + $0x50] sm:$0x1]
      %v138 = vld [vmem:[%s111 + $0x54] sm:$0xf]
      %v139 = vld [vmem:[%s111 + $0x58] sm:$0xf]
      %v140 = vld [vmem:[%s111 + $0x5c] sm:$0x1]
      %v141 = vld [vmem:[%s111 + $0x60] sm:$0xf]
      %v142 = vld [vmem:[%s111 + $0x64] sm:$0xf]
      %v143 = vld [vmem:[%s111 + $0x68] sm:$0x1]
      %v144 = vld [vmem:[%s111 + $0x6c] sm:$0xf]
      %v145 = vld [vmem:[%s111 + $0x70] sm:$0xf]
      %v146 = vld [vmem:[%s111 + $0x74] sm:$0x1]
      %v147 = vld [vmem:[%s111 + $0x78] sm:$0xf]
      %v148 = vld [vmem:[%s111 + $0x7c] sm:$0xf]
      %v149 = vld [vmem:[%s111 + $0x80] sm:$0x1]
      %v150 = vld [vmem:[%s111 + $0x84] sm:$0xf]
      %v151 = vld [vmem:[%s111 + $0x88] sm:$0xf]
      %v152 = vld [vmem:[%s111 + $0x8c] sm:$0x1]
      %v153 = vld [vmem:[%s111 + $0x90] sm:$0xf]
      %v154 = vld [vmem:[%s111 + $0x94] sm:$0xf]
      %v155 = vld [vmem:[%s111 + $0x98] sm:$0x1]
      %v156 = vld [vmem:[%s111 + $0x9c] sm:$0xf]
      %v157 = vld [vmem:[%s111 + $0xa0] sm:$0xf]
      %v158 = vld [vmem:[%s111 + $0xa4] sm:$0x1]
      %v159 = vld [vmem:[%s111 + $0xa8] sm:$0xf]
      %v160 = vld [vmem:[%s111 + $0xac] sm:$0xf]
      %v161 = vld [vmem:[%s111 + $0xb0] sm:$0x1]
      %v162 = vld [vmem:[%s111 + $0xb4] sm:$0xf]
      %v163 = vld [vmem:[%s111 + $0xb8] sm:$0xf]
      %v164 = vld [vmem:[%s111 + $0xbc] sm:$0x1]
      %v165 = vld [vmem:[%s111 + $0xc0] sm:$0xf]
      %v166 = vld [vmem:[%s111 + $0xc4] sm:$0xf]
      %v167 = vld [vmem:[%s111 + $0xc8] sm:$0x1]
      %v168 = vunpack.c.l.bf16 %v117
      %v169 = vunpack.c.l.bf16 %v118
      %v170 = vunpack.c.l.bf16 %v119
      %v171 = vunpack.c.l.bf16 %v120
      %v172 = vunpack.c.l.bf16 %v121
      %v173 = vunpack.c.l.bf16 %v122
      %v174 = vunpack.c.l.bf16 %v123
      %v175 = vunpack.c.l.bf16 %v124
      %v176 = vunpack.c.l.bf16 %v125
      %v177 = vunpack.c.l.bf16 %v126
      %v178 = vunpack.c.l.bf16 %v127
      %v179 = vunpack.c.l.bf16 %v128
      %v180 = vunpack.c.l.bf16 %v129
      %v181 = vunpack.c.l.bf16 %v130
      %v182 = vunpack.c.l.bf16 %v131
      %v183 = vunpack.c.l.bf16 %v132
      %v184 = vunpack.c.l.bf16 %v133
      %v185 = vunpack.c.l.bf16 %v134
      %v186 = vunpack.c.l.bf16 %v135
      %v187 = vunpack.c.l.bf16 %v136
      %v188 = vunpack.c.l.bf16 %v137
      %v189 = vunpack.c.l.bf16 %v138
      %v190 = vunpack.c.l.bf16 %v139
      %v191 = vunpack.c.l.bf16 %v140
      %v192 = vunpack.c.l.bf16 %v141
      %v193 = vunpack.c.l.bf16 %v142
      %v194 = vunpack.c.l.bf16 %v143
      %v195 = vunpack.c.l.bf16 %v144
      %v196 = vunpack.c.l.bf16 %v145
      %v197 = vunpack.c.l.bf16 %v146
      %v198 = vunpack.c.l.bf16 %v147
      %v199 = vunpack.c.l.bf16 %v148
      %v200 = vunpack.c.l.bf16 %v149
      %v201 = vunpack.c.l.bf16 %v150
      %v202 = vunpack.c.l.bf16 %v151
      %v203 = vunpack.c.l.bf16 %v152
      %v204 = vunpack.c.l.bf16 %v153
      %v205 = vunpack.c.l.bf16 %v154
      %v206 = vunpack.c.l.bf16 %v155
      %v207 = vunpack.c.l.bf16 %v156
      %v208 = vunpack.c.l.bf16 %v157
      %v209 = vunpack.c.l.bf16 %v158
      %v210 = vunpack.c.l.bf16 %v159
      %v211 = vunpack.c.l.bf16 %v160
      %v212 = vunpack.c.l.bf16 %v161
      %v213 = vunpack.c.l.bf16 %v162
      %v214 = vunpack.c.l.bf16 %v163
      %v215 = vunpack.c.l.bf16 %v164
      %v216 = vunpack.c.l.bf16 %v165
      %v217 = vunpack.c.l.bf16 %v166
      %v218 = vunpack.c.l.bf16 %v167
      %v219 = vadd.f32 %v168, %v171
      %v220 = vadd.f32 %v169, %v172
      %v221 = vadd.f32 %v170, %v173
      %v222 = vadd.f32 %v171, %v174
      %v223 = vadd.f32 %v172, %v175
      %v224 = vadd.f32 %v173, %v176
      %v225 = vadd.f32 %v174, %v177
      %v226 = vadd.f32 %v175, %v178
      %v227 = vadd.f32 %v176, %v179
      %v228 = vadd.f32 %v177, %v180
      %v229 = vadd.f32 %v178, %v181
      %v230 = vadd.f32 %v179, %v182
      %v231 = vadd.f32 %v180, %v183
      %v232 = vadd.f32 %v181, %v184
      %v233 = vadd.f32 %v182, %v185
      %v234 = vadd.f32 %v183, %v186
      %v235 = vadd.f32 %v184, %v187
      %v236 = vadd.f32 %v185, %v188
      %v237 = vadd.f32 %v186, %v189
      %v238 = vadd.f32 %v187, %v190
      %v239 = vadd.f32 %v188, %v191
      %v240 = vadd.f32 %v189, %v192
      %v241 = vadd.f32 %v190, %v193
      %v242 = vadd.f32 %v191, %v194
      %v243 = vadd.f32 %v192, %v195
      %v244 = vadd.f32 %v193, %v196
      %v245 = vadd.f32 %v194, %v197
      %v246 = vadd.f32 %v195, %v198
      %v247 = vadd.f32 %v196, %v199
      %v248 = vadd.f32 %v197, %v200
      %v249 = vadd.f32 %v198, %v201
      %v250 = vadd.f32 %v199, %v202
      %v251 = vadd.f32 %v200, %v203
      %v252 = vadd.f32 %v201, %v204
      %v253 = vadd.f32 %v202, %v205
      %v254 = vadd.f32 %v203, %v206
      %v255 = vadd.f32 %v204, %v207
      %v256 = vadd.f32 %v205, %v208
      %v257 = vadd.f32 %v206, %v209
      %v258 = vadd.f32 %v207, %v210
      %v259 = vadd.f32 %v208, %v211
      %v260 = vadd.f32 %v209, %v212
      %v261 = vadd.f32 %v210, %v213
      %v262 = vadd.f32 %v211, %v214
      %v263 = vadd.f32 %v212, %v215
      %v264 = vadd.f32 %v219, %v174
      %v265 = vadd.f32 %v220, %v175
      %v266 = vadd.f32 %v221, %v176
      %v267 = vadd.f32 %v222, %v177
      %v268 = vadd.f32 %v223, %v178
      %v269 = vadd.f32 %v224, %v179
      %v270 = vadd.f32 %v225, %v180
      %v271 = vadd.f32 %v226, %v181
      %v272 = vadd.f32 %v227, %v182
      %v273 = vadd.f32 %v228, %v183
      %v274 = vadd.f32 %v229, %v184
      %v275 = vadd.f32 %v230, %v185
      %v276 = vadd.f32 %v231, %v186
      %v277 = vadd.f32 %v232, %v187
      %v278 = vadd.f32 %v233, %v188
      %v279 = vadd.f32 %v234, %v189
      %v280 = vadd.f32 %v235, %v190
      %v281 = vadd.f32 %v236, %v191
      %v282 = vadd.f32 %v237, %v192
      %v283 = vadd.f32 %v238, %v193
      %v284 = vadd.f32 %v239, %v194
      %v285 = vadd.f32 %v240, %v195
      %v286 = vadd.f32 %v241, %v196
      %v287 = vadd.f32 %v242, %v197
      %v288 = vadd.f32 %v243, %v198
      %v289 = vadd.f32 %v244, %v199
      %v290 = vadd.f32 %v245, %v200
      %v291 = vadd.f32 %v246, %v201
      %v292 = vadd.f32 %v247, %v202
      %v293 = vadd.f32 %v248, %v203
      %v294 = vadd.f32 %v249, %v204
      %v295 = vadd.f32 %v250, %v205
      %v296 = vadd.f32 %v251, %v206
      %v297 = vadd.f32 %v252, %v207
      %v298 = vadd.f32 %v253, %v208
      %v299 = vadd.f32 %v254, %v209
      %v300 = vadd.f32 %v255, %v210
      %v301 = vadd.f32 %v256, %v211
      %v302 = vadd.f32 %v257, %v212
      %v303 = vadd.f32 %v258, %v213
      %v304 = vadd.f32 %v259, %v214
      %v305 = vadd.f32 %v260, %v215
      %v306 = vadd.f32 %v261, %v216
      %v307 = vadd.f32 %v262, %v217
      %v308 = vadd.f32 %v263, %v218
      %vm339 = vcmask 1046528
      %v340 = vrot.slane %v264, 1
      %v341 = vrot.slane %v265, 1
      %v342 = vsel %vm339, %v340, %v341
      %v343 = vrot.slane %v267, 1
      %v344 = vrot.slane %v268, 1
      %v345 = vsel %vm339, %v343, %v344
      %v346 = vrot.slane %v270, 1
      %v347 = vrot.slane %v271, 1
      %v348 = vsel %vm339, %v346, %v347
      %v349 = vrot.slane %v273, 1
      %v350 = vrot.slane %v274, 1
      %v351 = vsel %vm339, %v349, %v350
      %v352 = vrot.slane %v276, 1
      %v353 = vrot.slane %v277, 1
      %v354 = vsel %vm339, %v352, %v353
      %v355 = vrot.slane %v279, 1
      %v356 = vrot.slane %v280, 1
      %v357 = vsel %vm339, %v355, %v356
      %v358 = vrot.slane %v282, 1
      %v359 = vrot.slane %v283, 1
      %v360 = vsel %vm339, %v358, %v359
      %v361 = vrot.slane %v285, 1
      %v362 = vrot.slane %v286, 1
      %v363 = vsel %vm339, %v361, %v362
      %v364 = vrot.slane %v288, 1
      %v365 = vrot.slane %v289, 1
      %v366 = vsel %vm339, %v364, %v365
      %v367 = vrot.slane %v291, 1
      %v368 = vrot.slane %v292, 1
      %v369 = vsel %vm339, %v367, %v368
      %v370 = vrot.slane %v294, 1
      %v371 = vrot.slane %v295, 1
      %v372 = vsel %vm339, %v370, %v371
      %v373 = vrot.slane %v297, 1
      %v374 = vrot.slane %v298, 1
      %v375 = vsel %vm339, %v373, %v374
      %v376 = vrot.slane %v300, 1
      %v377 = vrot.slane %v301, 1
      %v378 = vsel %vm339, %v376, %v377
      %v379 = vrot.slane %v303, 1
      %v380 = vrot.slane %v304, 1
      %v381 = vsel %vm339, %v379, %v380
      %v382 = vrot.slane %v306, 1
      %v383 = vrot.slane %v307, 1
      %v384 = vsel %vm339, %v382, %v383
      %v415 = vadd.f32 %v264, %v342
      %v416 = vadd.f32 %v265, %v341
      %v417 = vadd.f32 %v267, %v345
      %v418 = vadd.f32 %v268, %v344
      %v419 = vadd.f32 %v270, %v348
      %v420 = vadd.f32 %v271, %v347
      %v421 = vadd.f32 %v273, %v351
      %v422 = vadd.f32 %v274, %v350
      %v423 = vadd.f32 %v276, %v354
      %v424 = vadd.f32 %v277, %v353
      %v425 = vadd.f32 %v279, %v357
      %v426 = vadd.f32 %v280, %v356
      %v427 = vadd.f32 %v282, %v360
      %v428 = vadd.f32 %v283, %v359
      %v429 = vadd.f32 %v285, %v363
      %v430 = vadd.f32 %v286, %v362
      %v431 = vadd.f32 %v288, %v366
      %v432 = vadd.f32 %v289, %v365
      %v433 = vadd.f32 %v291, %v369
      %v434 = vadd.f32 %v292, %v368
      %v435 = vadd.f32 %v294, %v372
      %v436 = vadd.f32 %v295, %v371
      %v437 = vadd.f32 %v297, %v375
      %v438 = vadd.f32 %v298, %v374
      %v439 = vadd.f32 %v300, %v378
      %v440 = vadd.f32 %v301, %v377
      %v441 = vadd.f32 %v303, %v381
      %v442 = vadd.f32 %v304, %v380
      %v443 = vadd.f32 %v306, %v384
      %v444 = vadd.f32 %v307, %v383
      %vm460 = vcmask 1045504
      %v461 = vrot.slane %v264, 2
      %v462 = vrot.slane %v265, 2
      %v463 = vsel %vm460, %v461, %v462
      %v464 = vrot.slane %v266, 2
      %v465 = vsel %vm460, %v462, %v464
      %v466 = vrot.slane %v267, 2
      %v467 = vrot.slane %v268, 2
      %v468 = vsel %vm460, %v466, %v467
      %v469 = vrot.slane %v269, 2
      %v470 = vsel %vm460, %v467, %v469
      %v471 = vrot.slane %v270, 2
      %v472 = vrot.slane %v271, 2
      %v473 = vsel %vm460, %v471, %v472
      %v474 = vrot.slane %v272, 2
      %v475 = vsel %vm460, %v472, %v474
      %v476 = vrot.slane %v273, 2
      %v477 = vrot.slane %v274, 2
      %v478 = vsel %vm460, %v476, %v477
      %v479 = vrot.slane %v275, 2
      %v480 = vsel %vm460, %v477, %v479
      %v481 = vrot.slane %v276, 2
      %v482 = vrot.slane %v277, 2
      %v483 = vsel %vm460, %v481, %v482
      %v484 = vrot.slane %v278, 2
      %v485 = vsel %vm460, %v482, %v484
      %v486 = vrot.slane %v279, 2
      %v487 = vrot.slane %v280, 2
      %v488 = vsel %vm460, %v486, %v487
      %v489 = vrot.slane %v281, 2
      %v490 = vsel %vm460, %v487, %v489
      %v491 = vrot.slane %v282, 2
      %v492 = vrot.slane %v283, 2
      %v493 = vsel %vm460, %v491, %v492
      %v494 = vrot.slane %v284, 2
      %v495 = vsel %vm460, %v492, %v494
      %v496 = vrot.slane %v285, 2
      %v497 = vrot.slane %v286, 2
      %v498 = vsel %vm460, %v496, %v497
      %v499 = vrot.slane %v287, 2
      %v500 = vsel %vm460, %v497, %v499
      %v501 = vrot.slane %v288, 2
      %v502 = vrot.slane %v289, 2
      %v503 = vsel %vm460, %v501, %v502
      %v504 = vrot.slane %v290, 2
      %v505 = vsel %vm460, %v502, %v504
      %v506 = vrot.slane %v291, 2
      %v507 = vrot.slane %v292, 2
      %v508 = vsel %vm460, %v506, %v507
      %v509 = vrot.slane %v293, 2
      %v510 = vsel %vm460, %v507, %v509
      %v511 = vrot.slane %v294, 2
      %v512 = vrot.slane %v295, 2
      %v513 = vsel %vm460, %v511, %v512
      %v514 = vrot.slane %v296, 2
      %v515 = vsel %vm460, %v512, %v514
      %v516 = vrot.slane %v297, 2
      %v517 = vrot.slane %v298, 2
      %v518 = vsel %vm460, %v516, %v517
      %v519 = vrot.slane %v299, 2
      %v520 = vsel %vm460, %v517, %v519
      %v521 = vrot.slane %v300, 2
      %v522 = vrot.slane %v301, 2
      %v523 = vsel %vm460, %v521, %v522
      %v524 = vrot.slane %v302, 2
      %v525 = vsel %vm460, %v522, %v524
      %v526 = vrot.slane %v303, 2
      %v527 = vrot.slane %v304, 2
      %v528 = vsel %vm460, %v526, %v527
      %v529 = vrot.slane %v305, 2
      %v530 = vsel %vm460, %v527, %v529
      %v531 = vrot.slane %v306, 2
      %v532 = vrot.slane %v307, 2
      %v533 = vsel %vm460, %v531, %v532
      %v534 = vrot.slane %v308, 2
      %v535 = vsel %vm460, %v532, %v534
      %v566 = vadd.f32 %v415, %v463
      %v567 = vadd.f32 %v416, %v465
      %v568 = vadd.f32 %v417, %v468
      %v569 = vadd.f32 %v418, %v470
      %v570 = vadd.f32 %v419, %v473
      %v571 = vadd.f32 %v420, %v475
      %v572 = vadd.f32 %v421, %v478
      %v573 = vadd.f32 %v422, %v480
      %v574 = vadd.f32 %v423, %v483
      %v575 = vadd.f32 %v424, %v485
      %v576 = vadd.f32 %v425, %v488
      %v577 = vadd.f32 %v426, %v490
      %v578 = vadd.f32 %v427, %v493
      %v579 = vadd.f32 %v428, %v495
      %v580 = vadd.f32 %v429, %v498
      %v581 = vadd.f32 %v430, %v500
      %v582 = vadd.f32 %v431, %v503
      %v583 = vadd.f32 %v432, %v505
      %v584 = vadd.f32 %v433, %v508
      %v585 = vadd.f32 %v434, %v510
      %v586 = vadd.f32 %v435, %v513
      %v587 = vadd.f32 %v436, %v515
      %v588 = vadd.f32 %v437, %v518
      %v589 = vadd.f32 %v438, %v520
      %v590 = vadd.f32 %v439, %v523
      %v591 = vadd.f32 %v440, %v525
      %v592 = vadd.f32 %v441, %v528
      %v593 = vadd.f32 %v442, %v530
      %v594 = vadd.f32 %v443, %v533
      %v595 = vadd.f32 %v444, %v535
      %v596 = vmul.f32 %v566, 0.11111111
      %v597 = vmul.f32 %v567, 0.11111111
      %v598 = vmul.f32 %v568, 0.11111111
      %v599 = vmul.f32 %v569, 0.11111111
      %v600 = vmul.f32 %v570, 0.11111111
      %v601 = vmul.f32 %v571, 0.11111111
      %v602 = vmul.f32 %v572, 0.11111111
      %v603 = vmul.f32 %v573, 0.11111111
      %v604 = vmul.f32 %v574, 0.11111111
      %v605 = vmul.f32 %v575, 0.11111111
      %v606 = vmul.f32 %v576, 0.11111111
      %v607 = vmul.f32 %v577, 0.11111111
      %v608 = vmul.f32 %v578, 0.11111111
      %v609 = vmul.f32 %v579, 0.11111111
      %v610 = vmul.f32 %v580, 0.11111111
      %v611 = vmul.f32 %v581, 0.11111111
      %v612 = vmul.f32 %v582, 0.11111111
      %v613 = vmul.f32 %v583, 0.11111111
      %v614 = vmul.f32 %v584, 0.11111111
      %v615 = vmul.f32 %v585, 0.11111111
      %v616 = vmul.f32 %v586, 0.11111111
      %v617 = vmul.f32 %v587, 0.11111111
      %v618 = vmul.f32 %v588, 0.11111111
      %v619 = vmul.f32 %v589, 0.11111111
      %v620 = vmul.f32 %v590, 0.11111111
      %v621 = vmul.f32 %v591, 0.11111111
      %v622 = vmul.f32 %v592, 0.11111111
      %v623 = vmul.f32 %v593, 0.11111111
      %v624 = vmul.f32 %v594, 0.11111111
      %v625 = vmul.f32 %v595, 0.11111111
      %v626 = vpack.c.bf16 %v597, %v596
      %v627 = vpack.c.bf16 %v599, %v598
      %v628 = vpack.c.bf16 %v601, %v600
      %v629 = vpack.c.bf16 %v603, %v602
      %v630 = vpack.c.bf16 %v605, %v604
      %v631 = vpack.c.bf16 %v607, %v606
      %v632 = vpack.c.bf16 %v609, %v608
      %v633 = vpack.c.bf16 %v611, %v610
      %v634 = vpack.c.bf16 %v613, %v612
      %v635 = vpack.c.bf16 %v615, %v614
      %v636 = vpack.c.bf16 %v617, %v616
      %v637 = vpack.c.bf16 %v619, %v618
      %v638 = vpack.c.bf16 %v621, %v620
      %v639 = vpack.c.bf16 %v623, %v622
      %v640 = vpack.c.bf16 %v625, %v624
      %v656 = vunpack.c.l.b16 %v626
      %v657 = vunpack.c.h.b16 %v626
      %v658 = vunpack.c.l.b16 %v627
      %v659 = vunpack.c.h.b16 %v627
      %v660 = vunpack.c.l.b16 %v628
      %v661 = vunpack.c.h.b16 %v628
      %v662 = vunpack.c.l.b16 %v629
      %v663 = vunpack.c.h.b16 %v629
      %v664 = vunpack.c.l.b16 %v630
      %v665 = vunpack.c.h.b16 %v630
      %v666 = vunpack.c.l.b16 %v631
      %v667 = vunpack.c.h.b16 %v631
      %v668 = vunpack.c.l.b16 %v632
      %v669 = vunpack.c.h.b16 %v632
      %v670 = vunpack.c.l.b16 %v633
      %v671 = vunpack.c.h.b16 %v633
      %v672 = vunpack.c.l.b16 %v634
      %v673 = vunpack.c.h.b16 %v634
      %v674 = vunpack.c.l.b16 %v635
      %v675 = vunpack.c.h.b16 %v635
      %v676 = vunpack.c.l.b16 %v636
      %v677 = vunpack.c.h.b16 %v636
      %v678 = vunpack.c.l.b16 %v637
      %v679 = vunpack.c.h.b16 %v637
      %v680 = vunpack.c.l.b16 %v638
      %v681 = vunpack.c.h.b16 %v638
      %v682 = vunpack.c.l.b16 %v639
      %v683 = vunpack.c.h.b16 %v639
      %v684 = vunpack.c.l.b16 %v640
      %v685 = vunpack.c.h.b16 %v640
      %v686 = vpack.c.b16 %v656, %v656
      %v687 = vpack.c.b16 %v657, %v657
      %v688 = vpack.c.b16 %v658, %v658
      %v689 = vpack.c.b16 %v659, %v659
      %v690 = vpack.c.b16 %v660, %v660
      %v691 = vpack.c.b16 %v661, %v661
      %v692 = vpack.c.b16 %v662, %v662
      %v693 = vpack.c.b16 %v663, %v663
      %v694 = vpack.c.b16 %v664, %v664
      %v695 = vpack.c.b16 %v665, %v665
      %v696 = vpack.c.b16 %v666, %v666
      %v697 = vpack.c.b16 %v667, %v667
      %v698 = vpack.c.b16 %v668, %v668
      %v699 = vpack.c.b16 %v669, %v669
      %v700 = vpack.c.b16 %v670, %v670
      %v701 = vpack.c.b16 %v671, %v671
      %v702 = vpack.c.b16 %v672, %v672
      %v703 = vpack.c.b16 %v673, %v673
      %v704 = vpack.c.b16 %v674, %v674
      %v705 = vpack.c.b16 %v675, %v675
      %v706 = vpack.c.b16 %v676, %v676
      %v707 = vpack.c.b16 %v677, %v677
      %v708 = vpack.c.b16 %v678, %v678
      %v709 = vpack.c.b16 %v679, %v679
      %v710 = vpack.c.b16 %v680, %v680
      %v711 = vpack.c.b16 %v681, %v681
      %v712 = vpack.c.b16 %v682, %v682
      %v713 = vpack.c.b16 %v683, %v683
      %v714 = vpack.c.b16 %v684, %v684
      %v715 = vpack.c.b16 %v685, %v685
      %746 = vst [vmem:[%s116] sm:$0xf] %v686
      %vm747 = vcmask 1043456
      %vm748 = vsmask.f32 3328
      %vm749 = vmand %vm747, %vm748
      %v750 = vld [vmem:[%s116 + $0x4] sm:$0xf]
      %v751 = vsel %vm749, %v687, %v750
      %752 = vst [vmem:[%s116 + $0x4] sm:$0xf] %v751
      %753 = vst [vmem:[%s116 + $0x8] sm:$0xf] %v688
      %v754 = vld [vmem:[%s116 + $0xc] sm:$0xf]
      %v755 = vsel %vm749, %v689, %v754
      %756 = vst [vmem:[%s116 + $0xc] sm:$0xf] %v755
      %757 = vst [vmem:[%s116 + $0x10] sm:$0xf] %v690
      %v758 = vld [vmem:[%s116 + $0x14] sm:$0xf]
      %v759 = vsel %vm749, %v691, %v758
      %760 = vst [vmem:[%s116 + $0x14] sm:$0xf] %v759
      %761 = vst [vmem:[%s116 + $0x18] sm:$0xf] %v692
      %v762 = vld [vmem:[%s116 + $0x1c] sm:$0xf]
      %v763 = vsel %vm749, %v693, %v762
      %764 = vst [vmem:[%s116 + $0x1c] sm:$0xf] %v763
      %765 = vst [vmem:[%s116 + $0x20] sm:$0xf] %v694
      %v766 = vld [vmem:[%s116 + $0x24] sm:$0xf]
      %v767 = vsel %vm749, %v695, %v766
      %768 = vst [vmem:[%s116 + $0x24] sm:$0xf] %v767
      %769 = vst [vmem:[%s116 + $0x28] sm:$0xf] %v696
      %v770 = vld [vmem:[%s116 + $0x2c] sm:$0xf]
      %v771 = vsel %vm749, %v697, %v770
      %772 = vst [vmem:[%s116 + $0x2c] sm:$0xf] %v771
      %773 = vst [vmem:[%s116 + $0x30] sm:$0xf] %v698
      %v774 = vld [vmem:[%s116 + $0x34] sm:$0xf]
      %v775 = vsel %vm749, %v699, %v774
      %776 = vst [vmem:[%s116 + $0x34] sm:$0xf] %v775
      %777 = vst [vmem:[%s116 + $0x38] sm:$0xf] %v700
      %v778 = vld [vmem:[%s116 + $0x3c] sm:$0xf]
      %v779 = vsel %vm749, %v701, %v778
      %780 = vst [vmem:[%s116 + $0x3c] sm:$0xf] %v779
      %781 = vst [vmem:[%s116 + $0x40] sm:$0xf] %v702
      %v782 = vld [vmem:[%s116 + $0x44] sm:$0xf]
      %v783 = vsel %vm749, %v703, %v782
      %784 = vst [vmem:[%s116 + $0x44] sm:$0xf] %v783
      %785 = vst [vmem:[%s116 + $0x48] sm:$0xf] %v704
      %v786 = vld [vmem:[%s116 + $0x4c] sm:$0xf]
      %v787 = vsel %vm749, %v705, %v786
      %788 = vst [vmem:[%s116 + $0x4c] sm:$0xf] %v787
      %789 = vst [vmem:[%s116 + $0x50] sm:$0xf] %v706
      %v790 = vld [vmem:[%s116 + $0x54] sm:$0xf]
      %v791 = vsel %vm749, %v707, %v790
      %792 = vst [vmem:[%s116 + $0x54] sm:$0xf] %v791
      %793 = vst [vmem:[%s116 + $0x58] sm:$0xf] %v708
      %v794 = vld [vmem:[%s116 + $0x5c] sm:$0xf]
      %v795 = vsel %vm749, %v709, %v794
      %796 = vst [vmem:[%s116 + $0x5c] sm:$0xf] %v795
      %797 = vst [vmem:[%s116 + $0x60] sm:$0xf] %v710
      %v798 = vld [vmem:[%s116 + $0x64] sm:$0xf]
      %v799 = vsel %vm749, %v711, %v798
      %800 = vst [vmem:[%s116 + $0x64] sm:$0xf] %v799
      %801 = vst [vmem:[%s116 + $0x68] sm:$0xf] %v712
      %v802 = vld [vmem:[%s116 + $0x6c] sm:$0xf]
      %v803 = vsel %vm749, %v713, %v802
      %804 = vst [vmem:[%s116 + $0x6c] sm:$0xf] %v803
      %805 = vst [vmem:[%s116 + $0x70] sm:$0xf] %v714
      %v806 = vld [vmem:[%s116 + $0x74] sm:$0xf]
      %v807 = vsel %vm749, %v715, %v806
      %808 = vst [vmem:[%s116 + $0x74] sm:$0xf] %v807
      %p809 = scmp.lt.s32.totalorder %s12, 1
      %s810 = scalar_select %p809, %s12, 1
      %s811 = smul.addr %s810, 30
      %s812 = smul.addr %s811, 4
      %s813 = scalar_lea.vmem %s1, %s812
      // Predicated region
      $region25: #{feature_extractor.7} parent=23 // pred_check
        %p814 = pneg %p56
      $region26: #{feature_extractor.7} parent=23 // pred_check_branch
        %816 = sbr.rel (%p814) target = $region28
      $region27: #{feature_extractor.7} parent=23 // pred_region
        _
      $region28: #{feature_extractor.7} parent=23 // pred_fallthru
        _
    $region24: #{feature_extractor.7} parent=5 // pred_fallthru
      _
    %p817 = scmp.le.s32.totalorder 2, %s7
    // Predicated region
    $region29: #{feature_extractor.7} parent=5 // pred_check
      %p818 = pneg %p817
    $region30: #{feature_extractor.7} parent=5 // pred_check_branch
      %820 = sbr.rel (%p818) target = $region32
    $region31: #{feature_extractor.7} parent=5 // pred_region
      %s821 = ssub.s32 %s7, 2
      // Predicated region
      $region33: #{feature_extractor.7} parent=31 // pred_check
        %p822 = pneg %p62
      $region34: #{feature_extractor.7} parent=31 // pred_check_branch
        %824 = sbr.rel (%p822) target = $region36
      $region35: #{feature_extractor.7} parent=31 // pred_region
        %p825 = scmp.lt.s32.totalorder %s13, 1
        %s826 = scalar_select %p825, %s13, 1
        %s827 = smul.addr %s826, 30
        %s828 = smul.addr %s827, 4
        %s829 = scalar_lea.vmem %s1, %s828
      $region36: #{feature_extractor.7} parent=31 // pred_fallthru
        _
    $region32: #{feature_extractor.7} parent=5 // pred_fallthru
      _
  $region6: #{feature_extractor.7} parent=0 // loop_footer
    %s11 = sadd.s32 1, %s7
  $region7: #{feature_extractor.7} parent=0 // loop_footer_branch
    %6 = sbr.rel target = $region3
  $region8: #{feature_extractor.7} parent=0 // loop_exit
    _

// kernel: feature_extractor.8
$region0: #{feature_extractor.8}
  #allocation0 [shape = 'u32[]', space=smem, size = 0x4, offset = 0x4, fixed_abs, tag = 'smem constant byte address 0x4 - core index']
  #allocation1 [shape = 'u32[144,128]{1,0:T(1,128)}', space=vmem, size = 0x12000, scoped, tag = 'internal scratch']
  %s0 = inlined_call_operand.vmem [shape: bf16[912,128], index: 0, kind: input, shape index: {}]
  %s1 = inlined_call_operand.vmem [shape: bf16[128,128], index: 1, kind: input, shape index: {}]
  %s2 = inlined_call_operand.vmem [shape: f32[1,128], index: 2, kind: input, shape index: {}]
  %s3 = inlined_call_operand.vmem [shape: bf16[912,128], index: 3, kind: output, shape index: {}]
  %s4 = sld [smem:[#allocation0]]
  $region45: #{feature_extractor.8} parent=0
    _
  %s6 = ssub.s32 1, %s4
  %s7 = scalar_select 0, %s6, %s4
  loop: start=0, step=1, limit=4
  $region2: #{feature_extractor.8} parent=0 // loop_pre_header
    _
  $region3: #{feature_extractor.8} parent=0 // loop_header
    %s9 = sphi 0, %s13
    %p10 = scmp.ge.s32.totalorder %s9, 4
    %s19 = sphi 0, %s21
    %s22 = sphi 0, %s19
    %s23 = sphi 0, %s22
    %s39 = sphi 0, %s23
    %s43 = sphi 0, %s43
    %s45 = sphi 0, %s43
    %s46 = sphi 0, %s45
    %s60 = sphi 0, %s46
    %s64 = sphi 0, %s64
    %s66 = sphi 0, %s64
    %s67 = sphi 0, %s66
    %s81 = sphi 0, %s67
    %s87 = sphi 0, %s89
    %s90 = sphi 0, %s87
    %s91 = sphi 0, %s90
    %s107 = sphi 0, %s91
  $region4: #{feature_extractor.8} parent=0 // loop_header_branch
    %12 = sbr.rel (%p10) target = $region8
  $region5: #{feature_extractor.8} parent=0 // loop_body
    %s14 = ssub.s32 %s9, 1
    %s15 = ssub.s32 %s9, 2
    %s16 = sadd.s32 %s9, 1
    %s17 = ssub.s32 %s9, %s16
    %p18 = scmp.eq.s32.totalorder %s17, 0
    %s20 = sadd.s32 %s19, 1
    %s21 = scalar_select %p18, %s19, %s20
    %p24 = pneg %p18
    %p25 = scmp.eq.s32.totalorder %s9, 1
    %p26 = por %p24, %p25
    %p27 = scmp.ne.s32.totalorder %s19, %s22
    %p28 = scmp.eq.s32.totalorder %s9, 0
    %p29 = por %p27, %p28
    %p30 = scmp.ne.s32.totalorder %s19, %s22
    %p31 = scmp.eq.s32.totalorder %s14, 1
    %p32 = por %p30, %p31
    %p33 = scmp.ne.s32.totalorder %s22, %s23
    %p34 = scmp.eq.s32.totalorder %s14, 0
    %p35 = por %p33, %p34
    %p36 = scmp.ne.s32.totalorder %s22, %s23
    %p37 = scmp.eq.s32.totalorder %s15, 1
    %p38 = por %p36, %p37
    %p40 = scmp.ne.s32.totalorder %s23, %s39
    %p41 = scmp.eq.s32.totalorder %s15, 0
    %p42 = por %p40, %p41
    %s44 = sadd.s32 %s43, 1
    %p47 = scmp.eq.s32.totalorder %s9, 1
    %p48 = scmp.ne.s32.totalorder %s43, %s45
    %p49 = scmp.eq.s32.totalorder %s9, 0
    %p50 = por %p48, %p49
    %p51 = scmp.ne.s32.totalorder %s43, %s45
    %p52 = scmp.eq.s32.totalorder %s14, 1
    %p53 = por %p51, %p52
    %p54 = scmp.ne.s32.totalorder %s45, %s46
    %p55 = scmp.eq.s32.totalorder %s14, 0
    %p56 = por %p54, %p55
    %p57 = scmp.ne.s32.totalorder %s45, %s46
    %p58 = scmp.eq.s32.totalorder %s15, 1
    %p59 = por %p57, %p58
    %p61 = scmp.ne.s32.totalorder %s46, %s60
    %p62 = scmp.eq.s32.totalorder %s15, 0
    %p63 = por %p61, %p62
    %s65 = sadd.s32 %s64, 1
    %p68 = scmp.eq.s32.totalorder %s9, 1
    %p69 = scmp.ne.s32.totalorder %s64, %s66
    %p70 = scmp.eq.s32.totalorder %s9, 0
    %p71 = por %p69, %p70
    %p72 = scmp.ne.s32.totalorder %s64, %s66
    %p73 = scmp.eq.s32.totalorder %s14, 1
    %p74 = por %p72, %p73
    %p75 = scmp.ne.s32.totalorder %s66, %s67
    %p76 = scmp.eq.s32.totalorder %s14, 0
    %p77 = por %p75, %p76
    %p78 = scmp.ne.s32.totalorder %s66, %s67
    %p79 = scmp.eq.s32.totalorder %s15, 1
    %p80 = por %p78, %p79
    %p82 = scmp.ne.s32.totalorder %s67, %s81
    %p83 = scmp.eq.s32.totalorder %s15, 0
    %p84 = por %p82, %p83
    %s85 = ssub.s32 %s9, %s16
    %p86 = scmp.eq.s32.totalorder %s85, 0
    %s88 = sadd.s32 %s87, 1
    %s89 = scalar_select %p86, %s87, %s88
    %p92 = pneg %p86
    %p93 = scmp.eq.s32.totalorder %s9, 1
    %p94 = por %p92, %p93
    %p95 = scmp.ne.s32.totalorder %s87, %s90
    %p96 = scmp.eq.s32.totalorder %s9, 0
    %p97 = por %p95, %p96
    %p98 = scmp.ne.s32.totalorder %s87, %s90
    %p99 = scmp.eq.s32.totalorder %s14, 1
    %p100 = por %p98, %p99
    %p101 = scmp.ne.s32.totalorder %s90, %s91
    %p102 = scmp.eq.s32.totalorder %s14, 0
    %p103 = por %p101, %p102
    %p104 = scmp.ne.s32.totalorder %s90, %s91
    %p105 = scmp.eq.s32.totalorder %s15, 1
    %p106 = por %p104, %p105
    %p108 = scmp.ne.s32.totalorder %s91, %s107
    %p109 = scmp.eq.s32.totalorder %s15, 0
    %p110 = por %p108, %p109
    %p111 = scmp.le.s32.totalorder 1, %s9
    %p112 = scmp.lt.s32.totalorder %s9, 3
    %p113 = pnand %p111, %p112
    %p114 = pneg %p113
    // Predicated region
    $region9: #{feature_extractor.8} parent=5 // pred_check
      _
    $region10: #{feature_extractor.8} parent=5 // pred_check_branch
      %116 = sbr.rel (%p113) target = $region12
    $region11: #{feature_extractor.8} parent=5 // pred_region
      %s117 = ssub.s32 %s9, 1
      // Predicated region
      $region13: #{feature_extractor.8} parent=11 // pred_check
        %p118 = pneg %p56
      $region14: #{feature_extractor.8} parent=11 // pred_check_branch
        %120 = sbr.rel (%p118) target = $region16
      $region15: #{feature_extractor.8} parent=11 // pred_region
        _
      $region16: #{feature_extractor.8} parent=11 // pred_fallthru
        _
      // Predicated region
      $region17: #{feature_extractor.8} parent=11 // pred_check
        %p121 = pneg %p77
      $region18: #{feature_extractor.8} parent=11 // pred_check_branch
        %123 = sbr.rel (%p121) target = $region20
      $region19: #{feature_extractor.8} parent=11 // pred_region
        _
      $region20: #{feature_extractor.8} parent=11 // pred_fallthru
        _
    $region12: #{feature_extractor.8} parent=5 // pred_fallthru
      _
    %p124 = scmp.lt.s32.totalorder %s9, 2
    // Predicated region
    $region21: #{feature_extractor.8} parent=5 // pred_check
      %p125 = pneg %p124
    $region22: #{feature_extractor.8} parent=5 // pred_check_branch
      %127 = sbr.rel (%p125) target = $region24
    $region23: #{feature_extractor.8} parent=5 // pred_region
      // Predicated region
      $region25: #{feature_extractor.8} parent=23 // pred_check
        %p128 = pneg %p29
      $region26: #{feature_extractor.8} parent=23 // pred_check_branch
        %130 = sbr.rel (%p128) target = $region28
      $region27: #{feature_extractor.8} parent=23 // pred_region
        %s131 = smul.u32 57, %s9
        %p132 = scmp.lt.s32.totalorder %s131, 113
        %s133 = scalar_select %p132, %s131, 113
        %s134 = smul.addr %s133, 4
        %s135 = scalar_lea.vmem %s0, %s134
        %s136 = smul.u32 57, %s9
      $region28: #{feature_extractor.8} parent=23 // pred_fallthru
        _
    $region24: #{feature_extractor.8} parent=5 // pred_fallthru
      _
    %p137 = scmp.le.s32.totalorder 1, %s9
    %p138 = scmp.lt.s32.totalorder %s9, 3
    %p139 = pnand %p137, %p138
    %p140 = pneg %p139
    // Predicated region
    $region29: #{feature_extractor.8} parent=5 // pred_check
      _
    $region30: #{feature_extractor.8} parent=5 // pred_check_branch
      %142 = sbr.rel (%p139) target = $region32
    $region31: #{feature_extractor.8} parent=5 // pred_region
      %s143 = ssub.s32 %s9, 1
      %s144 = smul.u32 57, %s14
      %p145 = scmp.lt.s32.totalorder %s144, 113
      %s146 = scalar_select %p145, %s144, 113
      %s147 = smul.addr %s146, 4
      %s148 = scalar_lea.vmem %s0, %s147
      %p149 = pneg %p35
      %p150 = pneg %p32
      %p151 = pneg %p56
      %p152 = pneg %p53
      %p153 = pneg %p77
      %p154 = pneg %p74
      %p155 = pneg %p103
      %p156 = pneg %p100
      %s157 = smul.u32 57, %s14
      %p158 = scmp.lt.s32.totalorder %s157, 113
      %s159 = scalar_select %p158, %s157, 113
      %s160 = smul.addr %s159, 4
      %s161 = scalar_lea.vmem %s3, %s160
      %s162 = smul.u32 57, %s14
      %p163 = scmp.lt.s32.totalorder %s162, 113
      %s164 = scalar_select %p163, %s162, 113
      %s165 = smul.addr %s164, 4
      %s166 = scalar_lea.vmem %s0, %s165
      %s167 = smul.u32 57, %s14
      %s168 = smul.u32 57, %s14
      %p169 = scmp.lt.s32.totalorder %s168, 113
      %s170 = scalar_select %p169, %s168, 113
      %s171 = smul.addr %s170, 4
      %s172 = scalar_lea.vmem %s3, %s171
      %s173 = smul.u32 57, %s14
      %v175 = vld [vmem:[%s166] sm:$0xf]
      %v176 = vld [vmem:[%s166 + $0x4] sm:$0xf]
      %v177 = vld [vmem:[%s166 + $0x8] sm:$0xf]
      %v178 = vld [vmem:[%s166 + $0xc] sm:$0xf]
      %v179 = vld [vmem:[%s166 + $0x10] sm:$0xf]
      %v180 = vld [vmem:[%s166 + $0x14] sm:$0xf]
      %v181 = vld [vmem:[%s166 + $0x18] sm:$0xf]
      %v182 = vld [vmem:[%s166 + $0x1c] sm:$0xf]
      %v183 = vld [vmem:[%s166 + $0x20] sm:$0xf]
      %v184 = vld [vmem:[%s166 + $0x24] sm:$0xf]
      %v185 = vld [vmem:[%s166 + $0x28] sm:$0xf]
      %v186 = vld [vmem:[%s166 + $0x2c] sm:$0xf]
      %v187 = vld [vmem:[%s166 + $0x30] sm:$0xf]
      %v188 = vld [vmem:[%s166 + $0x34] sm:$0xf]
      %v189 = vld [vmem:[%s166 + $0x38] sm:$0xf]
      %v190 = vld [vmem:[%s166 + $0x3c] sm:$0xf]
      %v191 = vld [vmem:[%s166 + $0x40] sm:$0xf]
      %v192 = vld [vmem:[%s166 + $0x44] sm:$0xf]
      %v193 = vld [vmem:[%s166 + $0x48] sm:$0xf]
      %v194 = vld [vmem:[%s166 + $0x4c] sm:$0xf]
      %v195 = vld [vmem:[%s166 + $0x50] sm:$0xf]
      %v196 = vld [vmem:[%s166 + $0x54] sm:$0xf]
      %v197 = vld [vmem:[%s166 + $0x58] sm:$0xf]
      %v198 = vld [vmem:[%s166 + $0x5c] sm:$0xf]
      %v199 = vld [vmem:[%s166 + $0x60] sm:$0xf]
      %v200 = vld [vmem:[%s166 + $0x64] sm:$0xf]
      %v201 = vld [vmem:[%s166 + $0x68] sm:$0xf]
      %v202 = vld [vmem:[%s166 + $0x6c] sm:$0xf]
      %v203 = vld [vmem:[%s166 + $0x70] sm:$0xf]
      %v204 = vld [vmem:[%s166 + $0x74] sm:$0xf]
      %v205 = vld [vmem:[%s166 + $0x78] sm:$0xf]
      %v206 = vld [vmem:[%s166 + $0x7c] sm:$0xf]
      %v207 = vld [vmem:[%s166 + $0x80] sm:$0xf]
      %v208 = vld [vmem:[%s166 + $0x84] sm:$0xf]
      %v209 = vld [vmem:[%s166 + $0x88] sm:$0xf]
      %v210 = vld [vmem:[%s166 + $0x8c] sm:$0xf]
      %v211 = vld [vmem:[%s166 + $0x90] sm:$0xf]
      %v212 = vld [vmem:[%s166 + $0x94] sm:$0xf]
      %v213 = vld [vmem:[%s166 + $0x98] sm:$0xf]
      %v214 = vld [vmem:[%s166 + $0x9c] sm:$0xf]
      %v215 = vld [vmem:[%s166 + $0xa0] sm:$0xf]
      %v216 = vld [vmem:[%s166 + $0xa4] sm:$0xf]
      %v217 = vld [vmem:[%s166 + $0xa8] sm:$0xf]
      %v218 = vld [vmem:[%s166 + $0xac] sm:$0xf]
      %v219 = vld [vmem:[%s166 + $0xb0] sm:$0xf]
      %v220 = vld [vmem:[%s166 + $0xb4] sm:$0xf]
      %v221 = vld [vmem:[%s166 + $0xb8] sm:$0xf]
      %v222 = vld [vmem:[%s166 + $0xbc] sm:$0xf]
      %v223 = vld [vmem:[%s166 + $0xc0] sm:$0xf]
      %v224 = vld [vmem:[%s166 + $0xc4] sm:$0xf]
      %v225 = vld [vmem:[%s166 + $0xc8] sm:$0xf]
      %v226 = vld [vmem:[%s166 + $0xcc] sm:$0xf]
      %v227 = vld [vmem:[%s166 + $0xd0] sm:$0xf]
      %v228 = vld [vmem:[%s166 + $0xd4] sm:$0xf]
      %v229 = vld [vmem:[%s166 + $0xd8] sm:$0xf]
      %v230 = vld [vmem:[%s166 + $0xdc] sm:$0xf]
      %v231 = vld [vmem:[%s166 + $0xe0] sm:$0xf]
      %v232 = vld [vmem:[%s1] sm:$0xf]
      %v233 = vld [vmem:[%s1 + $0x4] sm:$0xf]
      %v234 = vld [vmem:[%s1 + $0x8] sm:$0xf]
      %v235 = vld [vmem:[%s1 + $0xc] sm:$0xf]
      %v236 = vld [vmem:[%s1 + $0x10] sm:$0xf]
      %v237 = vld [vmem:[%s1 + $0x14] sm:$0xf]
      %v238 = vld [vmem:[%s1 + $0x18] sm:$0xf]
      %v239 = vld [vmem:[%s1 + $0x1c] sm:$0xf]
      %v240 = vld [vmem:[%s1 + $0x20] sm:$0xf]
      %v241 = vld [vmem:[%s1 + $0x24] sm:$0xf]
      %v242 = vld [vmem:[%s1 + $0x28] sm:$0xf]
      %v243 = vld [vmem:[%s1 + $0x2c] sm:$0xf]
      %v244 = vld [vmem:[%s1 + $0x30] sm:$0xf]
      %v245 = vld [vmem:[%s1 + $0x34] sm:$0xf]
      %v246 = vld [vmem:[%s1 + $0x38] sm:$0xf]
      %v247 = vld [vmem:[%s1 + $0x3c] sm:$0xf]
      %v248 = vld [vmem:[%s2] sm:$0x1]
      %v250 = vlaneseq
      %v251 = vshrl.u32 %v250, 7
      %v252 = vsub.s32 0, %v251
      %v253 = vrot.slane %v248, %v252
      %v312 = vunpack.c.l.b16 %v175
      %v313 = vunpack.c.l.b16 %v176
      %v314 = vunpack.c.l.b16 %v177
      %v315 = vunpack.c.l.b16 %v178
      %v316 = vunpack.c.l.b16 %v179
      %v317 = vunpack.c.l.b16 %v180
      %v318 = vunpack.c.l.b16 %v181
      %v319 = vunpack.c.l.b16 %v182
      %v320 = vunpack.c.l.b16 %v183
      %v321 = vunpack.c.l.b16 %v184
      %v322 = vunpack.c.l.b16 %v185
      %v323 = vunpack.c.l.b16 %v186
      %v324 = vunpack.c.l.b16 %v187
      %v325 = vunpack.c.l.b16 %v188
      %v326 = vunpack.c.l.b16 %v189
      %v327 = vunpack.c.l.b16 %v190
      %v328 = vunpack.c.l.b16 %v191
      %v329 = vunpack.c.l.b16 %v192
      %v330 = vunpack.c.l.b16 %v193
      %v331 = vunpack.c.l.b16 %v194
      %v332 = vunpack.c.l.b16 %v195
      %v333 = vunpack.c.l.b16 %v196
      %v334 = vunpack.c.l.b16 %v197
      %v335 = vunpack.c.l.b16 %v198
      %v336 = vunpack.c.l.b16 %v199
      %v337 = vunpack.c.l.b16 %v200
      %v338 = vunpack.c.l.b16 %v201
      %v339 = vunpack.c.l.b16 %v202
      %v340 = vunpack.c.l.b16 %v203
      %v341 = vunpack.c.l.b16 %v204
      %v342 = vunpack.c.l.b16 %v205
      %v343 = vunpack.c.l.b16 %v206
      %v344 = vunpack.c.l.b16 %v207
      %v345 = vunpack.c.l.b16 %v208
      %v346 = vunpack.c.l.b16 %v209
      %v347 = vunpack.c.l.b16 %v210
      %v348 = vunpack.c.l.b16 %v211
      %v349 = vunpack.c.l.b16 %v212
      %v350 = vunpack.c.l.b16 %v213
      %v351 = vunpack.c.l.b16 %v214
      %v352 = vunpack.c.l.b16 %v215
      %v353 = vunpack.c.l.b16 %v216
      %v354 = vunpack.c.l.b16 %v217
      %v355 = vunpack.c.l.b16 %v218
      %v356 = vunpack.c.l.b16 %v219
      %v357 = vunpack.c.l.b16 %v220
      %v358 = vunpack.c.l.b16 %v221
      %v359 = vunpack.c.l.b16 %v222
      %v360 = vunpack.c.l.b16 %v223
      %v361 = vunpack.c.l.b16 %v224
      %v362 = vunpack.c.l.b16 %v225
      %v363 = vunpack.c.l.b16 %v226
      %v364 = vunpack.c.l.b16 %v227
      %v365 = vunpack.c.l.b16 %v228
      %v366 = vunpack.c.l.b16 %v229
      %v367 = vunpack.c.l.b16 %v230
      %v368 = vunpack.c.l.b16 %v231
      %v369 = vpack.c.b16 %v313, %v312
      %v370 = vpack.c.b16 %v315, %v314
      %v371 = vpack.c.b16 %v317, %v316
      %v372 = vpack.c.b16 %v319, %v318
      %v373 = vpack.c.b16 %v321, %v320
      %v374 = vpack.c.b16 %v323, %v322
      %v375 = vpack.c.b16 %v325, %v324
      %v376 = vpack.c.b16 %v327, %v326
      %v377 = vpack.c.b16 %v329, %v328
      %v378 = vpack.c.b16 %v331, %v330
      %v379 = vpack.c.b16 %v333, %v332
      %v380 = vpack.c.b16 %v335, %v334
      %v381 = vpack.c.b16 %v337, %v336
      %v382 = vpack.c.b16 %v339, %v338
      %v383 = vpack.c.b16 %v341, %v340
      %v384 = vpack.c.b16 %v343, %v342
      %v385 = vpack.c.b16 %v345, %v344
      %v386 = vpack.c.b16 %v347, %v346
      %v387 = vpack.c.b16 %v349, %v348
      %v388 = vpack.c.b16 %v351, %v350
      %v389 = vpack.c.b16 %v353, %v352
      %v390 = vpack.c.b16 %v355, %v354
      %v391 = vpack.c.b16 %v357, %v356
      %v392 = vpack.c.b16 %v359, %v358
      %v393 = vpack.c.b16 %v361, %v360
      %v394 = vpack.c.b16 %v363, %v362
      %v395 = vpack.c.b16 %v365, %v364
      %v396 = vpack.c.b16 %v367, %v366
      %v397 = vpack.c.b16 %v368, %v368
      %v443 = vunpack.c.l.b16 %v232
      %v444 = vunpack.c.l.b16 %v233
      %v445 = vunpack.c.l.b16 %v234
      %v446 = vunpack.c.l.b16 %v235
      %v447 = vunpack.c.l.b16 %v236
      %v448 = vunpack.c.l.b16 %v237
      %v449 = vunpack.c.l.b16 %v238
      %v450 = vunpack.c.l.b16 %v239
      %v451 = vunpack.c.l.b16 %v240
      %v452 = vunpack.c.l.b16 %v241
      %v453 = vunpack.c.l.b16 %v242
      %v454 = vunpack.c.l.b16 %v243
      %v455 = vunpack.c.l.b16 %v244
      %v456 = vunpack.c.l.b16 %v245
      %v457 = vunpack.c.l.b16 %v246
      %v458 = vunpack.c.l.b16 %v247
      %v459 = vpack.c.b16 %v444, %v443
      %v460 = vpack.c.b16 %v446, %v445
      %v461 = vpack.c.b16 %v448, %v447
      %v462 = vpack.c.b16 %v450, %v449
      %v463 = vpack.c.b16 %v452, %v451
      %v464 = vpack.c.b16 %v454, %v453
      %v465 = vpack.c.b16 %v456, %v455
      %v466 = vpack.c.b16 %v458, %v457
      %475 = vmatprep.subr.bf16.mxu0 0
      %476 = vmatpush1.bf16.msra.mxu0 %v466
      %477 = vmatprep.subr.bf16.mxu0 0
      %478 = vmatpush1.bf16.msra.mxu0 %v465
      %479 = vmatprep.subr.bf16.mxu0 0
      %480 = vmatpush1.bf16.msra.mxu0 %v464
      %481 = vmatprep.subr.bf16.mxu0 0
      %482 = vmatpush1.bf16.msra.mxu0 %v463
      %483 = vmatprep.subr.bf16.mxu0 0
      %484 = vmatpush1.bf16.msra.mxu0 %v462
      %485 = vmatprep.subr.bf16.mxu0 0
      %486 = vmatpush1.bf16.msra.mxu0 %v461
      %487 = vmatprep.subr.bf16.mxu0 0
      %488 = vmatpush1.bf16.msra.mxu0 %v460
      %489 = vmatprep.subr.bf16.mxu0 0
      %490 = vmatpush1.bf16.msra.mxu0 %v459
      %491 = vmatprep.subr.bf16.mxu0 0
      %492 = vmatpush2.bf16.msra.mxu0 0
      %493 = vmatprep.subr.bf16.mxu0 0
      %494 = vmatpush2.bf16.msra.mxu0 0
      %495 = vmatprep.subr.bf16.mxu0 0
      %496 = vmatpush2.bf16.msra.mxu0 0
      %497 = vmatprep.subr.bf16.mxu0 0
      %498 = vmatpush2.bf16.msra.mxu0 0
      %499 = vmatprep.subr.bf16.mxu0 0
      %500 = vmatpush2.bf16.msra.mxu0 0
      %501 = vmatprep.subr.bf16.mxu0 0
      %502 = vmatpush2.bf16.msra.mxu0 0
      %503 = vmatprep.subr.bf16.mxu0 0
      %504 = vmatpush2.bf16.msra.mxu0 0
      %505 = vmatprep.subr.bf16.mxu0 0
      %506 = vmatpush2.bf16.msra.mxu0 0
      %507 = vmatprep.mubr.bf16.mxu0 0
      %508 = vmatmul.mubr.bf16.gmra.mxu0 %v369
      %v509 = vpop.f32.mrf.mxu0
      %v510 = vadd.f32 %v253, %v509
      %v511 = vpop.f32.mrf.mxu0
      %v512 = vpop.f32.mrf.mxu0
      %v513 = vadd.f32 %v253, %v512
      %v514 = vpop.f32.mrf.mxu0
      %515 = vmatprep.mubr.bf16.mxu0 0
      %516 = vmatmul.mubr.bf16.gmra.mxu0 %v370
      %v517 = vpop.f32.mrf.mxu0
      %v518 = vadd.f32 %v253, %v517
      %v519 = vpop.f32.mrf.mxu0
      %v520 = vpop.f32.mrf.mxu0
      %v521 = vadd.f32 %v253, %v520
      %v522 = vpop.f32.mrf.mxu0
      %523 = vmatprep.mubr.bf16.mxu0 0
      %524 = vmatmul.mubr.bf16.gmra.mxu0 %v371
      %v525 = vpop.f32.mrf.mxu0
      %v526 = vadd.f32 %v253, %v525
      %v527 = vpop.f32.mrf.mxu0
      %v528 = vpop.f32.mrf.mxu0
      %v529 = vadd.f32 %v253, %v528
      %v530 = vpop.f32.mrf.mxu0
      %531 = vmatprep.mubr.bf16.mxu0 0
      %532 = vmatmul.mubr.bf16.gmra.mxu0 %v372
      %v533 = vpop.f32.mrf.mxu0
      %v534 = vadd.f32 %v253, %v533
      %v535 = vpop.f32.mrf.mxu0
      %v536 = vpop.f32.mrf.mxu0
      %v537 = vadd.f32 %v253, %v536
      %v538 = vpop.f32.mrf.mxu0
      %539 = vmatprep.mubr.bf16.mxu0 0
      %540 = vmatmul.mubr.bf16.gmra.mxu0 %v373
      %v541 = vpop.f32.mrf.mxu0
      %v542 = vadd.f32 %v253, %v541
      %v543 = vpop.f32.mrf.mxu0
      %v544 = vpop.f32.mrf.mxu0
      %v545 = vadd.f32 %v253, %v544
      %v546 = vpop.f32.mrf.mxu0
      %547 = vmatprep.mubr.bf16.mxu0 0
      %548 = vmatmul.mubr.bf16.gmra.mxu0 %v374
      %v549 = vpop.f32.mrf.mxu0
      %v550 = vadd.f32 %v253, %v549
      %v551 = vpop.f32.mrf.mxu0
      %v552 = vpop.f32.mrf.mxu0
      %v553 = vadd.f32 %v253, %v552
      %v554 = vpop.f32.mrf.mxu0
      %555 = vmatprep.mubr.bf16.mxu0 0
      %556 = vmatmul.mubr.bf16.gmra.mxu0 %v375
      %v557 = vpop.f32.mrf.mxu0
      %v558 = vadd.f32 %v253, %v557
      %v559 = vpop.f32.mrf.mxu0
      %v560 = vpop.f32.mrf.mxu0
      %v561 = vadd.f32 %v253, %v560
      %v562 = vpop.f32.mrf.mxu0
      %563 = vmatprep.mubr.bf16.mxu0 0
      %564 = vmatmul.mubr.bf16.gmra.mxu0 %v376
      %v565 = vpop.f32.mrf.mxu0
      %v566 = vadd.f32 %v253, %v565
      %v567 = vpop.f32.mrf.mxu0
      %v568 = vpop.f32.mrf.mxu0
      %v569 = vadd.f32 %v253, %v568
      %v570 = vpop.f32.mrf.mxu0
      %571 = vmatprep.mubr.bf16.mxu0 0
      %572 = vmatmul.mubr.bf16.gmra.mxu0 %v377
      %v573 = vpop.f32.mrf.mxu0
      %v574 = vadd.f32 %v253, %v573
      %v575 = vpop.f32.mrf.mxu0
      %v576 = vpop.f32.mrf.mxu0
      %v577 = vadd.f32 %v253, %v576
      %v578 = vpop.f32.mrf.mxu0
      %579 = vmatprep.mubr.bf16.mxu0 0
      %580 = vmatmul.mubr.bf16.gmra.mxu0 %v378
      %v581 = vpop.f32.mrf.mxu0
      %v582 = vadd.f32 %v253, %v581
      %v583 = vpop.f32.mrf.mxu0
      %v584 = vpop.f32.mrf.mxu0
      %v585 = vadd.f32 %v253, %v584
      %v586 = vpop.f32.mrf.mxu0
      %587 = vmatprep.mubr.bf16.mxu0 0
      %588 = vmatmul.mubr.bf16.gmra.mxu0 %v379
      %v589 = vpop.f32.mrf.mxu0
      %v590 = vadd.f32 %v253, %v589
      %v591 = vpop.f32.mrf.mxu0
      %v592 = vpop.f32.mrf.mxu0
      %v593 = vadd.f32 %v253, %v592
      %v594 = vpop.f32.mrf.mxu0
      %595 = vmatprep.mubr.bf16.mxu0 0
      %596 = vmatmul.mubr.bf16.gmra.mxu0 %v380
      %v597 = vpop.f32.mrf.mxu0
      %v598 = vadd.f32 %v253, %v597
      %v599 = vpop.f32.mrf.mxu0
      %v600 = vpop.f32.mrf.mxu0
      %v601 = vadd.f32 %v253, %v600
      %v602 = vpop.f32.mrf.mxu0
      %603 = vmatprep.mubr.bf16.mxu0 0
      %604 = vmatmul.mubr.bf16.gmra.mxu0 %v381
      %v605 = vpop.f32.mrf.mxu0
      %v606 = vadd.f32 %v253, %v605
      %v607 = vpop.f32.mrf.mxu0
      %v608 = vpop.f32.mrf.mxu0
      %v609 = vadd.f32 %v253, %v608
      %v610 = vpop.f32.mrf.mxu0
      %611 = vmatprep.mubr.bf16.mxu0 0
      %612 = vmatmul.mubr.bf16.gmra.mxu0 %v382
      %v613 = vpop.f32.mrf.mxu0
      %v614 = vadd.f32 %v253, %v613
      %v615 = vpop.f32.mrf.mxu0
      %v616 = vpop.f32.mrf.mxu0
      %v617 = vadd.f32 %v253, %v616
      %v618 = vpop.f32.mrf.mxu0
      %619 = vmatprep.mubr.bf16.mxu0 0
      %620 = vmatmul.mubr.bf16.gmra.mxu0 %v383
      %v621 = vpop.f32.mrf.mxu0
      %v622 = vadd.f32 %v253, %v621
      %v623 = vpop.f32.mrf.mxu0
      %v624 = vpop.f32.mrf.mxu0
      %v625 = vadd.f32 %v253, %v624
      %v626 = vpop.f32.mrf.mxu0
      %627 = vmatprep.mubr.bf16.mxu0 0
      %628 = vmatmul.mubr.bf16.gmra.mxu0 %v384
      %v629 = vpop.f32.mrf.mxu0
      %v630 = vadd.f32 %v253, %v629
      %v631 = vpop.f32.mrf.mxu0
      %v632 = vpop.f32.mrf.mxu0
      %v633 = vadd.f32 %v253, %v632
      %v634 = vpop.f32.mrf.mxu0
      %635 = vmatprep.mubr.bf16.mxu0 0
      %636 = vmatmul.mubr.bf16.gmra.mxu0 %v385
      %v637 = vpop.f32.mrf.mxu0
      %v638 = vadd.f32 %v253, %v637
      %v639 = vpop.f32.mrf.mxu0
      %v640 = vpop.f32.mrf.mxu0
      %v641 = vadd.f32 %v253, %v640
      %v642 = vpop.f32.mrf.mxu0
      %643 = vmatprep.mubr.bf16.mxu0 0
      %644 = vmatmul.mubr.bf16.gmra.mxu0 %v386
      %v645 = vpop.f32.mrf.mxu0
      %v646 = vadd.f32 %v253, %v645
      %v647 = vpop.f32.mrf.mxu0
      %v648 = vpop.f32.mrf.mxu0
      %v649 = vadd.f32 %v253, %v648
      %v650 = vpop.f32.mrf.mxu0
      %651 = vmatprep.mubr.bf16.mxu0 0
      %652 = vmatmul.mubr.bf16.gmra.mxu0 %v387
      %v653 = vpop.f32.mrf.mxu0
      %v654 = vadd.f32 %v253, %v653
      %v655 = vpop.f32.mrf.mxu0
      %v656 = vpop.f32.mrf.mxu0
      %v657 = vadd.f32 %v253, %v656
      %v658 = vpop.f32.mrf.mxu0
      %659 = vmatprep.mubr.bf16.mxu0 0
      %660 = vmatmul.mubr.bf16.gmra.mxu0 %v388
      %v661 = vpop.f32.mrf.mxu0
      %v662 = vadd.f32 %v253, %v661
      %v663 = vpop.f32.mrf.mxu0
      %v664 = vpop.f32.mrf.mxu0
      %v665 = vadd.f32 %v253, %v664
      %v666 = vpop.f32.mrf.mxu0
      %667 = vmatprep.mubr.bf16.mxu0 0
      %668 = vmatmul.mubr.bf16.gmra.mxu0 %v389
      %v669 = vpop.f32.mrf.mxu0
      %v670 = vadd.f32 %v253, %v669
      %v671 = vpop.f32.mrf.mxu0
      %v672 = vpop.f32.mrf.mxu0
      %v673 = vadd.f32 %v253, %v672
      %v674 = vpop.f32.mrf.mxu0
      %675 = vmatprep.mubr.bf16.mxu0 0
      %676 = vmatmul.mubr.bf16.gmra.mxu0 %v390
      %v677 = vpop.f32.mrf.mxu0
      %v678 = vadd.f32 %v253, %v677
      %v679 = vpop.f32.mrf.mxu0
      %v680 = vpop.f32.mrf.mxu0
      %v681 = vadd.f32 %v253, %v680
      %v682 = vpop.f32.mrf.mxu0
      %683 = vmatprep.mubr.bf16.mxu0 0
      %684 = vmatmul.mubr.bf16.gmra.mxu0 %v391
      %v685 = vpop.f32.mrf.mxu0
      %v686 = vadd.f32 %v253, %v685
      %v687 = vpop.f32.mrf.mxu0
      %v688 = vpop.f32.mrf.mxu0
      %v689 = vadd.f32 %v253, %v688
      %v690 = vpop.f32.mrf.mxu0
      %691 = vmatprep.mubr.bf16.mxu0 0
      %692 = vmatmul.mubr.bf16.gmra.mxu0 %v392
      %v693 = vpop.f32.mrf.mxu0
      %v694 = vadd.f32 %v253, %v693
      %v695 = vpop.f32.mrf.mxu0
      %v696 = vpop.f32.mrf.mxu0
      %v697 = vadd.f32 %v253, %v696
      %v698 = vpop.f32.mrf.mxu0
      %699 = vmatprep.mubr.bf16.mxu0 0
      %700 = vmatmul.mubr.bf16.gmra.mxu0 %v393
      %v701 = vpop.f32.mrf.mxu0
      %v702 = vadd.f32 %v253, %v701
      %v703 = vpop.f32.mrf.mxu0
      %v704 = vpop.f32.mrf.mxu0
      %v705 = vadd.f32 %v253, %v704
      %v706 = vpop.f32.mrf.mxu0
      %707 = vmatprep.mubr.bf16.mxu0 0
      %708 = vmatmul.mubr.bf16.gmra.mxu0 %v394
      %v709 = vpop.f32.mrf.mxu0
      %v710 = vadd.f32 %v253, %v709
      %v711 = vpop.f32.mrf.mxu0
      %v712 = vpop.f32.mrf.mxu0
      %v713 = vadd.f32 %v253, %v712
      %v714 = vpop.f32.mrf.mxu0
      %715 = vmatprep.mubr.bf16.mxu0 0
      %716 = vmatmul.mubr.bf16.gmra.mxu0 %v395
      %v717 = vpop.f32.mrf.mxu0
      %v718 = vadd.f32 %v253, %v717
      %v719 = vpop.f32.mrf.mxu0
      %v720 = vpop.f32.mrf.mxu0
      %v721 = vadd.f32 %v253, %v720
      %v722 = vpop.f32.mrf.mxu0
      %723 = vmatprep.mubr.bf16.mxu0 0
      %724 = vmatmul.mubr.bf16.gmra.mxu0 %v396
      %v725 = vpop.f32.mrf.mxu0
      %v726 = vadd.f32 %v253, %v725
      %v727 = vpop.f32.mrf.mxu0
      %v728 = vpop.f32.mrf.mxu0
      %v729 = vadd.f32 %v253, %v728
      %v730 = vpop.f32.mrf.mxu0
      %731 = vmatprep.mubr.bf16.mxu0 0
      %732 = vmatmul.mubr.bf16.gmra.mxu0 %v397
      %v733 = vpop.f32.mrf.mxu0
      %v734 = vadd.f32 %v253, %v733
      %v735 = vpop.f32.mrf.mxu0
      %v736 = vpop.f32.mrf.mxu0
      %v737 = vpop.f32.mrf.mxu0
      %738 = vdwg.mxu0
      %v739 = vmax.f32 %v510, 0.0
      %v740 = vmax.f32 %v513, 0.0
      %v741 = vmax.f32 %v518, 0.0
      %v742 = vmax.f32 %v521, 0.0
      %v743 = vmax.f32 %v526, 0.0
      %v744 = vmax.f32 %v529, 0.0
      %v745 = vmax.f32 %v534, 0.0
      %v746 = vmax.f32 %v537, 0.0
      %v747 = vmax.f32 %v542, 0.0
      %v748 = vmax.f32 %v545, 0.0
      %v749 = vmax.f32 %v550, 0.0
      %v750 = vmax.f32 %v553, 0.0
      %v751 = vmax.f32 %v558, 0.0
      %v752 = vmax.f32 %v561, 0.0
      %v753 = vmax.f32 %v566, 0.0
      %v754 = vmax.f32 %v569, 0.0
      %v755 = vmax.f32 %v574, 0.0
      %v756 = vmax.f32 %v577, 0.0
      %v757 = vmax.f32 %v582, 0.0
      %v758 = vmax.f32 %v585, 0.0
      %v759 = vmax.f32 %v590, 0.0
      %v760 = vmax.f32 %v593, 0.0
      %v761 = vmax.f32 %v598, 0.0
      %v762 = vmax.f32 %v601, 0.0
      %v763 = vmax.f32 %v606, 0.0
      %v764 = vmax.f32 %v609, 0.0
      %v765 = vmax.f32 %v614, 0.0
      %v766 = vmax.f32 %v617, 0.0
      %v767 = vmax.f32 %v622, 0.0
      %v768 = vmax.f32 %v625, 0.0
      %v769 = vmax.f32 %v630, 0.0
      %v770 = vmax.f32 %v633, 0.0
      %v771 = vmax.f32 %v638, 0.0
      %v772 = vmax.f32 %v641, 0.0
      %v773 = vmax.f32 %v646, 0.0
      %v774 = vmax.f32 %v649, 0.0
      %v775 = vmax.f32 %v654, 0.0
      %v776 = vmax.f32 %v657, 0.0
      %v777 = vmax.f32 %v662, 0.0
      %v778 = vmax.f32 %v665, 0.0
      %v779 = vmax.f32 %v670, 0.0
      %v780 = vmax.f32 %v673, 0.0
      %v781 = vmax.f32 %v678, 0.0
      %v782 = vmax.f32 %v681, 0.0
      %v783 = vmax.f32 %v686, 0.0
      %v784 = vmax.f32 %v689, 0.0
      %v785 = vmax.f32 %v694, 0.0
      %v786 = vmax.f32 %v697, 0.0
      %v787 = vmax.f32 %v702, 0.0
      %v788 = vmax.f32 %v705, 0.0
      %v789 = vmax.f32 %v710, 0.0
      %v790 = vmax.f32 %v713, 0.0
      %v791 = vmax.f32 %v718, 0.0
      %v792 = vmax.f32 %v721, 0.0
      %v793 = vmax.f32 %v726, 0.0
      %v794 = vmax.f32 %v729, 0.0
      %v795 = vmax.f32 %v734, 0.0
      %v796 = vpack.c.bf16 %v740, %v739
      %v797 = vpack.c.bf16 %v742, %v741
      %v798 = vpack.c.bf16 %v744, %v743
      %v799 = vpack.c.bf16 %v746, %v745
      %v800 = vpack.c.bf16 %v748, %v747
      %v801 = vpack.c.bf16 %v750, %v749
      %v802 = vpack.c.bf16 %v752, %v751
      %v803 = vpack.c.bf16 %v754, %v753
      %v804 = vpack.c.bf16 %v756, %v755
      %v805 = vpack.c.bf16 %v758, %v757
      %v806 = vpack.c.bf16 %v760, %v759
      %v807 = vpack.c.bf16 %v762, %v761
      %v808 = vpack.c.bf16 %v764, %v763
      %v809 = vpack.c.bf16 %v766, %v765
      %v810 = vpack.c.bf16 %v768, %v767
      %v811 = vpack.c.bf16 %v770, %v769
      %v812 = vpack.c.bf16 %v772, %v771
      %v813 = vpack.c.bf16 %v774, %v773
      %v814 = vpack.c.bf16 %v776, %v775
      %v815 = vpack.c.bf16 %v778, %v777
      %v816 = vpack.c.bf16 %v780, %v779
      %v817 = vpack.c.bf16 %v782, %v781
      %v818 = vpack.c.bf16 %v784, %v783
      %v819 = vpack.c.bf16 %v786, %v785
      %v820 = vpack.c.bf16 %v788, %v787
      %v821 = vpack.c.bf16 %v790, %v789
      %v822 = vpack.c.bf16 %v792, %v791
      %v823 = vpack.c.bf16 %v794, %v793
      %v824 = vpack.c.bf16 %v795, %v795
      %v854 = vunpack.c.l.b16 %v796
      %v855 = vunpack.c.h.b16 %v796
      %v856 = vunpack.c.l.b16 %v797
      %v857 = vunpack.c.h.b16 %v797
      %v858 = vunpack.c.l.b16 %v798
      %v859 = vunpack.c.h.b16 %v798
      %v860 = vunpack.c.l.b16 %v799
      %v861 = vunpack.c.h.b16 %v799
      %v862 = vunpack.c.l.b16 %v800
      %v863 = vunpack.c.h.b16 %v800
      %v864 = vunpack.c.l.b16 %v801
      %v865 = vunpack.c.h.b16 %v801
      %v866 = vunpack.c.l.b16 %v802
      %v867 = vunpack.c.h.b16 %v802
      %v868 = vunpack.c.l.b16 %v803
      %v869 = vunpack.c.h.b16 %v803
      %v870 = vunpack.c.l.b16 %v804
      %v871 = vunpack.c.h.b16 %v804
      %v872 = vunpack.c.l.b16 %v805
      %v873 = vunpack.c.h.b16 %v805
      %v874 = vunpack.c.l.b16 %v806
      %v875 = vunpack.c.h.b16 %v806
      %v876 = vunpack.c.l.b16 %v807
      %v877 = vunpack.c.h.b16 %v807
      %v878 = vunpack.c.l.b16 %v808
      %v879 = vunpack.c.h.b16 %v808
      %v880 = vunpack.c.l.b16 %v809
      %v881 = vunpack.c.h.b16 %v809
      %v882 = vunpack.c.l.b16 %v810
      %v883 = vunpack.c.h.b16 %v810
      %v884 = vunpack.c.l.b16 %v811
      %v885 = vunpack.c.h.b16 %v811
      %v886 = vunpack.c.l.b16 %v812
      %v887 = vunpack.c.h.b16 %v812
      %v888 = vunpack.c.l.b16 %v813
      %v889 = vunpack.c.h.b16 %v813
      %v890 = vunpack.c.l.b16 %v814
      %v891 = vunpack.c.h.b16 %v814
      %v892 = vunpack.c.l.b16 %v815
      %v893 = vunpack.c.h.b16 %v815
      %v894 = vunpack.c.l.b16 %v816
      %v895 = vunpack.c.h.b16 %v816
      %v896 = vunpack.c.l.b16 %v817
      %v897 = vunpack.c.h.b16 %v817
      %v898 = vunpack.c.l.b16 %v818
      %v899 = vunpack.c.h.b16 %v818
      %v900 = vunpack.c.l.b16 %v819
      %v901 = vunpack.c.h.b16 %v819
      %v902 = vunpack.c.l.b16 %v820
      %v903 = vunpack.c.h.b16 %v820
      %v904 = vunpack.c.l.b16 %v821
      %v905 = vunpack.c.h.b16 %v821
      %v906 = vunpack.c.l.b16 %v822
      %v907 = vunpack.c.h.b16 %v822
      %v908 = vunpack.c.l.b16 %v823
      %v909 = vunpack.c.h.b16 %v823
      %v910 = vunpack.c.l.b16 %v824
      %v911 = vpack.c.b16 %v854, %v854
      %v912 = vpack.c.b16 %v855, %v855
      %v913 = vpack.c.b16 %v856, %v856
      %v914 = vpack.c.b16 %v857, %v857
      %v915 = vpack.c.b16 %v858, %v858
      %v916 = vpack.c.b16 %v859, %v859
      %v917 = vpack.c.b16 %v860, %v860
      %v918 = vpack.c.b16 %v861, %v861
      %v919 = vpack.c.b16 %v862, %v862
      %v920 = vpack.c.b16 %v863, %v863
      %v921 = vpack.c.b16 %v864, %v864
      %v922 = vpack.c.b16 %v865, %v865
      %v923 = vpack.c.b16 %v866, %v866
      %v924 = vpack.c.b16 %v867, %v867
      %v925 = vpack.c.b16 %v868, %v868
      %v926 = vpack.c.b16 %v869, %v869
      %v927 = vpack.c.b16 %v870, %v870
      %v928 = vpack.c.b16 %v871, %v871
      %v929 = vpack.c.b16 %v872, %v872
      %v930 = vpack.c.b16 %v873, %v873
      %v931 = vpack.c.b16 %v874, %v874
      %v932 = vpack.c.b16 %v875, %v875
      %v933 = vpack.c.b16 %v876, %v876
      %v934 = vpack.c.b16 %v877, %v877
      %v935 = vpack.c.b16 %v878, %v878
      %v936 = vpack.c.b16 %v879, %v879
      %v937 = vpack.c.b16 %v880, %v880
      %v938 = vpack.c.b16 %v881, %v881
      %v939 = vpack.c.b16 %v882, %v882
      %v940 = vpack.c.b16 %v883, %v883
      %v941 = vpack.c.b16 %v884, %v884
      %v942 = vpack.c.b16 %v885, %v885
      %v943 = vpack.c.b16 %v886, %v886
      %v944 = vpack.c.b16 %v887, %v887
      %v945 = vpack.c.b16 %v888, %v888
      %v946 = vpack.c.b16 %v889, %v889
      %v947 = vpack.c.b16 %v890, %v890
      %v948 = vpack.c.b16 %v891, %v891
      %v949 = vpack.c.b16 %v892, %v892
      %v950 = vpack.c.b16 %v893, %v893
      %v951 = vpack.c.b16 %v894, %v894
      %v952 = vpack.c.b16 %v895, %v895
      %v953 = vpack.c.b16 %v896, %v896
      %v954 = vpack.c.b16 %v897, %v897
      %v955 = vpack.c.b16 %v898, %v898
      %v956 = vpack.c.b16 %v899, %v899
      %v957 = vpack.c.b16 %v900, %v900
      %v958 = vpack.c.b16 %v901, %v901
      %v959 = vpack.c.b16 %v902, %v902
      %v960 = vpack.c.b16 %v903, %v903
      %v961 = vpack.c.b16 %v904, %v904
      %v962 = vpack.c.b16 %v905, %v905
      %v963 = vpack.c.b16 %v906, %v906
      %v964 = vpack.c.b16 %v907, %v907
      %v965 = vpack.c.b16 %v908, %v908
      %v966 = vpack.c.b16 %v909, %v909
      %v967 = vpack.c.b16 %v910, %v910
      %1025 = vst [vmem:[%s172] sm:$0xf] %v911
      %1026 = vst [vmem:[%s172 + $0x4] sm:$0xf] %v912
      %1027 = vst [vmem:[%s172 + $0x8] sm:$0xf] %v913
      %1028 = vst [vmem:[%s172 + $0xc] sm:$0xf] %v914
      %1029 = vst [vmem:[%s172 + $0x10] sm:$0xf] %v915
      %1030 = vst [vmem:[%s172 + $0x14] sm:$0xf] %v916
      %1031 = vst [vmem:[%s172 + $0x18] sm:$0xf] %v917
      %1032 = vst [vmem:[%s172 + $0x1c] sm:$0xf] %v918
      %1033 = vst [vmem:[%s172 + $0x20] sm:$0xf] %v919
      %1034 = vst [vmem:[%s172 + $0x24] sm:$0xf] %v920
      %1035 = vst [vmem:[%s172 + $0x28] sm:$0xf] %v921
      %1036 = vst [vmem:[%s172 + $0x2c] sm:$0xf] %v922
      %1037 = vst [vmem:[%s172 + $0x30] sm:$0xf] %v923
      %1038 = vst [vmem:[%s172 + $0x34] sm:$0xf] %v924
      %1039 = vst [vmem:[%s172 + $0x38] sm:$0xf] %v925
      %1040 = vst [vmem:[%s172 + $0x3c] sm:$0xf] %v926
      %1041 = vst [vmem:[%s172 + $0x40] sm:$0xf] %v927
      %1042 = vst [vmem:[%s172 + $0x44] sm:$0xf] %v928
      %1043 = vst [vmem:[%s172 + $0x48] sm:$0xf] %v929
      %1044 = vst [vmem:[%s172 + $0x4c] sm:$0xf] %v930
      %1045 = vst [vmem:[%s172 + $0x50] sm:$0xf] %v931
      %1046 = vst [vmem:[%s172 + $0x54] sm:$0xf] %v932
      %1047 = vst [vmem:[%s172 + $0x58] sm:$0xf] %v933
      %1048 = vst [vmem:[%s172 + $0x5c] sm:$0xf] %v934
      %1049 = vst [vmem:[%s172 + $0x60] sm:$0xf] %v935
      %1050 = vst [vmem:[%s172 + $0x64] sm:$0xf] %v936
      %1051 = vst [vmem:[%s172 + $0x68] sm:$0xf] %v937
      %1052 = vst [vmem:[%s172 + $0x6c] sm:$0xf] %v938
      %1053 = vst [vmem:[%s172 + $0x70] sm:$0xf] %v939
      %1054 = vst [vmem:[%s172 + $0x74] sm:$0xf] %v940
      %1055 = vst [vmem:[%s172 + $0x78] sm:$0xf] %v941
      %1056 = vst [vmem:[%s172 + $0x7c] sm:$0xf] %v942
      %1057 = vst [vmem:[%s172 + $0x80] sm:$0xf] %v943
      %1058 = vst [vmem:[%s172 + $0x84] sm:$0xf] %v944
      %1059 = vst [vmem:[%s172 + $0x88] sm:$0xf] %v945
      %1060 = vst [vmem:[%s172 + $0x8c] sm:$0xf] %v946
      %1061 = vst [vmem:[%s172 + $0x90] sm:$0xf] %v947
      %1062 = vst [vmem:[%s172 + $0x94] sm:$0xf] %v948
      %1063 = vst [vmem:[%s172 + $0x98] sm:$0xf] %v949
      %1064 = vst [vmem:[%s172 + $0x9c] sm:$0xf] %v950
      %1065 = vst [vmem:[%s172 + $0xa0] sm:$0xf] %v951
      %1066 = vst [vmem:[%s172 + $0xa4] sm:$0xf] %v952
      %1067 = vst [vmem:[%s172 + $0xa8] sm:$0xf] %v953
      %1068 = vst [vmem:[%s172 + $0xac] sm:$0xf] %v954
      %1069 = vst [vmem:[%s172 + $0xb0] sm:$0xf] %v955
      %1070 = vst [vmem:[%s172 + $0xb4] sm:$0xf] %v956
      %1071 = vst [vmem:[%s172 + $0xb8] sm:$0xf] %v957
      %1072 = vst [vmem:[%s172 + $0xbc] sm:$0xf] %v958
      %1073 = vst [vmem:[%s172 + $0xc0] sm:$0xf] %v959
      %1074 = vst [vmem:[%s172 + $0xc4] sm:$0xf] %v960
      %1075 = vst [vmem:[%s172 + $0xc8] sm:$0xf] %v961
      %1076 = vst [vmem:[%s172 + $0xcc] sm:$0xf] %v962
      %1077 = vst [vmem:[%s172 + $0xd0] sm:$0xf] %v963
      %1078 = vst [vmem:[%s172 + $0xd4] sm:$0xf] %v964
      %1079 = vst [vmem:[%s172 + $0xd8] sm:$0xf] %v965
      %1080 = vst [vmem:[%s172 + $0xdc] sm:$0xf] %v966
      %1081 = vst [vmem:[%s172 + $0xe0] sm:$0xf] %v967
      %s1082 = smul.u32 57, %s14
      %p1083 = scmp.lt.s32.totalorder %s1082, 113
      %s1084 = scalar_select %p1083, %s1082, 113
      %s1085 = smul.addr %s1084, 4
      %s1086 = scalar_lea.vmem %s3, %s1085
      // Predicated region
      $region33: #{feature_extractor.8} parent=31 // pred_check
        %p1087 = pneg %p100
      $region34: #{feature_extractor.8} parent=31 // pred_check_branch
        %1089 = sbr.rel (%p1087) target = $region36
      $region35: #{feature_extractor.8} parent=31 // pred_region
        %s1090 = smul.u32 57, %s14
      $region36: #{feature_extractor.8} parent=31 // pred_fallthru
        _
    $region32: #{feature_extractor.8} parent=5 // pred_fallthru
      _
    %p1091 = scmp.le.s32.totalorder 2, %s9
    // Predicated region
    $region37: #{feature_extractor.8} parent=5 // pred_check
      %p1092 = pneg %p1091
    $region38: #{feature_extractor.8} parent=5 // pred_check_branch
      %1094 = sbr.rel (%p1092) target = $region40
    $region39: #{feature_extractor.8} parent=5 // pred_region
      %s1095 = ssub.s32 %s9, 2
      // Predicated region
      $region41: #{feature_extractor.8} parent=39 // pred_check
        %p1096 = pneg %p106
      $region42: #{feature_extractor.8} parent=39 // pred_check_branch
        %1098 = sbr.rel (%p1096) target = $region44
      $region43: #{feature_extractor.8} parent=39 // pred_region
        %s1099 = smul.u32 57, %s15
        %p1100 = scmp.lt.s32.totalorder %s1099, 113
        %s1101 = scalar_select %p1100, %s1099, 113
        %s1102 = smul.addr %s1101, 4
        %s1103 = scalar_lea.vmem %s3, %s1102
      $region44: #{feature_extractor.8} parent=39 // pred_fallthru
        _
    $region40: #{feature_extractor.8} parent=5 // pred_fallthru
      _
  $region6: #{feature_extractor.8} parent=0 // loop_footer
    %s13 = sadd.s32 1, %s9
  $region7: #{feature_extractor.8} parent=0 // loop_footer_branch
    %8 = sbr.rel target = $region3
  $region8: #{feature_extractor.8} parent=0 // loop_exit
    _

// kernel: feature_extractor.10
$region0: #{feature_extractor.10}
  #allocation0 [shape = 'u32[]', space=smem, size = 0x4, offset = 0x4, fixed_abs, tag = 'smem constant byte address 0x4 - core index']
  #allocation1 [shape = 'u32[144,128]{1,0:T(1,128)}', space=vmem, size = 0x12000, scoped, tag = 'internal scratch']
  %s0 = inlined_call_operand.vmem [shape: bf16[464,200], index: 0, kind: input, shape index: {}]
  %s1 = inlined_call_operand.vmem [shape: bf16[200,128], index: 1, kind: input, shape index: {}]
  %s2 = inlined_call_operand.vmem [shape: f32[1,128], index: 2, kind: input, shape index: {}]
  %s3 = inlined_call_operand.vmem [shape: bf16[464,128], index: 3, kind: output, shape index: {}]
  %s4 = sld [smem:[#allocation0]]
  $region45: #{feature_extractor.10} parent=0
    _
  %s6 = ssub.s32 1, %s4
  %s7 = scalar_select 0, %s6, %s4
  loop: start=0, step=1, limit=4
  $region2: #{feature_extractor.10} parent=0 // loop_pre_header
    _
  $region3: #{feature_extractor.10} parent=0 // loop_header
    %s9 = sphi 0, %s13
    %p10 = scmp.ge.s32.totalorder %s9, 4
    %s19 = sphi 0, %s21
    %s22 = sphi 0, %s19
    %s23 = sphi 0, %s22
    %s39 = sphi 0, %s23
    %s43 = sphi 0, %s43
    %s45 = sphi 0, %s43
    %s46 = sphi 0, %s45
    %s60 = sphi 0, %s46
    %s64 = sphi 0, %s64
    %s66 = sphi 0, %s64
    %s67 = sphi 0, %s66
    %s81 = sphi 0, %s67
    %s87 = sphi 0, %s89
    %s90 = sphi 0, %s87
    %s91 = sphi 0, %s90
    %s107 = sphi 0, %s91
  $region4: #{feature_extractor.10} parent=0 // loop_header_branch
    %12 = sbr.rel (%p10) target = $region8
  $region5: #{feature_extractor.10} parent=0 // loop_body
    %s14 = ssub.s32 %s9, 1
    %s15 = ssub.s32 %s9, 2
    %s16 = sadd.s32 %s9, 1
    %s17 = ssub.s32 %s9, %s16
    %p18 = scmp.eq.s32.totalorder %s17, 0
    %s20 = sadd.s32 %s19, 1
    %s21 = scalar_select %p18, %s19, %s20
    %p24 = pneg %p18
    %p25 = scmp.eq.s32.totalorder %s9, 1
    %p26 = por %p24, %p25
    %p27 = scmp.ne.s32.totalorder %s19, %s22
    %p28 = scmp.eq.s32.totalorder %s9, 0
    %p29 = por %p27, %p28
    %p30 = scmp.ne.s32.totalorder %s19, %s22
    %p31 = scmp.eq.s32.totalorder %s14, 1
    %p32 = por %p30, %p31
    %p33 = scmp.ne.s32.totalorder %s22, %s23
    %p34 = scmp.eq.s32.totalorder %s14, 0
    %p35 = por %p33, %p34
    %p36 = scmp.ne.s32.totalorder %s22, %s23
    %p37 = scmp.eq.s32.totalorder %s15, 1
    %p38 = por %p36, %p37
    %p40 = scmp.ne.s32.totalorder %s23, %s39
    %p41 = scmp.eq.s32.totalorder %s15, 0
    %p42 = por %p40, %p41
    %s44 = sadd.s32 %s43, 1
    %p47 = scmp.eq.s32.totalorder %s9, 1
    %p48 = scmp.ne.s32.totalorder %s43, %s45
    %p49 = scmp.eq.s32.totalorder %s9, 0
    %p50 = por %p48, %p49
    %p51 = scmp.ne.s32.totalorder %s43, %s45
    %p52 = scmp.eq.s32.totalorder %s14, 1
    %p53 = por %p51, %p52
    %p54 = scmp.ne.s32.totalorder %s45, %s46
    %p55 = scmp.eq.s32.totalorder %s14, 0
    %p56 = por %p54, %p55
    %p57 = scmp.ne.s32.totalorder %s45, %s46
    %p58 = scmp.eq.s32.totalorder %s15, 1
    %p59 = por %p57, %p58
    %p61 = scmp.ne.s32.totalorder %s46, %s60
    %p62 = scmp.eq.s32.totalorder %s15, 0
    %p63 = por %p61, %p62
    %s65 = sadd.s32 %s64, 1
    %p68 = scmp.eq.s32.totalorder %s9, 1
    %p69 = scmp.ne.s32.totalorder %s64, %s66
    %p70 = scmp.eq.s32.totalorder %s9, 0
    %p71 = por %p69, %p70
    %p72 = scmp.ne.s32.totalorder %s64, %s66
    %p73 = scmp.eq.s32.totalorder %s14, 1
    %p74 = por %p72, %p73
    %p75 = scmp.ne.s32.totalorder %s66, %s67
    %p76 = scmp.eq.s32.totalorder %s14, 0
    %p77 = por %p75, %p76
    %p78 = scmp.ne.s32.totalorder %s66, %s67
    %p79 = scmp.eq.s32.totalorder %s15, 1
    %p80 = por %p78, %p79
    %p82 = scmp.ne.s32.totalorder %s67, %s81
    %p83 = scmp.eq.s32.totalorder %s15, 0
    %p84 = por %p82, %p83
    %s85 = ssub.s32 %s9, %s16
    %p86 = scmp.eq.s32.totalorder %s85, 0
    %s88 = sadd.s32 %s87, 1
    %s89 = scalar_select %p86, %s87, %s88
    %p92 = pneg %p86
    %p93 = scmp.eq.s32.totalorder %s9, 1
    %p94 = por %p92, %p93
    %p95 = scmp.ne.s32.totalorder %s87, %s90
    %p96 = scmp.eq.s32.totalorder %s9, 0
    %p97 = por %p95, %p96
    %p98 = scmp.ne.s32.totalorder %s87, %s90
    %p99 = scmp.eq.s32.totalorder %s14, 1
    %p100 = por %p98, %p99
    %p101 = scmp.ne.s32.totalorder %s90, %s91
    %p102 = scmp.eq.s32.totalorder %s14, 0
    %p103 = por %p101, %p102
    %p104 = scmp.ne.s32.totalorder %s90, %s91
    %p105 = scmp.eq.s32.totalorder %s15, 1
    %p106 = por %p104, %p105
    %p108 = scmp.ne.s32.totalorder %s91, %s107
    %p109 = scmp.eq.s32.totalorder %s15, 0
    %p110 = por %p108, %p109
    %p111 = scmp.le.s32.totalorder 1, %s9
    %p112 = scmp.lt.s32.totalorder %s9, 3
    %p113 = pnand %p111, %p112
    %p114 = pneg %p113
    // Predicated region
    $region9: #{feature_extractor.10} parent=5 // pred_check
      _
    $region10: #{feature_extractor.10} parent=5 // pred_check_branch
      %116 = sbr.rel (%p113) target = $region12
    $region11: #{feature_extractor.10} parent=5 // pred_region
      %s117 = ssub.s32 %s9, 1
      // Predicated region
      $region13: #{feature_extractor.10} parent=11 // pred_check
        %p118 = pneg %p56
      $region14: #{feature_extractor.10} parent=11 // pred_check_branch
        %120 = sbr.rel (%p118) target = $region16
      $region15: #{feature_extractor.10} parent=11 // pred_region
        _
      $region16: #{feature_extractor.10} parent=11 // pred_fallthru
        _
      // Predicated region
      $region17: #{feature_extractor.10} parent=11 // pred_check
        %p121 = pneg %p77
      $region18: #{feature_extractor.10} parent=11 // pred_check_branch
        %123 = sbr.rel (%p121) target = $region20
      $region19: #{feature_extractor.10} parent=11 // pred_region
        _
      $region20: #{feature_extractor.10} parent=11 // pred_fallthru
        _
    $region12: #{feature_extractor.10} parent=5 // pred_fallthru
      _
    %p124 = scmp.lt.s32.totalorder %s9, 2
    // Predicated region
    $region21: #{feature_extractor.10} parent=5 // pred_check
      %p125 = pneg %p124
    $region22: #{feature_extractor.10} parent=5 // pred_check_branch
      %127 = sbr.rel (%p125) target = $region24
    $region23: #{feature_extractor.10} parent=5 // pred_region
      // Predicated region
      $region25: #{feature_extractor.10} parent=23 // pred_check
        %p128 = pneg %p29
      $region26: #{feature_extractor.10} parent=23 // pred_check_branch
        %130 = sbr.rel (%p128) target = $region28
      $region27: #{feature_extractor.10} parent=23 // pred_region
        %s131 = smul.u32 29, %s9
        %p132 = scmp.lt.s32.totalorder %s131, 57
        %s133 = scalar_select %p132, %s131, 57
        %s134 = smul.addr %s133, 2
        %s135 = smul.addr %s134, 4
        %s136 = scalar_lea.vmem %s0, %s135
        %s137 = smul.u32 29, %s9
      $region28: #{feature_extractor.10} parent=23 // pred_fallthru
        _
    $region24: #{feature_extractor.10} parent=5 // pred_fallthru
      _
    %p138 = scmp.le.s32.totalorder 1, %s9
    %p139 = scmp.lt.s32.totalorder %s9, 3
    %p140 = pnand %p138, %p139
    %p141 = pneg %p140
    // Predicated region
    $region29: #{feature_extractor.10} parent=5 // pred_check
      _
    $region30: #{feature_extractor.10} parent=5 // pred_check_branch
      %143 = sbr.rel (%p140) target = $region32
    $region31: #{feature_extractor.10} parent=5 // pred_region
      %s144 = ssub.s32 %s9, 1
      %s145 = smul.u32 29, %s14
      %p146 = scmp.lt.s32.totalorder %s145, 57
      %s147 = scalar_select %p146, %s145, 57
      %s148 = smul.addr %s147, 2
      %s149 = smul.addr %s148, 4
      %s150 = scalar_lea.vmem %s0, %s149
      %p151 = pneg %p35
      %p152 = pneg %p32
      %p153 = pneg %p56
      %p154 = pneg %p53
      %p155 = pneg %p77
      %p156 = pneg %p74
      %p157 = pneg %p103
      %p158 = pneg %p100
      %s159 = smul.u32 29, %s14
      %p160 = scmp.lt.s32.totalorder %s159, 57
      %s161 = scalar_select %p160, %s159, 57
      %s162 = smul.addr %s161, 4
      %s163 = scalar_lea.vmem %s3, %s162
      %s164 = smul.u32 29, %s14
      %p165 = scmp.lt.s32.totalorder %s164, 57
      %s166 = scalar_select %p165, %s164, 57
      %s167 = smul.addr %s166, 2
      %s168 = smul.addr %s167, 4
      %s169 = scalar_lea.vmem %s0, %s168
      %s170 = smul.u32 29, %s14
      %s171 = smul.u32 29, %s14
      %p172 = scmp.lt.s32.totalorder %s171, 57
      %s173 = scalar_select %p172, %s171, 57
      %s174 = smul.addr %s173, 4
      %s175 = scalar_lea.vmem %s3, %s174
      %s176 = smul.u32 29, %s14
      %v178 = vld [vmem:[%s169] sm:$0xff]
      %v179 = vld [vmem:[%s169 + $0x8] sm:$0xff]
      %v180 = vld [vmem:[%s169 + $0x10] sm:$0xff]
      %v181 = vld [vmem:[%s169 + $0x18] sm:$0xff]
      %v182 = vld [vmem:[%s169 + $0x20] sm:$0xff]
      %v183 = vld [vmem:[%s169 + $0x28] sm:$0xff]
      %v184 = vld [vmem:[%s169 + $0x30] sm:$0xff]
      %v185 = vld [vmem:[%s169 + $0x38] sm:$0xff]
      %v186 = vld [vmem:[%s169 + $0x40] sm:$0xff]
      %v187 = vld [vmem:[%s169 + $0x48] sm:$0xff]
      %v188 = vld [vmem:[%s169 + $0x50] sm:$0xff]
      %v189 = vld [vmem:[%s169 + $0x58] sm:$0xff]
      %v190 = vld [vmem:[%s169 + $0x60] sm:$0xff]
      %v191 = vld [vmem:[%s169 + $0x68] sm:$0xff]
      %v192 = vld [vmem:[%s169 + $0x70] sm:$0xff]
      %v193 = vld [vmem:[%s169 + $0x78] sm:$0xff]
      %v194 = vld [vmem:[%s169 + $0x80] sm:$0xff]
      %v195 = vld [vmem:[%s169 + $0x88] sm:$0xff]
      %v196 = vld [vmem:[%s169 + $0x90] sm:$0xff]
      %v197 = vld [vmem:[%s169 + $0x98] sm:$0xff]
      %v198 = vld [vmem:[%s169 + $0xa0] sm:$0xff]
      %v199 = vld [vmem:[%s169 + $0xa8] sm:$0xff]
      %v200 = vld [vmem:[%s169 + $0xb0] sm:$0xff]
      %v201 = vld [vmem:[%s169 + $0xb8] sm:$0xff]
      %v202 = vld [vmem:[%s169 + $0xc0] sm:$0xff]
      %v203 = vld [vmem:[%s169 + $0xc8] sm:$0xff]
      %v204 = vld [vmem:[%s169 + $0xd0] sm:$0xff]
      %v205 = vld [vmem:[%s169 + $0xd8] sm:$0xff]
      %v206 = vld [vmem:[%s169 + $0xe0] sm:$0xff]
      %v207 = vld [vmem:[%s1] sm:$0xf]
      %v208 = vld [vmem:[%s1 + $0x4] sm:$0xf]
      %v209 = vld [vmem:[%s1 + $0x8] sm:$0xf]
      %v210 = vld [vmem:[%s1 + $0xc] sm:$0xf]
      %v211 = vld [vmem:[%s1 + $0x10] sm:$0xf]
      %v212 = vld [vmem:[%s1 + $0x14] sm:$0xf]
      %v213 = vld [vmem:[%s1 + $0x18] sm:$0xf]
      %v214 = vld [vmem:[%s1 + $0x1c] sm:$0xf]
      %v215 = vld [vmem:[%s1 + $0x20] sm:$0xf]
      %v216 = vld [vmem:[%s1 + $0x24] sm:$0xf]
      %v217 = vld [vmem:[%s1 + $0x28] sm:$0xf]
      %v218 = vld [vmem:[%s1 + $0x2c] sm:$0xf]
      %v219 = vld [vmem:[%s1 + $0x30] sm:$0xf]
      %v220 = vld [vmem:[%s1 + $0x34] sm:$0xf]
      %v221 = vld [vmem:[%s1 + $0x38] sm:$0xf]
      %v222 = vld [vmem:[%s1 + $0x3c] sm:$0xf]
      %v223 = vld [vmem:[%s1 + $0x40] sm:$0xf]
      %v224 = vld [vmem:[%s1 + $0x44] sm:$0xf]
      %v225 = vld [vmem:[%s1 + $0x48] sm:$0xf]
      %v226 = vld [vmem:[%s1 + $0x4c] sm:$0xf]
      %v227 = vld [vmem:[%s1 + $0x50] sm:$0xf]
      %v228 = vld [vmem:[%s1 + $0x54] sm:$0xf]
      %v229 = vld [vmem:[%s1 + $0x58] sm:$0xf]
      %v230 = vld [vmem:[%s1 + $0x5c] sm:$0xf]
      %v231 = vld [vmem:[%s1 + $0x60] sm:$0xf]
      %v232 = vld [vmem:[%s2] sm:$0x1]
      %v234 = vlaneseq
      %v235 = vshrl.u32 %v234, 7
      %v236 = vsub.s32 0, %v235
      %v237 = vrot.slane %v232, %v236
      %v268 = vunpack.c.l.b16 %v178
      %v269 = vunpack.c.h.b16 %v178
      %v270 = vunpack.c.l.b16 %v179
      %v271 = vunpack.c.h.b16 %v179
      %v272 = vunpack.c.l.b16 %v180
      %v273 = vunpack.c.h.b16 %v180
      %v274 = vunpack.c.l.b16 %v181
      %v275 = vunpack.c.h.b16 %v181
      %v276 = vunpack.c.l.b16 %v182
      %v277 = vunpack.c.h.b16 %v182
      %v278 = vunpack.c.l.b16 %v183
      %v279 = vunpack.c.h.b16 %v183
      %v280 = vunpack.c.l.b16 %v184
      %v281 = vunpack.c.h.b16 %v184
      %v282 = vunpack.c.l.b16 %v185
      %v283 = vunpack.c.h.b16 %v185
      %v284 = vunpack.c.l.b16 %v186
      %v285 = vunpack.c.h.b16 %v186
      %v286 = vunpack.c.l.b16 %v187
      %v287 = vunpack.c.h.b16 %v187
      %v288 = vunpack.c.l.b16 %v188
      %v289 = vunpack.c.h.b16 %v188
      %v290 = vunpack.c.l.b16 %v189
      %v291 = vunpack.c.h.b16 %v189
      %v292 = vunpack.c.l.b16 %v190
      %v293 = vunpack.c.h.b16 %v190
      %v294 = vunpack.c.l.b16 %v191
      %v295 = vunpack.c.h.b16 %v191
      %v296 = vunpack.c.l.b16 %v192
      %v297 = vunpack.c.h.b16 %v192
      %v298 = vunpack.c.l.b16 %v193
      %v299 = vunpack.c.h.b16 %v193
      %v300 = vunpack.c.l.b16 %v194
      %v301 = vunpack.c.h.b16 %v194
      %v302 = vunpack.c.l.b16 %v195
      %v303 = vunpack.c.h.b16 %v195
      %v304 = vunpack.c.l.b16 %v196
      %v305 = vunpack.c.h.b16 %v196
      %v306 = vunpack.c.l.b16 %v197
      %v307 = vunpack.c.h.b16 %v197
      %v308 = vunpack.c.l.b16 %v198
      %v309 = vunpack.c.h.b16 %v198
      %v310 = vunpack.c.l.b16 %v199
      %v311 = vunpack.c.h.b16 %v199
      %v312 = vunpack.c.l.b16 %v200
      %v313 = vunpack.c.h.b16 %v200
      %v314 = vunpack.c.l.b16 %v201
      %v315 = vunpack.c.h.b16 %v201
      %v316 = vunpack.c.l.b16 %v202
      %v317 = vunpack.c.h.b16 %v202
      %v318 = vunpack.c.l.b16 %v203
      %v319 = vunpack.c.h.b16 %v203
      %v320 = vunpack.c.l.b16 %v204
      %v321 = vunpack.c.h.b16 %v204
      %v322 = vunpack.c.l.b16 %v205
      %v323 = vunpack.c.h.b16 %v205
      %v324 = vunpack.c.l.b16 %v206
      %v325 = vunpack.c.h.b16 %v206
      %v326 = vpack.c.b16 %v270, %v268
      %v327 = vpack.c.b16 %v271, %v269
      %v328 = vpack.c.b16 %v274, %v272
      %v329 = vpack.c.b16 %v275, %v273
      %v330 = vpack.c.b16 %v278, %v276
      %v331 = vpack.c.b16 %v279, %v277
      %v332 = vpack.c.b16 %v282, %v280
      %v333 = vpack.c.b16 %v283, %v281
      %v334 = vpack.c.b16 %v286, %v284
      %v335 = vpack.c.b16 %v287, %v285
      %v336 = vpack.c.b16 %v290, %v288
      %v337 = vpack.c.b16 %v291, %v289
      %v338 = vpack.c.b16 %v294, %v292
      %v339 = vpack.c.b16 %v295, %v293
      %v340 = vpack.c.b16 %v298, %v296
      %v341 = vpack.c.b16 %v299, %v297
      %v342 = vpack.c.b16 %v302, %v300
      %v343 = vpack.c.b16 %v303, %v301
      %v344 = vpack.c.b16 %v306, %v304
      %v345 = vpack.c.b16 %v307, %v305
      %v346 = vpack.c.b16 %v310, %v308
      %v347 = vpack.c.b16 %v311, %v309
      %v348 = vpack.c.b16 %v314, %v312
      %v349 = vpack.c.b16 %v315, %v313
      %v350 = vpack.c.b16 %v318, %v316
      %v351 = vpack.c.b16 %v319, %v317
      %v352 = vpack.c.b16 %v322, %v320
      %v353 = vpack.c.b16 %v323, %v321
      %v354 = vpack.c.b16 %v324, %v324
      %v355 = vpack.c.b16 %v325, %v325
      %v396 = vunpack.c.l.b16 %v207
      %v397 = vunpack.c.l.b16 %v208
      %v398 = vunpack.c.l.b16 %v209
      %v399 = vunpack.c.l.b16 %v210
      %v400 = vunpack.c.l.b16 %v211
      %v401 = vunpack.c.l.b16 %v212
      %v402 = vunpack.c.l.b16 %v213
      %v403 = vunpack.c.l.b16 %v214
      %v404 = vunpack.c.l.b16 %v215
      %v405 = vunpack.c.l.b16 %v216
      %v406 = vunpack.c.l.b16 %v217
      %v407 = vunpack.c.l.b16 %v218
      %v408 = vunpack.c.l.b16 %v219
      %v409 = vunpack.c.l.b16 %v220
      %v410 = vunpack.c.l.b16 %v221
      %v411 = vunpack.c.l.b16 %v222
      %v412 = vunpack.c.l.b16 %v223
      %v413 = vunpack.c.l.b16 %v224
      %v414 = vunpack.c.l.b16 %v225
      %v415 = vunpack.c.l.b16 %v226
      %v416 = vunpack.c.l.b16 %v227
      %v417 = vunpack.c.l.b16 %v228
      %v418 = vunpack.c.l.b16 %v229
      %v419 = vunpack.c.l.b16 %v230
      %v420 = vunpack.c.l.b16 %v231
      %v421 = vpack.c.b16 %v397, %v396
      %v422 = vpack.c.b16 %v399, %v398
      %v423 = vpack.c.b16 %v401, %v400
      %v424 = vpack.c.b16 %v403, %v402
      %v425 = vpack.c.b16 %v405, %v404
      %v426 = vpack.c.b16 %v407, %v406
      %v427 = vpack.c.b16 %v409, %v408
      %v428 = vpack.c.b16 %v411, %v410
      %v429 = vpack.c.b16 %v413, %v412
      %v430 = vpack.c.b16 %v415, %v414
      %v431 = vpack.c.b16 %v417, %v416
      %v432 = vpack.c.b16 %v419, %v418
      %v433 = vpack.c.b16 %v420, %v420
      %vm446 = vcmask 588800
      %v448 = vsel %vm446, %v327, 0
      %v451 = vsel %vm446, %v329, 0
      %v454 = vsel %vm446, %v331, 0
      %v457 = vsel %vm446, %v333, 0
      %v460 = vsel %vm446, %v335, 0
      %v463 = vsel %vm446, %v337, 0
      %v466 = vsel %vm446, %v339, 0
      %v469 = vsel %vm446, %v341, 0
      %v472 = vsel %vm446, %v343, 0
      %v475 = vsel %vm446, %v345, 0
      %v478 = vsel %vm446, %v347, 0
      %v481 = vsel %vm446, %v349, 0
      %v484 = vsel %vm446, %v351, 0
      %v487 = vsel %vm446, %v353, 0
      %v490 = vsel %vm446, %v355, 0
      %vm492 = vcmask 1043456
      %v494 = vsel %vm492, %v433, 0
      %496 = vmatprep.subr.bf16.mxu0 0
      %497 = vmatpush1.bf16.msra.mxu0 %v428
      %498 = vmatprep.subr.bf16.mxu0 0
      %499 = vmatpush1.bf16.msra.mxu0 %v427
      %500 = vmatprep.subr.bf16.mxu0 0
      %501 = vmatpush1.bf16.msra.mxu0 %v426
      %502 = vmatprep.subr.bf16.mxu0 0
      %503 = vmatpush1.bf16.msra.mxu0 %v425
      %504 = vmatprep.subr.bf16.mxu0 0
      %505 = vmatpush1.bf16.msra.mxu0 %v424
      %506 = vmatprep.subr.bf16.mxu0 0
      %507 = vmatpush1.bf16.msra.mxu0 %v423
      %508 = vmatprep.subr.bf16.mxu0 0
      %509 = vmatpush1.bf16.msra.mxu0 %v422
      %510 = vmatprep.subr.bf16.mxu0 0
      %511 = vmatpush1.bf16.msra.mxu0 %v421
      %512 = vmatprep.subr.bf16.mxu0 0
      %513 = vmatpush2.bf16.msra.mxu0 0
      %514 = vmatprep.subr.bf16.mxu0 0
      %515 = vmatpush2.bf16.msra.mxu0 0
      %516 = vmatprep.subr.bf16.mxu0 0
      %517 = vmatpush2.bf16.msra.mxu0 0
      %518 = vmatprep.subr.bf16.mxu0 0
      %519 = vmatpush2.bf16.msra.mxu0 %v494
      %520 = vmatprep.subr.bf16.mxu0 0
      %521 = vmatpush2.bf16.msra.mxu0 %v432
      %522 = vmatprep.subr.bf16.mxu0 0
      %523 = vmatpush2.bf16.msra.mxu0 %v431
      %524 = vmatprep.subr.bf16.mxu0 0
      %525 = vmatpush2.bf16.msra.mxu0 %v430
      %526 = vmatprep.subr.bf16.mxu0 0
      %527 = vmatpush2.bf16.msra.mxu0 %v429
      %528 = vmatprep.mubr.bf16.mxu0 %v448
      %529 = vmatmul.mubr.bf16.gmra.mxu0 %v326
      %v530 = vpop.f32.mrf.mxu0
      %v531 = vadd.f32 %v237, %v530
      %v532 = vpop.f32.mrf.mxu0
      %v533 = vpop.f32.mrf.mxu0
      %v534 = vadd.f32 %v237, %v533
      %v535 = vpop.f32.mrf.mxu0
      %536 = vmatprep.mubr.bf16.mxu0 %v451
      %537 = vmatmul.mubr.bf16.gmra.mxu0 %v328
      %v538 = vpop.f32.mrf.mxu0
      %v539 = vadd.f32 %v237, %v538
      %v540 = vpop.f32.mrf.mxu0
      %v541 = vpop.f32.mrf.mxu0
      %v542 = vadd.f32 %v237, %v541
      %v543 = vpop.f32.mrf.mxu0
      %544 = vmatprep.mubr.bf16.mxu0 %v454
      %545 = vmatmul.mubr.bf16.gmra.mxu0 %v330
      %v546 = vpop.f32.mrf.mxu0
      %v547 = vadd.f32 %v237, %v546
      %v548 = vpop.f32.mrf.mxu0
      %v549 = vpop.f32.mrf.mxu0
      %v550 = vadd.f32 %v237, %v549
      %v551 = vpop.f32.mrf.mxu0
      %552 = vmatprep.mubr.bf16.mxu0 %v457
      %553 = vmatmul.mubr.bf16.gmra.mxu0 %v332
      %v554 = vpop.f32.mrf.mxu0
      %v555 = vadd.f32 %v237, %v554
      %v556 = vpop.f32.mrf.mxu0
      %v557 = vpop.f32.mrf.mxu0
      %v558 = vadd.f32 %v237, %v557
      %v559 = vpop.f32.mrf.mxu0
      %560 = vmatprep.mubr.bf16.mxu0 %v460
      %561 = vmatmul.mubr.bf16.gmra.mxu0 %v334
      %v562 = vpop.f32.mrf.mxu0
      %v563 = vadd.f32 %v237, %v562
      %v564 = vpop.f32.mrf.mxu0
      %v565 = vpop.f32.mrf.mxu0
      %v566 = vadd.f32 %v237, %v565
      %v567 = vpop.f32.mrf.mxu0
      %568 = vmatprep.mubr.bf16.mxu0 %v463
      %569 = vmatmul.mubr.bf16.gmra.mxu0 %v336
      %v570 = vpop.f32.mrf.mxu0
      %v571 = vadd.f32 %v237, %v570
      %v572 = vpop.f32.mrf.mxu0
      %v573 = vpop.f32.mrf.mxu0
      %v574 = vadd.f32 %v237, %v573
      %v575 = vpop.f32.mrf.mxu0
      %576 = vmatprep.mubr.bf16.mxu0 %v466
      %577 = vmatmul.mubr.bf16.gmra.mxu0 %v338
      %v578 = vpop.f32.mrf.mxu0
      %v579 = vadd.f32 %v237, %v578
      %v580 = vpop.f32.mrf.mxu0
      %v581 = vpop.f32.mrf.mxu0
      %v582 = vadd.f32 %v237, %v581
      %v583 = vpop.f32.mrf.mxu0
      %584 = vmatprep.mubr.bf16.mxu0 %v469
      %585 = vmatmul.mubr.bf16.gmra.mxu0 %v340
      %v586 = vpop.f32.mrf.mxu0
      %v587 = vadd.f32 %v237, %v586
      %v588 = vpop.f32.mrf.mxu0
      %v589 = vpop.f32.mrf.mxu0
      %v590 = vadd.f32 %v237, %v589
      %v591 = vpop.f32.mrf.mxu0
      %592 = vmatprep.mubr.bf16.mxu0 %v472
      %593 = vmatmul.mubr.bf16.gmra.mxu0 %v342
      %v594 = vpop.f32.mrf.mxu0
      %v595 = vadd.f32 %v237, %v594
      %v596 = vpop.f32.mrf.mxu0
      %v597 = vpop.f32.mrf.mxu0
      %v598 = vadd.f32 %v237, %v597
      %v599 = vpop.f32.mrf.mxu0
      %600 = vmatprep.mubr.bf16.mxu0 %v475
      %601 = vmatmul.mubr.bf16.gmra.mxu0 %v344
      %v602 = vpop.f32.mrf.mxu0
      %v603 = vadd.f32 %v237, %v602
      %v604 = vpop.f32.mrf.mxu0
      %v605 = vpop.f32.mrf.mxu0
      %v606 = vadd.f32 %v237, %v605
      %v607 = vpop.f32.mrf.mxu0
      %608 = vmatprep.mubr.bf16.mxu0 %v478
      %609 = vmatmul.mubr.bf16.gmra.mxu0 %v346
      %v610 = vpop.f32.mrf.mxu0
      %v611 = vadd.f32 %v237, %v610
      %v612 = vpop.f32.mrf.mxu0
      %v613 = vpop.f32.mrf.mxu0
      %v614 = vadd.f32 %v237, %v613
      %v615 = vpop.f32.mrf.mxu0
      %616 = vmatprep.mubr.bf16.mxu0 %v481
      %617 = vmatmul.mubr.bf16.gmra.mxu0 %v348
      %v618 = vpop.f32.mrf.mxu0
      %v619 = vadd.f32 %v237, %v618
      %v620 = vpop.f32.mrf.mxu0
      %v621 = vpop.f32.mrf.mxu0
      %v622 = vadd.f32 %v237, %v621
      %v623 = vpop.f32.mrf.mxu0
      %624 = vmatprep.mubr.bf16.mxu0 %v484
      %625 = vmatmul.mubr.bf16.gmra.mxu0 %v350
      %v626 = vpop.f32.mrf.mxu0
      %v627 = vadd.f32 %v237, %v626
      %v628 = vpop.f32.mrf.mxu0
      %v629 = vpop.f32.mrf.mxu0
      %v630 = vadd.f32 %v237, %v629
      %v631 = vpop.f32.mrf.mxu0
      %632 = vmatprep.mubr.bf16.mxu0 %v487
      %633 = vmatmul.mubr.bf16.gmra.mxu0 %v352
      %v634 = vpop.f32.mrf.mxu0
      %v635 = vadd.f32 %v237, %v634
      %v636 = vpop.f32.mrf.mxu0
      %v637 = vpop.f32.mrf.mxu0
      %v638 = vadd.f32 %v237, %v637
      %v639 = vpop.f32.mrf.mxu0
      %640 = vmatprep.mubr.bf16.mxu0 %v490
      %641 = vmatmul.mubr.bf16.gmra.mxu0 %v354
      %v642 = vpop.f32.mrf.mxu0
      %v643 = vadd.f32 %v237, %v642
      %v644 = vpop.f32.mrf.mxu0
      %v645 = vpop.f32.mrf.mxu0
      %v646 = vpop.f32.mrf.mxu0
      %647 = vdwg.mxu0
      %v648 = vmax.f32 %v531, 0.0
      %v649 = vmax.f32 %v534, 0.0
      %v650 = vmax.f32 %v539, 0.0
      %v651 = vmax.f32 %v542, 0.0
      %v652 = vmax.f32 %v547, 0.0
      %v653 = vmax.f32 %v550, 0.0
      %v654 = vmax.f32 %v555, 0.0
      %v655 = vmax.f32 %v558, 0.0
      %v656 = vmax.f32 %v563, 0.0
      %v657 = vmax.f32 %v566, 0.0
      %v658 = vmax.f32 %v571, 0.0
      %v659 = vmax.f32 %v574, 0.0
      %v660 = vmax.f32 %v579, 0.0
      %v661 = vmax.f32 %v582, 0.0
      %v662 = vmax.f32 %v587, 0.0
      %v663 = vmax.f32 %v590, 0.0
      %v664 = vmax.f32 %v595, 0.0
      %v665 = vmax.f32 %v598, 0.0
      %v666 = vmax.f32 %v603, 0.0
      %v667 = vmax.f32 %v606, 0.0
      %v668 = vmax.f32 %v611, 0.0
      %v669 = vmax.f32 %v614, 0.0
      %v670 = vmax.f32 %v619, 0.0
      %v671 = vmax.f32 %v622, 0.0
      %v672 = vmax.f32 %v627, 0.0
      %v673 = vmax.f32 %v630, 0.0
      %v674 = vmax.f32 %v635, 0.0
      %v675 = vmax.f32 %v638, 0.0
      %v676 = vmax.f32 %v643, 0.0
      %v677 = vpack.c.bf16 %v649, %v648
      %v678 = vpack.c.bf16 %v651, %v650
      %v679 = vpack.c.bf16 %v653, %v652
      %v680 = vpack.c.bf16 %v655, %v654
      %v681 = vpack.c.bf16 %v657, %v656
      %v682 = vpack.c.bf16 %v659, %v658
      %v683 = vpack.c.bf16 %v661, %v660
      %v684 = vpack.c.bf16 %v663, %v662
      %v685 = vpack.c.bf16 %v665, %v664
      %v686 = vpack.c.bf16 %v667, %v666
      %v687 = vpack.c.bf16 %v669, %v668
      %v688 = vpack.c.bf16 %v671, %v670
      %v689 = vpack.c.bf16 %v673, %v672
      %v690 = vpack.c.bf16 %v675, %v674
      %v691 = vpack.c.bf16 %v676, %v676
      %v707 = vunpack.c.l.b16 %v677
      %v708 = vunpack.c.h.b16 %v677
      %v709 = vunpack.c.l.b16 %v678
      %v710 = vunpack.c.h.b16 %v678
      %v711 = vunpack.c.l.b16 %v679
      %v712 = vunpack.c.h.b16 %v679
      %v713 = vunpack.c.l.b16 %v680
      %v714 = vunpack.c.h.b16 %v680
      %v715 = vunpack.c.l.b16 %v681
      %v716 = vunpack.c.h.b16 %v681
      %v717 = vunpack.c.l.b16 %v682
      %v718 = vunpack.c.h.b16 %v682
      %v719 = vunpack.c.l.b16 %v683
      %v720 = vunpack.c.h.b16 %v683
      %v721 = vunpack.c.l.b16 %v684
      %v722 = vunpack.c.h.b16 %v684
      %v723 = vunpack.c.l.b16 %v685
      %v724 = vunpack.c.h.b16 %v685
      %v725 = vunpack.c.l.b16 %v686
      %v726 = vunpack.c.h.b16 %v686
      %v727 = vunpack.c.l.b16 %v687
      %v728 = vunpack.c.h.b16 %v687
      %v729 = vunpack.c.l.b16 %v688
      %v730 = vunpack.c.h.b16 %v688
      %v731 = vunpack.c.l.b16 %v689
      %v732 = vunpack.c.h.b16 %v689
      %v733 = vunpack.c.l.b16 %v690
      %v734 = vunpack.c.h.b16 %v690
      %v735 = vunpack.c.l.b16 %v691
      %v736 = vpack.c.b16 %v707, %v707
      %v737 = vpack.c.b16 %v708, %v708
      %v738 = vpack.c.b16 %v709, %v709
      %v739 = vpack.c.b16 %v710, %v710
      %v740 = vpack.c.b16 %v711, %v711
      %v741 = vpack.c.b16 %v712, %v712
      %v742 = vpack.c.b16 %v713, %v713
      %v743 = vpack.c.b16 %v714, %v714
      %v744 = vpack.c.b16 %v715, %v715
      %v745 = vpack.c.b16 %v716, %v716
      %v746 = vpack.c.b16 %v717, %v717
      %v747 = vpack.c.b16 %v718, %v718
      %v748 = vpack.c.b16 %v719, %v719
      %v749 = vpack.c.b16 %v720, %v720
      %v750 = vpack.c.b16 %v721, %v721
      %v751 = vpack.c.b16 %v722, %v722
      %v752 = vpack.c.b16 %v723, %v723
      %v753 = vpack.c.b16 %v724, %v724
      %v754 = vpack.c.b16 %v725, %v725
      %v755 = vpack.c.b16 %v726, %v726
      %v756 = vpack.c.b16 %v727, %v727
      %v757 = vpack.c.b16 %v728, %v728
      %v758 = vpack.c.b16 %v729, %v729
      %v759 = vpack.c.b16 %v730, %v730
      %v760 = vpack.c.b16 %v731, %v731
      %v761 = vpack.c.b16 %v732, %v732
      %v762 = vpack.c.b16 %v733, %v733
      %v763 = vpack.c.b16 %v734, %v734
      %v764 = vpack.c.b16 %v735, %v735
      %794 = vst [vmem:[%s175] sm:$0xf] %v736
      %795 = vst [vmem:[%s175 + $0x4] sm:$0xf] %v737
      %796 = vst [vmem:[%s175 + $0x8] sm:$0xf] %v738
      %797 = vst [vmem:[%s175 + $0xc] sm:$0xf] %v739
      %798 = vst [vmem:[%s175 + $0x10] sm:$0xf] %v740
      %799 = vst [vmem:[%s175 + $0x14] sm:$0xf] %v741
      %800 = vst [vmem:[%s175 + $0x18] sm:$0xf] %v742
      %801 = vst [vmem:[%s175 + $0x1c] sm:$0xf] %v743
      %802 = vst [vmem:[%s175 + $0x20] sm:$0xf] %v744
      %803 = vst [vmem:[%s175 + $0x24] sm:$0xf] %v745
      %804 = vst [vmem:[%s175 + $0x28] sm:$0xf] %v746
      %805 = vst [vmem:[%s175 + $0x2c] sm:$0xf] %v747
      %806 = vst [vmem:[%s175 + $0x30] sm:$0xf] %v748
      %807 = vst [vmem:[%s175 + $0x34] sm:$0xf] %v749
      %808 = vst [vmem:[%s175 + $0x38] sm:$0xf] %v750
      %809 = vst [vmem:[%s175 + $0x3c] sm:$0xf] %v751
      %810 = vst [vmem:[%s175 + $0x40] sm:$0xf] %v752
      %811 = vst [vmem:[%s175 + $0x44] sm:$0xf] %v753
      %812 = vst [vmem:[%s175 + $0x48] sm:$0xf] %v754
      %813 = vst [vmem:[%s175 + $0x4c] sm:$0xf] %v755
      %814 = vst [vmem:[%s175 + $0x50] sm:$0xf] %v756
      %815 = vst [vmem:[%s175 + $0x54] sm:$0xf] %v757
      %816 = vst [vmem:[%s175 + $0x58] sm:$0xf] %v758
      %817 = vst [vmem:[%s175 + $0x5c] sm:$0xf] %v759
      %818 = vst [vmem:[%s175 + $0x60] sm:$0xf] %v760
      %819 = vst [vmem:[%s175 + $0x64] sm:$0xf] %v761
      %820 = vst [vmem:[%s175 + $0x68] sm:$0xf] %v762
      %821 = vst [vmem:[%s175 + $0x6c] sm:$0xf] %v763
      %822 = vst [vmem:[%s175 + $0x70] sm:$0xf] %v764
      %s823 = smul.u32 29, %s14
      %p824 = scmp.lt.s32.totalorder %s823, 57
      %s825 = scalar_select %p824, %s823, 57
      %s826 = smul.addr %s825, 4
      %s827 = scalar_lea.vmem %s3, %s826
      // Predicated region
      $region33: #{feature_extractor.10} parent=31 // pred_check
        %p828 = pneg %p100
      $region34: #{feature_extractor.10} parent=31 // pred_check_branch
        %830 = sbr.rel (%p828) target = $region36
      $region35: #{feature_extractor.10} parent=31 // pred_region
        %s831 = smul.u32 29, %s14
      $region36: #{feature_extractor.10} parent=31 // pred_fallthru
        _
    $region32: #{feature_extractor.10} parent=5 // pred_fallthru
      _
    %p832 = scmp.le.s32.totalorder 2, %s9
    // Predicated region
    $region37: #{feature_extractor.10} parent=5 // pred_check
      %p833 = pneg %p832
    $region38: #{feature_extractor.10} parent=5 // pred_check_branch
      %835 = sbr.rel (%p833) target = $region40
    $region39: #{feature_extractor.10} parent=5 // pred_region
      %s836 = ssub.s32 %s9, 2
      // Predicated region
      $region41: #{feature_extractor.10} parent=39 // pred_check
        %p837 = pneg %p106
      $region42: #{feature_extractor.10} parent=39 // pred_check_branch
        %839 = sbr.rel (%p837) target = $region44
      $region43: #{feature_extractor.10} parent=39 // pred_region
        %s840 = smul.u32 29, %s15
        %p841 = scmp.lt.s32.totalorder %s840, 57
        %s842 = scalar_select %p841, %s840, 57
        %s843 = smul.addr %s842, 4
        %s844 = scalar_lea.vmem %s3, %s843
      $region44: #{feature_extractor.10} parent=39 // pred_fallthru
        _
    $region40: #{feature_extractor.10} parent=5 // pred_fallthru
      _
  $region6: #{feature_extractor.10} parent=0 // loop_footer
    %s13 = sadd.s32 1, %s9
  $region7: #{feature_extractor.10} parent=0 // loop_footer_branch
    %8 = sbr.rel target = $region3
  $region8: #{feature_extractor.10} parent=0 // loop_exit
    _

// kernel: feature_extractor.9
$region0: #{feature_extractor.9}
  #allocation0 [shape = 'u32[]', space=smem, size = 0x4, offset = 0x4, fixed_abs, tag = 'smem constant byte address 0x4 - core index']
  #allocation1 [shape = 'u32[144,128]{1,0:T(1,128)}', space=vmem, size = 0x12000, scoped, tag = 'internal scratch']
  %s0 = inlined_call_operand.vmem [shape: bf16[464,72], index: 0, kind: input, shape index: {}]
  %s1 = inlined_call_operand.vmem [shape: bf16[72,128], index: 1, kind: input, shape index: {}]
  %s2 = inlined_call_operand.vmem [shape: f32[1,128], index: 2, kind: input, shape index: {}]
  %s3 = inlined_call_operand.vmem [shape: bf16[464,128], index: 3, kind: output, shape index: {}]
  %s4 = sld [smem:[#allocation0]]
  $region45: #{feature_extractor.9} parent=0
    _
  %s6 = ssub.s32 1, %s4
  %s7 = scalar_select 0, %s6, %s4
  loop: start=0, step=1, limit=4
  $region2: #{feature_extractor.9} parent=0 // loop_pre_header
    _
  $region3: #{feature_extractor.9} parent=0 // loop_header
    %s9 = sphi 0, %s13
    %p10 = scmp.ge.s32.totalorder %s9, 4
    %s19 = sphi 0, %s21
    %s22 = sphi 0, %s19
    %s23 = sphi 0, %s22
    %s39 = sphi 0, %s23
    %s43 = sphi 0, %s43
    %s45 = sphi 0, %s43
    %s46 = sphi 0, %s45
    %s60 = sphi 0, %s46
    %s64 = sphi 0, %s64
    %s66 = sphi 0, %s64
    %s67 = sphi 0, %s66
    %s81 = sphi 0, %s67
    %s87 = sphi 0, %s89
    %s90 = sphi 0, %s87
    %s91 = sphi 0, %s90
    %s107 = sphi 0, %s91
  $region4: #{feature_extractor.9} parent=0 // loop_header_branch
    %12 = sbr.rel (%p10) target = $region8
  $region5: #{feature_extractor.9} parent=0 // loop_body
    %s14 = ssub.s32 %s9, 1
    %s15 = ssub.s32 %s9, 2
    %s16 = sadd.s32 %s9, 1
    %s17 = ssub.s32 %s9, %s16
    %p18 = scmp.eq.s32.totalorder %s17, 0
    %s20 = sadd.s32 %s19, 1
    %s21 = scalar_select %p18, %s19, %s20
    %p24 = pneg %p18
    %p25 = scmp.eq.s32.totalorder %s9, 1
    %p26 = por %p24, %p25
    %p27 = scmp.ne.s32.totalorder %s19, %s22
    %p28 = scmp.eq.s32.totalorder %s9, 0
    %p29 = por %p27, %p28
    %p30 = scmp.ne.s32.totalorder %s19, %s22
    %p31 = scmp.eq.s32.totalorder %s14, 1
    %p32 = por %p30, %p31
    %p33 = scmp.ne.s32.totalorder %s22, %s23
    %p34 = scmp.eq.s32.totalorder %s14, 0
    %p35 = por %p33, %p34
    %p36 = scmp.ne.s32.totalorder %s22, %s23
    %p37 = scmp.eq.s32.totalorder %s15, 1
    %p38 = por %p36, %p37
    %p40 = scmp.ne.s32.totalorder %s23, %s39
    %p41 = scmp.eq.s32.totalorder %s15, 0
    %p42 = por %p40, %p41
    %s44 = sadd.s32 %s43, 1
    %p47 = scmp.eq.s32.totalorder %s9, 1
    %p48 = scmp.ne.s32.totalorder %s43, %s45
    %p49 = scmp.eq.s32.totalorder %s9, 0
    %p50 = por %p48, %p49
    %p51 = scmp.ne.s32.totalorder %s43, %s45
    %p52 = scmp.eq.s32.totalorder %s14, 1
    %p53 = por %p51, %p52
    %p54 = scmp.ne.s32.totalorder %s45, %s46
    %p55 = scmp.eq.s32.totalorder %s14, 0
    %p56 = por %p54, %p55
    %p57 = scmp.ne.s32.totalorder %s45, %s46
    %p58 = scmp.eq.s32.totalorder %s15, 1
    %p59 = por %p57, %p58
    %p61 = scmp.ne.s32.totalorder %s46, %s60
    %p62 = scmp.eq.s32.totalorder %s15, 0
    %p63 = por %p61, %p62
    %s65 = sadd.s32 %s64, 1
    %p68 = scmp.eq.s32.totalorder %s9, 1
    %p69 = scmp.ne.s32.totalorder %s64, %s66
    %p70 = scmp.eq.s32.totalorder %s9, 0
    %p71 = por %p69, %p70
    %p72 = scmp.ne.s32.totalorder %s64, %s66
    %p73 = scmp.eq.s32.totalorder %s14, 1
    %p74 = por %p72, %p73
    %p75 = scmp.ne.s32.totalorder %s66, %s67
    %p76 = scmp.eq.s32.totalorder %s14, 0
    %p77 = por %p75, %p76
    %p78 = scmp.ne.s32.totalorder %s66, %s67
    %p79 = scmp.eq.s32.totalorder %s15, 1
    %p80 = por %p78, %p79
    %p82 = scmp.ne.s32.totalorder %s67, %s81
    %p83 = scmp.eq.s32.totalorder %s15, 0
    %p84 = por %p82, %p83
    %s85 = ssub.s32 %s9, %s16
    %p86 = scmp.eq.s32.totalorder %s85, 0
    %s88 = sadd.s32 %s87, 1
    %s89 = scalar_select %p86, %s87, %s88
    %p92 = pneg %p86
    %p93 = scmp.eq.s32.totalorder %s9, 1
    %p94 = por %p92, %p93
    %p95 = scmp.ne.s32.totalorder %s87, %s90
    %p96 = scmp.eq.s32.totalorder %s9, 0
    %p97 = por %p95, %p96
    %p98 = scmp.ne.s32.totalorder %s87, %s90
    %p99 = scmp.eq.s32.totalorder %s14, 1
    %p100 = por %p98, %p99
    %p101 = scmp.ne.s32.totalorder %s90, %s91
    %p102 = scmp.eq.s32.totalorder %s14, 0
    %p103 = por %p101, %p102
    %p104 = scmp.ne.s32.totalorder %s90, %s91
    %p105 = scmp.eq.s32.totalorder %s15, 1
    %p106 = por %p104, %p105
    %p108 = scmp.ne.s32.totalorder %s91, %s107
    %p109 = scmp.eq.s32.totalorder %s15, 0
    %p110 = por %p108, %p109
    %p111 = scmp.le.s32.totalorder 1, %s9
    %p112 = scmp.lt.s32.totalorder %s9, 3
    %p113 = pnand %p111, %p112
    %p114 = pneg %p113
    // Predicated region
    $region9: #{feature_extractor.9} parent=5 // pred_check
      _
    $region10: #{feature_extractor.9} parent=5 // pred_check_branch
      %116 = sbr.rel (%p113) target = $region12
    $region11: #{feature_extractor.9} parent=5 // pred_region
      %s117 = ssub.s32 %s9, 1
      // Predicated region
      $region13: #{feature_extractor.9} parent=11 // pred_check
        %p118 = pneg %p56
      $region14: #{feature_extractor.9} parent=11 // pred_check_branch
        %120 = sbr.rel (%p118) target = $region16
      $region15: #{feature_extractor.9} parent=11 // pred_region
        _
      $region16: #{feature_extractor.9} parent=11 // pred_fallthru
        _
      // Predicated region
      $region17: #{feature_extractor.9} parent=11 // pred_check
        %p121 = pneg %p77
      $region18: #{feature_extractor.9} parent=11 // pred_check_branch
        %123 = sbr.rel (%p121) target = $region20
      $region19: #{feature_extractor.9} parent=11 // pred_region
        _
      $region20: #{feature_extractor.9} parent=11 // pred_fallthru
        _
    $region12: #{feature_extractor.9} parent=5 // pred_fallthru
      _
    %p124 = scmp.lt.s32.totalorder %s9, 2
    // Predicated region
    $region21: #{feature_extractor.9} parent=5 // pred_check
      %p125 = pneg %p124
    $region22: #{feature_extractor.9} parent=5 // pred_check_branch
      %127 = sbr.rel (%p125) target = $region24
    $region23: #{feature_extractor.9} parent=5 // pred_region
      // Predicated region
      $region25: #{feature_extractor.9} parent=23 // pred_check
        %p128 = pneg %p29
      $region26: #{feature_extractor.9} parent=23 // pred_check_branch
        %130 = sbr.rel (%p128) target = $region28
      $region27: #{feature_extractor.9} parent=23 // pred_region
        %s131 = smul.u32 29, %s9
        %p132 = scmp.lt.s32.totalorder %s131, 57
        %s133 = scalar_select %p132, %s131, 57
        %s134 = smul.addr %s133, 4
        %s135 = scalar_lea.vmem %s0, %s134
        %s136 = smul.u32 29, %s9
      $region28: #{feature_extractor.9} parent=23 // pred_fallthru
        _
    $region24: #{feature_extractor.9} parent=5 // pred_fallthru
      _
    %p137 = scmp.le.s32.totalorder 1, %s9
    %p138 = scmp.lt.s32.totalorder %s9, 3
    %p139 = pnand %p137, %p138
    %p140 = pneg %p139
    // Predicated region
    $region29: #{feature_extractor.9} parent=5 // pred_check
      _
    $region30: #{feature_extractor.9} parent=5 // pred_check_branch
      %142 = sbr.rel (%p139) target = $region32
    $region31: #{feature_extractor.9} parent=5 // pred_region
      %s143 = ssub.s32 %s9, 1
      %s144 = smul.u32 29, %s14
      %p145 = scmp.lt.s32.totalorder %s144, 57
      %s146 = scalar_select %p145, %s144, 57
      %s147 = smul.addr %s146, 4
      %s148 = scalar_lea.vmem %s0, %s147
      %p149 = pneg %p35
      %p150 = pneg %p32
      %p151 = pneg %p56
      %p152 = pneg %p53
      %p153 = pneg %p77
      %p154 = pneg %p74
      %p155 = pneg %p103
      %p156 = pneg %p100
      %s157 = smul.u32 29, %s14
      %p158 = scmp.lt.s32.totalorder %s157, 57
      %s159 = scalar_select %p158, %s157, 57
      %s160 = smul.addr %s159, 4
      %s161 = scalar_lea.vmem %s3, %s160
      %s162 = smul.u32 29, %s14
      %p163 = scmp.lt.s32.totalorder %s162, 57
      %s164 = scalar_select %p163, %s162, 57
      %s165 = smul.addr %s164, 4
      %s166 = scalar_lea.vmem %s0, %s165
      %s167 = smul.u32 29, %s14
      %s168 = smul.u32 29, %s14
      %p169 = scmp.lt.s32.totalorder %s168, 57
      %s170 = scalar_select %p169, %s168, 57
      %s171 = smul.addr %s170, 4
      %s172 = scalar_lea.vmem %s3, %s171
      %s173 = smul.u32 29, %s14
      %v175 = vld [vmem:[%s166] sm:$0xf]
      %v176 = vld [vmem:[%s166 + $0x4] sm:$0xf]
      %v177 = vld [vmem:[%s166 + $0x8] sm:$0xf]
      %v178 = vld [vmem:[%s166 + $0xc] sm:$0xf]
      %v179 = vld [vmem:[%s166 + $0x10] sm:$0xf]
      %v180 = vld [vmem:[%s166 + $0x14] sm:$0xf]
      %v181 = vld [vmem:[%s166 + $0x18] sm:$0xf]
      %v182 = vld [vmem:[%s166 + $0x1c] sm:$0xf]
      %v183 = vld [vmem:[%s166 + $0x20] sm:$0xf]
      %v184 = vld [vmem:[%s166 + $0x24] sm:$0xf]
      %v185 = vld [vmem:[%s166 + $0x28] sm:$0xf]
      %v186 = vld [vmem:[%s166 + $0x2c] sm:$0xf]
      %v187 = vld [vmem:[%s166 + $0x30] sm:$0xf]
      %v188 = vld [vmem:[%s166 + $0x34] sm:$0xf]
      %v189 = vld [vmem:[%s166 + $0x38] sm:$0xf]
      %v190 = vld [vmem:[%s166 + $0x3c] sm:$0xf]
      %v191 = vld [vmem:[%s166 + $0x40] sm:$0xf]
      %v192 = vld [vmem:[%s166 + $0x44] sm:$0xf]
      %v193 = vld [vmem:[%s166 + $0x48] sm:$0xf]
      %v194 = vld [vmem:[%s166 + $0x4c] sm:$0xf]
      %v195 = vld [vmem:[%s166 + $0x50] sm:$0xf]
      %v196 = vld [vmem:[%s166 + $0x54] sm:$0xf]
      %v197 = vld [vmem:[%s166 + $0x58] sm:$0xf]
      %v198 = vld [vmem:[%s166 + $0x5c] sm:$0xf]
      %v199 = vld [vmem:[%s166 + $0x60] sm:$0xf]
      %v200 = vld [vmem:[%s166 + $0x64] sm:$0xf]
      %v201 = vld [vmem:[%s166 + $0x68] sm:$0xf]
      %v202 = vld [vmem:[%s166 + $0x6c] sm:$0xf]
      %v203 = vld [vmem:[%s166 + $0x70] sm:$0xf]
      %v204 = vld [vmem:[%s1] sm:$0xf]
      %v205 = vld [vmem:[%s1 + $0x4] sm:$0xf]
      %v206 = vld [vmem:[%s1 + $0x8] sm:$0xf]
      %v207 = vld [vmem:[%s1 + $0xc] sm:$0xf]
      %v208 = vld [vmem:[%s1 + $0x10] sm:$0xf]
      %v209 = vld [vmem:[%s1 + $0x14] sm:$0xf]
      %v210 = vld [vmem:[%s1 + $0x18] sm:$0xf]
      %v211 = vld [vmem:[%s1 + $0x1c] sm:$0xf]
      %v212 = vld [vmem:[%s1 + $0x20] sm:$0xf]
      %v213 = vld [vmem:[%s2] sm:$0x1]
      %v215 = vlaneseq
      %v216 = vshrl.u32 %v215, 7
      %v217 = vsub.s32 0, %v216
      %v218 = vrot.slane %v213, %v217
      %v249 = vunpack.c.l.b16 %v175
      %v250 = vunpack.c.l.b16 %v176
      %v251 = vunpack.c.l.b16 %v177
      %v252 = vunpack.c.l.b16 %v178
      %v253 = vunpack.c.l.b16 %v179
      %v254 = vunpack.c.l.b16 %v180
      %v255 = vunpack.c.l.b16 %v181
      %v256 = vunpack.c.l.b16 %v182
      %v257 = vunpack.c.l.b16 %v183
      %v258 = vunpack.c.l.b16 %v184
      %v259 = vunpack.c.l.b16 %v185
      %v260 = vunpack.c.l.b16 %v186
      %v261 = vunpack.c.l.b16 %v187
      %v262 = vunpack.c.l.b16 %v188
      %v263 = vunpack.c.l.b16 %v189
      %v264 = vunpack.c.l.b16 %v190
      %v265 = vunpack.c.l.b16 %v191
      %v266 = vunpack.c.l.b16 %v192
      %v267 = vunpack.c.l.b16 %v193
      %v268 = vunpack.c.l.b16 %v194
      %v269 = vunpack.c.l.b16 %v195
      %v270 = vunpack.c.l.b16 %v196
      %v271 = vunpack.c.l.b16 %v197
      %v272 = vunpack.c.l.b16 %v198
      %v273 = vunpack.c.l.b16 %v199
      %v274 = vunpack.c.l.b16 %v200
      %v275 = vunpack.c.l.b16 %v201
      %v276 = vunpack.c.l.b16 %v202
      %v277 = vunpack.c.l.b16 %v203
      %v278 = vpack.c.b16 %v250, %v249
      %v279 = vpack.c.b16 %v252, %v251
      %v280 = vpack.c.b16 %v254, %v253
      %v281 = vpack.c.b16 %v256, %v255
      %v282 = vpack.c.b16 %v258, %v257
      %v283 = vpack.c.b16 %v260, %v259
      %v284 = vpack.c.b16 %v262, %v261
      %v285 = vpack.c.b16 %v264, %v263
      %v286 = vpack.c.b16 %v266, %v265
      %v287 = vpack.c.b16 %v268, %v267
      %v288 = vpack.c.b16 %v270, %v269
      %v289 = vpack.c.b16 %v272, %v271
      %v290 = vpack.c.b16 %v274, %v273
      %v291 = vpack.c.b16 %v276, %v275
      %v292 = vpack.c.b16 %v277, %v277
      %v302 = vunpack.c.l.b16 %v204
      %v303 = vunpack.c.l.b16 %v205
      %v304 = vunpack.c.l.b16 %v206
      %v305 = vunpack.c.l.b16 %v207
      %v306 = vunpack.c.l.b16 %v208
      %v307 = vunpack.c.l.b16 %v209
      %v308 = vunpack.c.l.b16 %v210
      %v309 = vunpack.c.l.b16 %v211
      %v310 = vunpack.c.l.b16 %v212
      %v311 = vpack.c.b16 %v303, %v302
      %v312 = vpack.c.b16 %v305, %v304
      %v313 = vpack.c.b16 %v307, %v306
      %v314 = vpack.c.b16 %v309, %v308
      %v315 = vpack.c.b16 %v310, %v310
      %vm320 = vcmask 588800
      %v322 = vsel %vm320, %v278, 0
      %v325 = vsel %vm320, %v279, 0
      %v328 = vsel %vm320, %v280, 0
      %v331 = vsel %vm320, %v281, 0
      %v334 = vsel %vm320, %v282, 0
      %v337 = vsel %vm320, %v283, 0
      %v340 = vsel %vm320, %v284, 0
      %v343 = vsel %vm320, %v285, 0
      %v346 = vsel %vm320, %v286, 0
      %v349 = vsel %vm320, %v287, 0
      %v352 = vsel %vm320, %v288, 0
      %v355 = vsel %vm320, %v289, 0
      %v358 = vsel %vm320, %v290, 0
      %v361 = vsel %vm320, %v291, 0
      %v364 = vsel %vm320, %v292, 0
      %vm366 = vcmask 1043456
      %v368 = vsel %vm366, %v315, 0
      %370 = vmatprep.subr.bf16.mxu0 0
      %371 = vmatpush1.bf16.msra.mxu0 0
      %372 = vmatprep.subr.bf16.mxu0 0
      %373 = vmatpush1.bf16.msra.mxu0 0
      %374 = vmatprep.subr.bf16.mxu0 0
      %375 = vmatpush1.bf16.msra.mxu0 0
      %376 = vmatprep.subr.bf16.mxu0 0
      %377 = vmatpush1.bf16.msra.mxu0 %v368
      %378 = vmatprep.subr.bf16.mxu0 0
      %379 = vmatpush1.bf16.msra.mxu0 %v314
      %380 = vmatprep.subr.bf16.mxu0 0
      %381 = vmatpush1.bf16.msra.mxu0 %v313
      %382 = vmatprep.subr.bf16.mxu0 0
      %383 = vmatpush1.bf16.msra.mxu0 %v312
      %384 = vmatprep.subr.bf16.mxu0 0
      %385 = vmatpush1.bf16.msra.mxu0 %v311
      %386 = vmatprep.subr.bf16.mxu0 0
      %387 = vmatpush2.bf16.msra.mxu0 0
      %388 = vmatprep.subr.bf16.mxu0 0
      %389 = vmatpush2.bf16.msra.mxu0 0
      %390 = vmatprep.subr.bf16.mxu0 0
      %391 = vmatpush2.bf16.msra.mxu0 0
      %392 = vmatprep.subr.bf16.mxu0 0
      %393 = vmatpush2.bf16.msra.mxu0 0
      %394 = vmatprep.subr.bf16.mxu0 0
      %395 = vmatpush2.bf16.msra.mxu0 0
      %396 = vmatprep.subr.bf16.mxu0 0
      %397 = vmatpush2.bf16.msra.mxu0 0
      %398 = vmatprep.subr.bf16.mxu0 0
      %399 = vmatpush2.bf16.msra.mxu0 0
      %400 = vmatprep.subr.bf16.mxu0 0
      %401 = vmatpush2.bf16.msra.mxu0 0
      %402 = vmatprep.mubr.bf16.mxu0 0
      %403 = vmatmul.mubr.bf16.gmra.mxu0 %v322
      %v404 = vpop.f32.mrf.mxu0
      %v405 = vadd.f32 %v218, %v404
      %v406 = vpop.f32.mrf.mxu0
      %v407 = vpop.f32.mrf.mxu0
      %v408 = vadd.f32 %v218, %v407
      %v409 = vpop.f32.mrf.mxu0
      %410 = vmatprep.mubr.bf16.mxu0 0
      %411 = vmatmul.mubr.bf16.gmra.mxu0 %v325
      %v412 = vpop.f32.mrf.mxu0
      %v413 = vadd.f32 %v218, %v412
      %v414 = vpop.f32.mrf.mxu0
      %v415 = vpop.f32.mrf.mxu0
      %v416 = vadd.f32 %v218, %v415
      %v417 = vpop.f32.mrf.mxu0
      %418 = vmatprep.mubr.bf16.mxu0 0
      %419 = vmatmul.mubr.bf16.gmra.mxu0 %v328
      %v420 = vpop.f32.mrf.mxu0
      %v421 = vadd.f32 %v218, %v420
      %v422 = vpop.f32.mrf.mxu0
      %v423 = vpop.f32.mrf.mxu0
      %v424 = vadd.f32 %v218, %v423
      %v425 = vpop.f32.mrf.mxu0
      %426 = vmatprep.mubr.bf16.mxu0 0
      %427 = vmatmul.mubr.bf16.gmra.mxu0 %v331
      %v428 = vpop.f32.mrf.mxu0
      %v429 = vadd.f32 %v218, %v428
      %v430 = vpop.f32.mrf.mxu0
      %v431 = vpop.f32.mrf.mxu0
      %v432 = vadd.f32 %v218, %v431
      %v433 = vpop.f32.mrf.mxu0
      %434 = vmatprep.mubr.bf16.mxu0 0
      %435 = vmatmul.mubr.bf16.gmra.mxu0 %v334
      %v436 = vpop.f32.mrf.mxu0
      %v437 = vadd.f32 %v218, %v436
      %v438 = vpop.f32.mrf.mxu0
      %v439 = vpop.f32.mrf.mxu0
      %v440 = vadd.f32 %v218, %v439
      %v441 = vpop.f32.mrf.mxu0
      %442 = vmatprep.mubr.bf16.mxu0 0
      %443 = vmatmul.mubr.bf16.gmra.mxu0 %v337
      %v444 = vpop.f32.mrf.mxu0
      %v445 = vadd.f32 %v218, %v444
      %v446 = vpop.f32.mrf.mxu0
      %v447 = vpop.f32.mrf.mxu0
      %v448 = vadd.f32 %v218, %v447
      %v449 = vpop.f32.mrf.mxu0
      %450 = vmatprep.mubr.bf16.mxu0 0
      %451 = vmatmul.mubr.bf16.gmra.mxu0 %v340
      %v452 = vpop.f32.mrf.mxu0
      %v453 = vadd.f32 %v218, %v452
      %v454 = vpop.f32.mrf.mxu0
      %v455 = vpop.f32.mrf.mxu0
      %v456 = vadd.f32 %v218, %v455
      %v457 = vpop.f32.mrf.mxu0
      %458 = vmatprep.mubr.bf16.mxu0 0
      %459 = vmatmul.mubr.bf16.gmra.mxu0 %v343
      %v460 = vpop.f32.mrf.mxu0
      %v461 = vadd.f32 %v218, %v460
      %v462 = vpop.f32.mrf.mxu0
      %v463 = vpop.f32.mrf.mxu0
      %v464 = vadd.f32 %v218, %v463
      %v465 = vpop.f32.mrf.mxu0
      %466 = vmatprep.mubr.bf16.mxu0 0
      %467 = vmatmul.mubr.bf16.gmra.mxu0 %v346
      %v468 = vpop.f32.mrf.mxu0
      %v469 = vadd.f32 %v218, %v468
      %v470 = vpop.f32.mrf.mxu0
      %v471 = vpop.f32.mrf.mxu0
      %v472 = vadd.f32 %v218, %v471
      %v473 = vpop.f32.mrf.mxu0
      %474 = vmatprep.mubr.bf16.mxu0 0
      %475 = vmatmul.mubr.bf16.gmra.mxu0 %v349
      %v476 = vpop.f32.mrf.mxu0
      %v477 = vadd.f32 %v218, %v476
      %v478 = vpop.f32.mrf.mxu0
      %v479 = vpop.f32.mrf.mxu0
      %v480 = vadd.f32 %v218, %v479
      %v481 = vpop.f32.mrf.mxu0
      %482 = vmatprep.mubr.bf16.mxu0 0
      %483 = vmatmul.mubr.bf16.gmra.mxu0 %v352
      %v484 = vpop.f32.mrf.mxu0
      %v485 = vadd.f32 %v218, %v484
      %v486 = vpop.f32.mrf.mxu0
      %v487 = vpop.f32.mrf.mxu0
      %v488 = vadd.f32 %v218, %v487
      %v489 = vpop.f32.mrf.mxu0
      %490 = vmatprep.mubr.bf16.mxu0 0
      %491 = vmatmul.mubr.bf16.gmra.mxu0 %v355
      %v492 = vpop.f32.mrf.mxu0
      %v493 = vadd.f32 %v218, %v492
      %v494 = vpop.f32.mrf.mxu0
      %v495 = vpop.f32.mrf.mxu0
      %v496 = vadd.f32 %v218, %v495
      %v497 = vpop.f32.mrf.mxu0
      %498 = vmatprep.mubr.bf16.mxu0 0
      %499 = vmatmul.mubr.bf16.gmra.mxu0 %v358
      %v500 = vpop.f32.mrf.mxu0
      %v501 = vadd.f32 %v218, %v500
      %v502 = vpop.f32.mrf.mxu0
      %v503 = vpop.f32.mrf.mxu0
      %v504 = vadd.f32 %v218, %v503
      %v505 = vpop.f32.mrf.mxu0
      %506 = vmatprep.mubr.bf16.mxu0 0
      %507 = vmatmul.mubr.bf16.gmra.mxu0 %v361
      %v508 = vpop.f32.mrf.mxu0
      %v509 = vadd.f32 %v218, %v508
      %v510 = vpop.f32.mrf.mxu0
      %v511 = vpop.f32.mrf.mxu0
      %v512 = vadd.f32 %v218, %v511
      %v513 = vpop.f32.mrf.mxu0
      %514 = vmatprep.mubr.bf16.mxu0 0
      %515 = vmatmul.mubr.bf16.gmra.mxu0 %v364
      %v516 = vpop.f32.mrf.mxu0
      %v517 = vadd.f32 %v218, %v516
      %v518 = vpop.f32.mrf.mxu0
      %v519 = vpop.f32.mrf.mxu0
      %v520 = vpop.f32.mrf.mxu0
      %521 = vdwg.mxu0
      %v522 = vmax.f32 %v405, 0.0
      %v523 = vmax.f32 %v408, 0.0
      %v524 = vmax.f32 %v413, 0.0
      %v525 = vmax.f32 %v416, 0.0
      %v526 = vmax.f32 %v421, 0.0
      %v527 = vmax.f32 %v424, 0.0
      %v528 = vmax.f32 %v429, 0.0
      %v529 = vmax.f32 %v432, 0.0
      %v530 = vmax.f32 %v437, 0.0
      %v531 = vmax.f32 %v440, 0.0
      %v532 = vmax.f32 %v445, 0.0
      %v533 = vmax.f32 %v448, 0.0
      %v534 = vmax.f32 %v453, 0.0
      %v535 = vmax.f32 %v456, 0.0
      %v536 = vmax.f32 %v461, 0.0
      %v537 = vmax.f32 %v464, 0.0
      %v538 = vmax.f32 %v469, 0.0
      %v539 = vmax.f32 %v472, 0.0
      %v540 = vmax.f32 %v477, 0.0
      %v541 = vmax.f32 %v480, 0.0
      %v542 = vmax.f32 %v485, 0.0
      %v543 = vmax.f32 %v488, 0.0
      %v544 = vmax.f32 %v493, 0.0
      %v545 = vmax.f32 %v496, 0.0
      %v546 = vmax.f32 %v501, 0.0
      %v547 = vmax.f32 %v504, 0.0
      %v548 = vmax.f32 %v509, 0.0
      %v549 = vmax.f32 %v512, 0.0
      %v550 = vmax.f32 %v517, 0.0
      %v551 = vpack.c.bf16 %v523, %v522
      %v552 = vpack.c.bf16 %v525, %v524
      %v553 = vpack.c.bf16 %v527, %v526
      %v554 = vpack.c.bf16 %v529, %v528
      %v555 = vpack.c.bf16 %v531, %v530
      %v556 = vpack.c.bf16 %v533, %v532
      %v557 = vpack.c.bf16 %v535, %v534
      %v558 = vpack.c.bf16 %v537, %v536
      %v559 = vpack.c.bf16 %v539, %v538
      %v560 = vpack.c.bf16 %v541, %v540
      %v561 = vpack.c.bf16 %v543, %v542
      %v562 = vpack.c.bf16 %v545, %v544
      %v563 = vpack.c.bf16 %v547, %v546
      %v564 = vpack.c.bf16 %v549, %v548
      %v565 = vpack.c.bf16 %v550, %v550
      %v581 = vunpack.c.l.b16 %v551
      %v582 = vunpack.c.h.b16 %v551
      %v583 = vunpack.c.l.b16 %v552
      %v584 = vunpack.c.h.b16 %v552
      %v585 = vunpack.c.l.b16 %v553
      %v586 = vunpack.c.h.b16 %v553
      %v587 = vunpack.c.l.b16 %v554
      %v588 = vunpack.c.h.b16 %v554
      %v589 = vunpack.c.l.b16 %v555
      %v590 = vunpack.c.h.b16 %v555
      %v591 = vunpack.c.l.b16 %v556
      %v592 = vunpack.c.h.b16 %v556
      %v593 = vunpack.c.l.b16 %v557
      %v594 = vunpack.c.h.b16 %v557
      %v595 = vunpack.c.l.b16 %v558
      %v596 = vunpack.c.h.b16 %v558
      %v597 = vunpack.c.l.b16 %v559
      %v598 = vunpack.c.h.b16 %v559
      %v599 = vunpack.c.l.b16 %v560
      %v600 = vunpack.c.h.b16 %v560
      %v601 = vunpack.c.l.b16 %v561
      %v602 = vunpack.c.h.b16 %v561
      %v603 = vunpack.c.l.b16 %v562
      %v604 = vunpack.c.h.b16 %v562
      %v605 = vunpack.c.l.b16 %v563
      %v606 = vunpack.c.h.b16 %v563
      %v607 = vunpack.c.l.b16 %v564
      %v608 = vunpack.c.h.b16 %v564
      %v609 = vunpack.c.l.b16 %v565
      %v610 = vpack.c.b16 %v581, %v581
      %v611 = vpack.c.b16 %v582, %v582
      %v612 = vpack.c.b16 %v583, %v583
      %v613 = vpack.c.b16 %v584, %v584
      %v614 = vpack.c.b16 %v585, %v585
      %v615 = vpack.c.b16 %v586, %v586
      %v616 = vpack.c.b16 %v587, %v587
      %v617 = vpack.c.b16 %v588, %v588
      %v618 = vpack.c.b16 %v589, %v589
      %v619 = vpack.c.b16 %v590, %v590
      %v620 = vpack.c.b16 %v591, %v591
      %v621 = vpack.c.b16 %v592, %v592
      %v622 = vpack.c.b16 %v593, %v593
      %v623 = vpack.c.b16 %v594, %v594
      %v624 = vpack.c.b16 %v595, %v595
      %v625 = vpack.c.b16 %v596, %v596
      %v626 = vpack.c.b16 %v597, %v597
      %v627 = vpack.c.b16 %v598, %v598
      %v628 = vpack.c.b16 %v599, %v599
      %v629 = vpack.c.b16 %v600, %v600
      %v630 = vpack.c.b16 %v601, %v601
      %v631 = vpack.c.b16 %v602, %v602
      %v632 = vpack.c.b16 %v603, %v603
      %v633 = vpack.c.b16 %v604, %v604
      %v634 = vpack.c.b16 %v605, %v605
      %v635 = vpack.c.b16 %v606, %v606
      %v636 = vpack.c.b16 %v607, %v607
      %v637 = vpack.c.b16 %v608, %v608
      %v638 = vpack.c.b16 %v609, %v609
      %668 = vst [vmem:[%s172] sm:$0xf] %v610
      %669 = vst [vmem:[%s172 + $0x4] sm:$0xf] %v611
      %670 = vst [vmem:[%s172 + $0x8] sm:$0xf] %v612
      %671 = vst [vmem:[%s172 + $0xc] sm:$0xf] %v613
      %672 = vst [vmem:[%s172 + $0x10] sm:$0xf] %v614
      %673 = vst [vmem:[%s172 + $0x14] sm:$0xf] %v615
      %674 = vst [vmem:[%s172 + $0x18] sm:$0xf] %v616
      %675 = vst [vmem:[%s172 + $0x1c] sm:$0xf] %v617
      %676 = vst [vmem:[%s172 + $0x20] sm:$0xf] %v618
      %677 = vst [vmem:[%s172 + $0x24] sm:$0xf] %v619
      %678 = vst [vmem:[%s172 + $0x28] sm:$0xf] %v620
      %679 = vst [vmem:[%s172 + $0x2c] sm:$0xf] %v621
      %680 = vst [vmem:[%s172 + $0x30] sm:$0xf] %v622
      %681 = vst [vmem:[%s172 + $0x34] sm:$0xf] %v623
      %682 = vst [vmem:[%s172 + $0x38] sm:$0xf] %v624
      %683 = vst [vmem:[%s172 + $0x3c] sm:$0xf] %v625
      %684 = vst [vmem:[%s172 + $0x40] sm:$0xf] %v626
      %685 = vst [vmem:[%s172 + $0x44] sm:$0xf] %v627
      %686 = vst [vmem:[%s172 + $0x48] sm:$0xf] %v628
      %687 = vst [vmem:[%s172 + $0x4c] sm:$0xf] %v629
      %688 = vst [vmem:[%s172 + $0x50] sm:$0xf] %v630
      %689 = vst [vmem:[%s172 + $0x54] sm:$0xf] %v631
      %690 = vst [vmem:[%s172 + $0x58] sm:$0xf] %v632
      %691 = vst [vmem:[%s172 + $0x5c] sm:$0xf] %v633
      %692 = vst [vmem:[%s172 + $0x60] sm:$0xf] %v634
      %693 = vst [vmem:[%s172 + $0x64] sm:$0xf] %v635
      %694 = vst [vmem:[%s172 + $0x68] sm:$0xf] %v636
      %695 = vst [vmem:[%s172 + $0x6c] sm:$0xf] %v637
      %696 = vst [vmem:[%s172 + $0x70] sm:$0xf] %v638
      %s697 = smul.u32 29, %s14
      %p698 = scmp.lt.s32.totalorder %s697, 57
      %s699 = scalar_select %p698, %s697, 57
      %s700 = smul.addr %s699, 4
      %s701 = scalar_lea.vmem %s3, %s700
      // Predicated region
      $region33: #{feature_extractor.9} parent=31 // pred_check
        %p702 = pneg %p100
      $region34: #{feature_extractor.9} parent=31 // pred_check_branch
        %704 = sbr.rel (%p702) target = $region36
      $region35: #{feature_extractor.9} parent=31 // pred_region
        %s705 = smul.u32 29, %s14
      $region36: #{feature_extractor.9} parent=31 // pred_fallthru
        _
    $region32: #{feature_extractor.9} parent=5 // pred_fallthru
      _
    %p706 = scmp.le.s32.totalorder 2, %s9
    // Predicated region
    $region37: #{feature_extractor.9} parent=5 // pred_check
      %p707 = pneg %p706
    $region38: #{feature_extractor.9} parent=5 // pred_check_branch
      %709 = sbr.rel (%p707) target = $region40
    $region39: #{feature_extractor.9} parent=5 // pred_region
      %s710 = ssub.s32 %s9, 2
      // Predicated region
      $region41: #{feature_extractor.9} parent=39 // pred_check
        %p711 = pneg %p106
      $region42: #{feature_extractor.9} parent=39 // pred_check_branch
        %713 = sbr.rel (%p711) target = $region44
      $region43: #{feature_extractor.9} parent=39 // pred_region
        %s714 = smul.u32 29, %s15
        %p715 = scmp.lt.s32.totalorder %s714, 57
        %s716 = scalar_select %p715, %s714, 57
        %s717 = smul.addr %s716, 4
        %s718 = scalar_lea.vmem %s3, %s717
      $region44: #{feature_extractor.9} parent=39 // pred_fallthru
        _
    $region40: #{feature_extractor.9} parent=5 // pred_fallthru
      _
  $region6: #{feature_extractor.9} parent=0 // loop_footer
    %s13 = sadd.s32 1, %s9
  $region7: #{feature_extractor.9} parent=0 // loop_footer_branch
    %8 = sbr.rel target = $region3
  $region8: #{feature_extractor.9} parent=0 // loop_exit
    _

// kernel: feature_extractor.11
$region0: #{feature_extractor.11}
  #allocation0 [shape = 'u32[]', space=smem, size = 0x4, offset = 0x4, fixed_abs, tag = 'smem constant byte address 0x4 - core index']
  #allocation1 [shape = 'u32[144,128]{1,0:T(1,128)}', space=vmem, size = 0x12000, scoped, tag = 'internal scratch']
  %s0 = inlined_call_operand.vmem [shape: bf16[912,128], index: 0, kind: input, shape index: {}]
  %s1 = inlined_call_operand.vmem [shape: bf16[464,128], index: 1, kind: input, shape index: {}]
  %s2 = inlined_call_operand.vmem [shape: bf16[464,128], index: 2, kind: input, shape index: {}]
  %s3 = inlined_call_operand.vmem [shape: f32[8,128], index: 3, kind: output, shape index: {}]
  %s4 = sld [smem:[#allocation0]]
  $region22: #{feature_extractor.11} parent=0
    _
  %s6 = ssub.s32 1, %s4
  %s7 = scalar_select 0, %s6, %s4
  // Predicated region
  $region2: #{feature_extractor.11} parent=0 // pred_check
    _
  $region3: #{feature_extractor.11} parent=0 // pred_check_branch
    %9 = sbr.rel (0) target = $region5
  $region4: #{feature_extractor.11} parent=0 // pred_region
    _
  $region5: #{feature_extractor.11} parent=0 // pred_fallthru
    _
  // Predicated region
  $region6: #{feature_extractor.11} parent=0 // pred_check
    _
  $region7: #{feature_extractor.11} parent=0 // pred_check_branch
    %11 = sbr.rel (0) target = $region9
  $region8: #{feature_extractor.11} parent=0 // pred_region
    _
  $region9: #{feature_extractor.11} parent=0 // pred_fallthru
    _
  // Predicated region
  $region10: #{feature_extractor.11} parent=0 // pred_check
    _
  $region11: #{feature_extractor.11} parent=0 // pred_check_branch
    %13 = sbr.rel (0) target = $region13
  $region12: #{feature_extractor.11} parent=0 // pred_region
    _
  $region13: #{feature_extractor.11} parent=0 // pred_fallthru
    _
  %v14 = vld [vmem:[%s0] sm:$0xf]
  %v15 = vld [vmem:[%s0 + $0x4] sm:$0xf]
  %v16 = vld [vmem:[%s0 + $0x8] sm:$0xf]
  %v17 = vld [vmem:[%s0 + $0xc] sm:$0xf]
  %v18 = vld [vmem:[%s0 + $0x10] sm:$0xf]
  %v19 = vld [vmem:[%s0 + $0x14] sm:$0xf]
  %v20 = vld [vmem:[%s0 + $0x18] sm:$0xf]
  %v21 = vld [vmem:[%s0 + $0x1c] sm:$0xf]
  %v22 = vld [vmem:[%s0 + $0x20] sm:$0xf]
  %v23 = vld [vmem:[%s0 + $0x24] sm:$0xf]
  %v24 = vld [vmem:[%s0 + $0x28] sm:$0xf]
  %v25 = vld [vmem:[%s0 + $0x2c] sm:$0xf]
  %v26 = vld [vmem:[%s0 + $0x30] sm:$0xf]
  %v27 = vld [vmem:[%s0 + $0x34] sm:$0xf]
  %v28 = vld [vmem:[%s0 + $0x38] sm:$0xf]
  %v29 = vld [vmem:[%s0 + $0x3c] sm:$0xf]
  %v30 = vld [vmem:[%s0 + $0x40] sm:$0xf]
  %v31 = vld [vmem:[%s0 + $0x44] sm:$0xf]
  %v32 = vld [vmem:[%s0 + $0x48] sm:$0xf]
  %v33 = vld [vmem:[%s0 + $0x4c] sm:$0xf]
  %v34 = vld [vmem:[%s0 + $0x50] sm:$0xf]
  %v35 = vld [vmem:[%s0 + $0x54] sm:$0xf]
  %v36 = vld [vmem:[%s0 + $0x58] sm:$0xf]
  %v37 = vld [vmem:[%s0 + $0x5c] sm:$0xf]
  %v38 = vld [vmem:[%s0 + $0x60] sm:$0xf]
  %v39 = vld [vmem:[%s0 + $0x64] sm:$0xf]
  %v40 = vld [vmem:[%s0 + $0x68] sm:$0xf]
  %v41 = vld [vmem:[%s0 + $0x6c] sm:$0xf]
  %v42 = vld [vmem:[%s0 + $0x70] sm:$0x1]
  %v43 = vunpack.c.l.bf16 %v14
  %v44 = vunpack.c.l.bf16 %v15
  %v45 = vunpack.c.l.bf16 %v16
  %v46 = vunpack.c.l.bf16 %v17
  %v47 = vunpack.c.l.bf16 %v18
  %v48 = vunpack.c.l.bf16 %v19
  %v49 = vunpack.c.l.bf16 %v20
  %v50 = vunpack.c.l.bf16 %v21
  %v51 = vunpack.c.l.bf16 %v22
  %v52 = vunpack.c.l.bf16 %v23
  %v53 = vunpack.c.l.bf16 %v24
  %v54 = vunpack.c.l.bf16 %v25
  %v55 = vunpack.c.l.bf16 %v26
  %v56 = vunpack.c.l.bf16 %v27
  %v57 = vunpack.c.l.bf16 %v28
  %v58 = vunpack.c.l.bf16 %v29
  %v59 = vunpack.c.l.bf16 %v30
  %v60 = vunpack.c.l.bf16 %v31
  %v61 = vunpack.c.l.bf16 %v32
  %v62 = vunpack.c.l.bf16 %v33
  %v63 = vunpack.c.l.bf16 %v34
  %v64 = vunpack.c.l.bf16 %v35
  %v65 = vunpack.c.l.bf16 %v36
  %v66 = vunpack.c.l.bf16 %v37
  %v67 = vunpack.c.l.bf16 %v38
  %v68 = vunpack.c.l.bf16 %v39
  %v69 = vunpack.c.l.bf16 %v40
  %v70 = vunpack.c.l.bf16 %v41
  %v71 = vunpack.c.l.bf16 %v42
  %v72 = vadd.f32 %v43, %v44
  %v73 = vadd.f32 %v72, %v45
  %v74 = vadd.f32 %v73, %v46
  %v75 = vadd.f32 %v74, %v47
  %v76 = vadd.f32 %v75, %v48
  %v77 = vadd.f32 %v76, %v49
  %v78 = vadd.f32 %v77, %v50
  %v79 = vadd.f32 %v78, %v51
  %v80 = vadd.f32 %v79, %v52
  %v81 = vadd.f32 %v80, %v53
  %v82 = vadd.f32 %v81, %v54
  %v83 = vadd.f32 %v82, %v55
  %v84 = vadd.f32 %v83, %v56
  %v85 = vadd.f32 %v84, %v57
  %v86 = vadd.f32 %v85, %v58
  %v87 = vadd.f32 %v86, %v59
  %v88 = vadd.f32 %v87, %v60
  %v89 = vadd.f32 %v88, %v61
  %v90 = vadd.f32 %v89, %v62
  %v91 = vadd.f32 %v90, %v63
  %v92 = vadd.f32 %v91, %v64
  %v93 = vadd.f32 %v92, %v65
  %v94 = vadd.f32 %v93, %v66
  %v95 = vadd.f32 %v94, %v67
  %v96 = vadd.f32 %v95, %v68
  %v97 = vadd.f32 %v96, %v69
  %v98 = vadd.f32 %v97, %v70
  %vm99 = vcmask 1040384
  %v100 = vsel %vm99, %v71, 0.0
  %v101 = vadd.f32 %v98, %v100
  %v102 = vrot.slane %v101, 4
  %v103 = vadd.f32 %v101, %v102
  %v104 = vrot.slane %v103, 2
  %v105 = vadd.f32 %v103, %v104
  %v106 = vrot.slane %v105, 1
  %v107 = vadd.f32 %v105, %v106
  %v108 = vmul.f32 %v107, 0.0044444446
  %v109 = vld [vmem:[%s1] sm:$0xf]
  %v110 = vld [vmem:[%s1 + $0x4] sm:$0xf]
  %v111 = vld [vmem:[%s1 + $0x8] sm:$0xf]
  %v112 = vld [vmem:[%s1 + $0xc] sm:$0xf]
  %v113 = vld [vmem:[%s1 + $0x10] sm:$0xf]
  %v114 = vld [vmem:[%s1 + $0x14] sm:$0xf]
  %v115 = vld [vmem:[%s1 + $0x18] sm:$0xf]
  %v116 = vld [vmem:[%s1 + $0x1c] sm:$0xf]
  %v117 = vld [vmem:[%s1 + $0x20] sm:$0xf]
  %v118 = vld [vmem:[%s1 + $0x24] sm:$0xf]
  %v119 = vld [vmem:[%s1 + $0x28] sm:$0xf]
  %v120 = vld [vmem:[%s1 + $0x2c] sm:$0xf]
  %v121 = vld [vmem:[%s1 + $0x30] sm:$0xf]
  %v122 = vld [vmem:[%s1 + $0x34] sm:$0xf]
  %v123 = vld [vmem:[%s1 + $0x38] sm:$0xf]
  %v124 = vld [vmem:[%s1 + $0x3c] sm:$0xf]
  %v125 = vld [vmem:[%s1 + $0x40] sm:$0xf]
  %v126 = vld [vmem:[%s1 + $0x44] sm:$0xf]
  %v127 = vld [vmem:[%s1 + $0x48] sm:$0xf]
  %v128 = vld [vmem:[%s1 + $0x4c] sm:$0xf]
  %v129 = vld [vmem:[%s1 + $0x50] sm:$0xf]
  %v130 = vld [vmem:[%s1 + $0x54] sm:$0xf]
  %v131 = vld [vmem:[%s1 + $0x58] sm:$0xf]
  %v132 = vld [vmem:[%s1 + $0x5c] sm:$0xf]
  %v133 = vld [vmem:[%s1 + $0x60] sm:$0xf]
  %v134 = vld [vmem:[%s1 + $0x64] sm:$0xf]
  %v135 = vld [vmem:[%s1 + $0x68] sm:$0xf]
  %v136 = vld [vmem:[%s1 + $0x6c] sm:$0xf]
  %v137 = vld [vmem:[%s1 + $0x70] sm:$0x1]
  %v138 = vunpack.c.l.bf16 %v109
  %v139 = vunpack.c.l.bf16 %v110
  %v140 = vunpack.c.l.bf16 %v111
  %v141 = vunpack.c.l.bf16 %v112
  %v142 = vunpack.c.l.bf16 %v113
  %v143 = vunpack.c.l.bf16 %v114
  %v144 = vunpack.c.l.bf16 %v115
  %v145 = vunpack.c.l.bf16 %v116
  %v146 = vunpack.c.l.bf16 %v117
  %v147 = vunpack.c.l.bf16 %v118
  %v148 = vunpack.c.l.bf16 %v119
  %v149 = vunpack.c.l.bf16 %v120
  %v150 = vunpack.c.l.bf16 %v121
  %v151 = vunpack.c.l.bf16 %v122
  %v152 = vunpack.c.l.bf16 %v123
  %v153 = vunpack.c.l.bf16 %v124
  %v154 = vunpack.c.l.bf16 %v125
  %v155 = vunpack.c.l.bf16 %v126
  %v156 = vunpack.c.l.bf16 %v127
  %v157 = vunpack.c.l.bf16 %v128
  %v158 = vunpack.c.l.bf16 %v129
  %v159 = vunpack.c.l.bf16 %v130
  %v160 = vunpack.c.l.bf16 %v131
  %v161 = vunpack.c.l.bf16 %v132
  %v162 = vunpack.c.l.bf16 %v133
  %v163 = vunpack.c.l.bf16 %v134
  %v164 = vunpack.c.l.bf16 %v135
  %v165 = vunpack.c.l.bf16 %v136
  %v166 = vunpack.c.l.bf16 %v137
  %v167 = vadd.f32 %v138, %v139
  %v168 = vadd.f32 %v167, %v140
  %v169 = vadd.f32 %v168, %v141
  %v170 = vadd.f32 %v169, %v142
  %v171 = vadd.f32 %v170, %v143
  %v172 = vadd.f32 %v171, %v144
  %v173 = vadd.f32 %v172, %v145
  %v174 = vadd.f32 %v173, %v146
  %v175 = vadd.f32 %v174, %v147
  %v176 = vadd.f32 %v175, %v148
  %v177 = vadd.f32 %v176, %v149
  %v178 = vadd.f32 %v177, %v150
  %v179 = vadd.f32 %v178, %v151
  %v180 = vadd.f32 %v179, %v152
  %v181 = vadd.f32 %v180, %v153
  %v182 = vadd.f32 %v181, %v154
  %v183 = vadd.f32 %v182, %v155
  %v184 = vadd.f32 %v183, %v156
  %v185 = vadd.f32 %v184, %v157
  %v186 = vadd.f32 %v185, %v158
  %v187 = vadd.f32 %v186, %v159
  %v188 = vadd.f32 %v187, %v160
  %v189 = vadd.f32 %v188, %v161
  %v190 = vadd.f32 %v189, %v162
  %v191 = vadd.f32 %v190, %v163
  %v192 = vadd.f32 %v191, %v164
  %v193 = vadd.f32 %v192, %v165
  %v194 = vsel %vm99, %v166, 0.0
  %v195 = vadd.f32 %v193, %v194
  %v196 = vrot.slane %v195, 4
  %v197 = vadd.f32 %v195, %v196
  %v198 = vrot.slane %v197, 2
  %v199 = vadd.f32 %v197, %v198
  %v200 = vrot.slane %v199, 1
  %v201 = vadd.f32 %v199, %v200
  %v202 = vmul.f32 %v201, 0.0044444446
  %v203 = vld [vmem:[%s2] sm:$0xf]
  %v204 = vld [vmem:[%s2 + $0x4] sm:$0xf]
  %v205 = vld [vmem:[%s2 + $0x8] sm:$0xf]
  %v206 = vld [vmem:[%s2 + $0xc] sm:$0xf]
  %v207 = vld [vmem:[%s2 + $0x10] sm:$0xf]
  %v208 = vld [vmem:[%s2 + $0x14] sm:$0xf]
  %v209 = vld [vmem:[%s2 + $0x18] sm:$0xf]
  %v210 = vld [vmem:[%s2 + $0x1c] sm:$0xf]
  %v211 = vld [vmem:[%s2 + $0x20] sm:$0xf]
  %v212 = vld [vmem:[%s2 + $0x24] sm:$0xf]
  %v213 = vld [vmem:[%s2 + $0x28] sm:$0xf]
  %v214 = vld [vmem:[%s2 + $0x2c] sm:$0xf]
  %v215 = vld [vmem:[%s2 + $0x30] sm:$0xf]
  %v216 = vld [vmem:[%s2 + $0x34] sm:$0xf]
  %v217 = vld [vmem:[%s2 + $0x38] sm:$0xf]
  %v218 = vld [vmem:[%s2 + $0x3c] sm:$0xf]
  %v219 = vld [vmem:[%s2 + $0x40] sm:$0xf]
  %v220 = vld [vmem:[%s2 + $0x44] sm:$0xf]
  %v221 = vld [vmem:[%s2 + $0x48] sm:$0xf]
  %v222 = vld [vmem:[%s2 + $0x4c] sm:$0xf]
  %v223 = vld [vmem:[%s2 + $0x50] sm:$0xf]
  %v224 = vld [vmem:[%s2 + $0x54] sm:$0xf]
  %v225 = vld [vmem:[%s2 + $0x58] sm:$0xf]
  %v226 = vld [vmem:[%s2 + $0x5c] sm:$0xf]
  %v227 = vld [vmem:[%s2 + $0x60] sm:$0xf]
  %v228 = vld [vmem:[%s2 + $0x64] sm:$0xf]
  %v229 = vld [vmem:[%s2 + $0x68] sm:$0xf]
  %v230 = vld [vmem:[%s2 + $0x6c] sm:$0xf]
  %v231 = vld [vmem:[%s2 + $0x70] sm:$0x1]
  %v232 = vunpack.c.l.bf16 %v203
  %v233 = vunpack.c.l.bf16 %v204
  %v234 = vunpack.c.l.bf16 %v205
  %v235 = vunpack.c.l.bf16 %v206
  %v236 = vunpack.c.l.bf16 %v207
  %v237 = vunpack.c.l.bf16 %v208
  %v238 = vunpack.c.l.bf16 %v209
  %v239 = vunpack.c.l.bf16 %v210
  %v240 = vunpack.c.l.bf16 %v211
  %v241 = vunpack.c.l.bf16 %v212
  %v242 = vunpack.c.l.bf16 %v213
  %v243 = vunpack.c.l.bf16 %v214
  %v244 = vunpack.c.l.bf16 %v215
  %v245 = vunpack.c.l.bf16 %v216
  %v246 = vunpack.c.l.bf16 %v217
  %v247 = vunpack.c.l.bf16 %v218
  %v248 = vunpack.c.l.bf16 %v219
  %v249 = vunpack.c.l.bf16 %v220
  %v250 = vunpack.c.l.bf16 %v221
  %v251 = vunpack.c.l.bf16 %v222
  %v252 = vunpack.c.l.bf16 %v223
  %v253 = vunpack.c.l.bf16 %v224
  %v254 = vunpack.c.l.bf16 %v225
  %v255 = vunpack.c.l.bf16 %v226
  %v256 = vunpack.c.l.bf16 %v227
  %v257 = vunpack.c.l.bf16 %v228
  %v258 = vunpack.c.l.bf16 %v229
  %v259 = vunpack.c.l.bf16 %v230
  %v260 = vunpack.c.l.bf16 %v231
  %v261 = vadd.f32 %v232, %v233
  %v262 = vadd.f32 %v261, %v234
  %v263 = vadd.f32 %v262, %v235
  %v264 = vadd.f32 %v263, %v236
  %v265 = vadd.f32 %v264, %v237
  %v266 = vadd.f32 %v265, %v238
  %v267 = vadd.f32 %v266, %v239
  %v268 = vadd.f32 %v267, %v240
  %v269 = vadd.f32 %v268, %v241
  %v270 = vadd.f32 %v269, %v242
  %v271 = vadd.f32 %v270, %v243
  %v272 = vadd.f32 %v271, %v244
  %v273 = vadd.f32 %v272, %v245
  %v274 = vadd.f32 %v273, %v246
  %v275 = vadd.f32 %v274, %v247
  %v276 = vadd.f32 %v275, %v248
  %v277 = vadd.f32 %v276, %v249
  %v278 = vadd.f32 %v277, %v250
  %v279 = vadd.f32 %v278, %v251
  %v280 = vadd.f32 %v279, %v252
  %v281 = vadd.f32 %v280, %v253
  %v282 = vadd.f32 %v281, %v254
  %v283 = vadd.f32 %v282, %v255
  %v284 = vadd.f32 %v283, %v256
  %v285 = vadd.f32 %v284, %v257
  %v286 = vadd.f32 %v285, %v258
  %v287 = vadd.f32 %v286, %v259
  %v288 = vsel %vm99, %v260, 0.0
  %v289 = vadd.f32 %v287, %v288
  %v290 = vrot.slane %v289, 4
  %v291 = vadd.f32 %v289, %v290
  %v292 = vrot.slane %v291, 2
  %v293 = vadd.f32 %v291, %v292
  %v294 = vrot.slane %v293, 1
  %v295 = vadd.f32 %v293, %v294
  %v296 = vmul.f32 %v295, 0.0044444446
  %v297 = vld [vmem:[%s0 + $0xe0] sm:$0xe]
  %v298 = vld [vmem:[%s0 + $0xe4] sm:$0xf]
  %v299 = vld [vmem:[%s0 + $0xe8] sm:$0xf]
  %v300 = vld [vmem:[%s0 + $0xec] sm:$0xf]
  %v301 = vld [vmem:[%s0 + $0xf0] sm:$0xf]
  %v302 = vld [vmem:[%s0 + $0xf4] sm:$0xf]
  %v303 = vld [vmem:[%s0 + $0xf8] sm:$0xf]
  %v304 = vld [vmem:[%s0 + $0xfc] sm:$0xf]
  %v305 = vld [vmem:[%s0 + $0x100] sm:$0xf]
  %v306 = vld [vmem:[%s0 + $0x104] sm:$0xf]
  %v307 = vld [vmem:[%s0 + $0x108] sm:$0xf]
  %v308 = vld [vmem:[%s0 + $0x10c] sm:$0xf]
  %v309 = vld [vmem:[%s0 + $0x110] sm:$0xf]
  %v310 = vld [vmem:[%s0 + $0x114] sm:$0xf]
  %v311 = vld [vmem:[%s0 + $0x118] sm:$0xf]
  %v312 = vld [vmem:[%s0 + $0x11c] sm:$0xf]
  %v313 = vld [vmem:[%s0 + $0x120] sm:$0xf]
  %v314 = vld [vmem:[%s0 + $0x124] sm:$0xf]
  %v315 = vld [vmem:[%s0 + $0x128] sm:$0xf]
  %v316 = vld [vmem:[%s0 + $0x12c] sm:$0xf]
  %v317 = vld [vmem:[%s0 + $0x130] sm:$0xf]
  %v318 = vld [vmem:[%s0 + $0x134] sm:$0xf]
  %v319 = vld [vmem:[%s0 + $0x138] sm:$0xf]
  %v320 = vld [vmem:[%s0 + $0x13c] sm:$0xf]
  %v321 = vld [vmem:[%s0 + $0x140] sm:$0xf]
  %v322 = vld [vmem:[%s0 + $0x144] sm:$0xf]
  %v323 = vld [vmem:[%s0 + $0x148] sm:$0xf]
  %v324 = vld [vmem:[%s0 + $0x14c] sm:$0xf]
  %v325 = vld [vmem:[%s0 + $0x150] sm:$0x3]
  %v326 = vunpack.c.l.bf16 %v297
  %v327 = vunpack.c.l.bf16 %v298
  %v328 = vunpack.c.l.bf16 %v299
  %v329 = vunpack.c.l.bf16 %v300
  %v330 = vunpack.c.l.bf16 %v301
  %v331 = vunpack.c.l.bf16 %v302
  %v332 = vunpack.c.l.bf16 %v303
  %v333 = vunpack.c.l.bf16 %v304
  %v334 = vunpack.c.l.bf16 %v305
  %v335 = vunpack.c.l.bf16 %v306
  %v336 = vunpack.c.l.bf16 %v307
  %v337 = vunpack.c.l.bf16 %v308
  %v338 = vunpack.c.l.bf16 %v309
  %v339 = vunpack.c.l.bf16 %v310
  %v340 = vunpack.c.l.bf16 %v311
  %v341 = vunpack.c.l.bf16 %v312
  %v342 = vunpack.c.l.bf16 %v313
  %v343 = vunpack.c.l.bf16 %v314
  %v344 = vunpack.c.l.bf16 %v315
  %v345 = vunpack.c.l.bf16 %v316
  %v346 = vunpack.c.l.bf16 %v317
  %v347 = vunpack.c.l.bf16 %v318
  %v348 = vunpack.c.l.bf16 %v319
  %v349 = vunpack.c.l.bf16 %v320
  %v350 = vunpack.c.l.bf16 %v321
  %v351 = vunpack.c.l.bf16 %v322
  %v352 = vunpack.c.l.bf16 %v323
  %v353 = vunpack.c.l.bf16 %v324
  %v354 = vunpack.c.l.bf16 %v325
  %vm384 = vcmask 1045504
  %v385 = vrot.slane %v326, 2
  %v386 = vrot.slane %v327, 2
  %v387 = vsel %vm384, %v385, %v386
  %v388 = vrot.slane %v328, 2
  %v389 = vsel %vm384, %v386, %v388
  %v390 = vrot.slane %v329, 2
  %v391 = vsel %vm384, %v388, %v390
  %v392 = vrot.slane %v330, 2
  %v393 = vsel %vm384, %v390, %v392
  %v394 = vrot.slane %v331, 2
  %v395 = vsel %vm384, %v392, %v394
  %v396 = vrot.slane %v332, 2
  %v397 = vsel %vm384, %v394, %v396
  %v398 = vrot.slane %v333, 2
  %v399 = vsel %vm384, %v396, %v398
  %v400 = vrot.slane %v334, 2
  %v401 = vsel %vm384, %v398, %v400
  %v402 = vrot.slane %v335, 2
  %v403 = vsel %vm384, %v400, %v402
  %v404 = vrot.slane %v336, 2
  %v405 = vsel %vm384, %v402, %v404
  %v406 = vrot.slane %v337, 2
  %v407 = vsel %vm384, %v404, %v406
  %v408 = vrot.slane %v338, 2
  %v409 = vsel %vm384, %v406, %v408
  %v410 = vrot.slane %v339, 2
  %v411 = vsel %vm384, %v408, %v410
  %v412 = vrot.slane %v340, 2
  %v413 = vsel %vm384, %v410, %v412
  %v414 = vrot.slane %v341, 2
  %v415 = vsel %vm384, %v412, %v414
  %v416 = vrot.slane %v342, 2
  %v417 = vsel %vm384, %v414, %v416
  %v418 = vrot.slane %v343, 2
  %v419 = vsel %vm384, %v416, %v418
  %v420 = vrot.slane %v344, 2
  %v421 = vsel %vm384, %v418, %v420
  %v422 = vrot.slane %v345, 2
  %v423 = vsel %vm384, %v420, %v422
  %v424 = vrot.slane %v346, 2
  %v425 = vsel %vm384, %v422, %v424
  %v426 = vrot.slane %v347, 2
  %v427 = vsel %vm384, %v424, %v426
  %v428 = vrot.slane %v348, 2
  %v429 = vsel %vm384, %v426, %v428
  %v430 = vrot.slane %v349, 2
  %v431 = vsel %vm384, %v428, %v430
  %v432 = vrot.slane %v350, 2
  %v433 = vsel %vm384, %v430, %v432
  %v434 = vrot.slane %v351, 2
  %v435 = vsel %vm384, %v432, %v434
  %v436 = vrot.slane %v352, 2
  %v437 = vsel %vm384, %v434, %v436
  %v438 = vrot.slane %v353, 2
  %v439 = vsel %vm384, %v436, %v438
  %v440 = vrot.slane %v354, 2
  %v441 = vsel %vm384, %v438, %v440
  %v471 = vadd.f32 %v387, %v389
  %v472 = vadd.f32 %v471, %v391
  %v473 = vadd.f32 %v472, %v393
  %v474 = vadd.f32 %v473, %v395
  %v475 = vadd.f32 %v474, %v397
  %v476 = vadd.f32 %v475, %v399
  %v477 = vadd.f32 %v476, %v401
  %v478 = vadd.f32 %v477, %v403
  %v479 = vadd.f32 %v478, %v405
  %v480 = vadd.f32 %v479, %v407
  %v481 = vadd.f32 %v480, %v409
  %v482 = vadd.f32 %v481, %v411
  %v483 = vadd.f32 %v482, %v413
  %v484 = vadd.f32 %v483, %v415
  %v485 = vadd.f32 %v484, %v417
  %v486 = vadd.f32 %v485, %v419
  %v487 = vadd.f32 %v486, %v421
  %v488 = vadd.f32 %v487, %v423
  %v489 = vadd.f32 %v488, %v425
  %v490 = vadd.f32 %v489, %v427
  %v491 = vadd.f32 %v490, %v429
  %v492 = vadd.f32 %v491, %v431
  %v493 = vadd.f32 %v492, %v433
  %v494 = vadd.f32 %v493, %v435
  %v495 = vadd.f32 %v494, %v437
  %v496 = vadd.f32 %v495, %v439
  %v497 = vadd.f32 %v496, %v441
  %v498 = vsel %vm99, %v440, 0.0
  %v499 = vadd.f32 %v497, %v498
  %v500 = vrot.slane %v499, 4
  %v501 = vadd.f32 %v499, %v500
  %v502 = vrot.slane %v501, 2
  %v503 = vadd.f32 %v501, %v502
  %v504 = vrot.slane %v503, 1
  %v505 = vadd.f32 %v503, %v504
  %v506 = vmul.f32 %v505, 0.0044444446
  %507 = vst [vmem:[%s3] sm:$0x1] %v108
  %508 = vst [vmem:[%s3 + $0x2] sm:$0x1] %v202
  %509 = vst [vmem:[%s3 + $0x4] sm:$0x1] %v296
  %510 = vst [vmem:[%s3 + $0x6] sm:$0x1] %v506
  %v511 = vld [vmem:[%s0 + $0x70] sm:$0xf]
  %v512 = vld [vmem:[%s0 + $0x74] sm:$0xf]
  %v513 = vld [vmem:[%s0 + $0x78] sm:$0xf]
  %v514 = vld [vmem:[%s0 + $0x7c] sm:$0xf]
  %v515 = vld [vmem:[%s0 + $0x80] sm:$0xf]
  %v516 = vld [vmem:[%s0 + $0x84] sm:$0xf]
  %v517 = vld [vmem:[%s0 + $0x88] sm:$0xf]
  %v518 = vld [vmem:[%s0 + $0x8c] sm:$0xf]
  %v519 = vld [vmem:[%s0 + $0x90] sm:$0xf]
  %v520 = vld [vmem:[%s0 + $0x94] sm:$0xf]
  %v521 = vld [vmem:[%s0 + $0x98] sm:$0xf]
  %v522 = vld [vmem:[%s0 + $0x9c] sm:$0xf]
  %v523 = vld [vmem:[%s0 + $0xa0] sm:$0xf]
  %v524 = vld [vmem:[%s0 + $0xa4] sm:$0xf]
  %v525 = vld [vmem:[%s0 + $0xa8] sm:$0xf]
  %v526 = vld [vmem:[%s0 + $0xac] sm:$0xf]
  %v527 = vld [vmem:[%s0 + $0xb0] sm:$0xf]
  %v528 = vld [vmem:[%s0 + $0xb4] sm:$0xf]
  %v529 = vld [vmem:[%s0 + $0xb8] sm:$0xf]
  %v530 = vld [vmem:[%s0 + $0xbc] sm:$0xf]
  %v531 = vld [vmem:[%s0 + $0xc0] sm:$0xf]
  %v532 = vld [vmem:[%s0 + $0xc4] sm:$0xf]
  %v533 = vld [vmem:[%s0 + $0xc8] sm:$0xf]
  %v534 = vld [vmem:[%s0 + $0xcc] sm:$0xf]
  %v535 = vld [vmem:[%s0 + $0xd0] sm:$0xf]
  %v536 = vld [vmem:[%s0 + $0xd4] sm:$0xf]
  %v537 = vld [vmem:[%s0 + $0xd8] sm:$0xf]
  %v538 = vld [vmem:[%s0 + $0xdc] sm:$0xf]
  %v539 = vld [vmem:[%s0 + $0xe0] sm:$0x1]
  %v540 = vunpack.c.l.bf16 %v511
  %v541 = vunpack.c.l.bf16 %v512
  %v542 = vunpack.c.l.bf16 %v513
  %v543 = vunpack.c.l.bf16 %v514
  %v544 = vunpack.c.l.bf16 %v515
  %v545 = vunpack.c.l.bf16 %v516
  %v546 = vunpack.c.l.bf16 %v517
  %v547 = vunpack.c.l.bf16 %v518
  %v548 = vunpack.c.l.bf16 %v519
  %v549 = vunpack.c.l.bf16 %v520
  %v550 = vunpack.c.l.bf16 %v521
  %v551 = vunpack.c.l.bf16 %v522
  %v552 = vunpack.c.l.bf16 %v523
  %v553 = vunpack.c.l.bf16 %v524
  %v554 = vunpack.c.l.bf16 %v525
  %v555 = vunpack.c.l.bf16 %v526
  %v556 = vunpack.c.l.bf16 %v527
  %v557 = vunpack.c.l.bf16 %v528
  %v558 = vunpack.c.l.bf16 %v529
  %v559 = vunpack.c.l.bf16 %v530
  %v560 = vunpack.c.l.bf16 %v531
  %v561 = vunpack.c.l.bf16 %v532
  %v562 = vunpack.c.l.bf16 %v533
  %v563 = vunpack.c.l.bf16 %v534
  %v564 = vunpack.c.l.bf16 %v535
  %v565 = vunpack.c.l.bf16 %v536
  %v566 = vunpack.c.l.bf16 %v537
  %v567 = vunpack.c.l.bf16 %v538
  %v568 = vunpack.c.l.bf16 %v539
  %vm598 = vcmask 1046528
  %v599 = vrot.slane %v540, 1
  %v600 = vrot.slane %v541, 1
  %v601 = vsel %vm598, %v599, %v600
  %v602 = vrot.slane %v542, 1
  %v603 = vsel %vm598, %v600, %v602
  %v604 = vrot.slane %v543, 1
  %v605 = vsel %vm598, %v602, %v604
  %v606 = vrot.slane %v544, 1
  %v607 = vsel %vm598, %v604, %v606
  %v608 = vrot.slane %v545, 1
  %v609 = vsel %vm598, %v606, %v608
  %v610 = vrot.slane %v546, 1
  %v611 = vsel %vm598, %v608, %v610
  %v612 = vrot.slane %v547, 1
  %v613 = vsel %vm598, %v610, %v612
  %v614 = vrot.slane %v548, 1
  %v615 = vsel %vm598, %v612, %v614
  %v616 = vrot.slane %v549, 1
  %v617 = vsel %vm598, %v614, %v616
  %v618 = vrot.slane %v550, 1
  %v619 = vsel %vm598, %v616, %v618
  %v620 = vrot.slane %v551, 1
  %v621 = vsel %vm598, %v618, %v620
  %v622 = vrot.slane %v552, 1
  %v623 = vsel %vm598, %v620, %v622
  %v624 = vrot.slane %v553, 1
  %v625 = vsel %vm598, %v622, %v624
  %v626 = vrot.slane %v554, 1
  %v627 = vsel %vm598, %v624, %v626
  %v628 = vrot.slane %v555, 1
  %v629 = vsel %vm598, %v626, %v628
  %v630 = vrot.slane %v556, 1
  %v631 = vsel %vm598, %v628, %v630
  %v632 = vrot.slane %v557, 1
  %v633 = vsel %vm598, %v630, %v632
  %v634 = vrot.slane %v558, 1
  %v635 = vsel %vm598, %v632, %v634
  %v636 = vrot.slane %v559, 1
  %v637 = vsel %vm598, %v634, %v636
  %v638 = vrot.slane %v560, 1
  %v639 = vsel %vm598, %v636, %v638
  %v640 = vrot.slane %v561, 1
  %v641 = vsel %vm598, %v638, %v640
  %v642 = vrot.slane %v562, 1
  %v643 = vsel %vm598, %v640, %v642
  %v644 = vrot.slane %v563, 1
  %v645 = vsel %vm598, %v642, %v644
  %v646 = vrot.slane %v564, 1
  %v647 = vsel %vm598, %v644, %v646
  %v648 = vrot.slane %v565, 1
  %v649 = vsel %vm598, %v646, %v648
  %v650 = vrot.slane %v566, 1
  %v651 = vsel %vm598, %v648, %v650
  %v652 = vrot.slane %v567, 1
  %v653 = vsel %vm598, %v650, %v652
  %v654 = vrot.slane %v568, 1
  %v655 = vsel %vm598, %v652, %v654
  %v685 = vadd.f32 %v601, %v603
  %v686 = vadd.f32 %v685, %v605
  %v687 = vadd.f32 %v686, %v607
  %v688 = vadd.f32 %v687, %v609
  %v689 = vadd.f32 %v688, %v611
  %v690 = vadd.f32 %v689, %v613
  %v691 = vadd.f32 %v690, %v615
  %v692 = vadd.f32 %v691, %v617
  %v693 = vadd.f32 %v692, %v619
  %v694 = vadd.f32 %v693, %v621
  %v695 = vadd.f32 %v694, %v623
  %v696 = vadd.f32 %v695, %v625
  %v697 = vadd.f32 %v696, %v627
  %v698 = vadd.f32 %v697, %v629
  %v699 = vadd.f32 %v698, %v631
  %v700 = vadd.f32 %v699, %v633
  %v701 = vadd.f32 %v700, %v635
  %v702 = vadd.f32 %v701, %v637
  %v703 = vadd.f32 %v702, %v639
  %v704 = vadd.f32 %v703, %v641
  %v705 = vadd.f32 %v704, %v643
  %v706 = vadd.f32 %v705, %v645
  %v707 = vadd.f32 %v706, %v647
  %v708 = vadd.f32 %v707, %v649
  %v709 = vadd.f32 %v708, %v651
  %v710 = vadd.f32 %v709, %v653
  %v711 = vadd.f32 %v710, %v655
  %v712 = vsel %vm99, %v654, 0.0
  %v713 = vadd.f32 %v711, %v712
  %v714 = vrot.slane %v713, 4
  %v715 = vadd.f32 %v713, %v714
  %v716 = vrot.slane %v715, 2
  %v717 = vadd.f32 %v715, %v716
  %v718 = vrot.slane %v717, 1
  %v719 = vadd.f32 %v717, %v718
  %v720 = vmul.f32 %v719, 0.0044444446
  %v721 = vld [vmem:[%s1 + $0x70] sm:$0xf]
  %v722 = vld [vmem:[%s1 + $0x74] sm:$0xf]
  %v723 = vld [vmem:[%s1 + $0x78] sm:$0xf]
  %v724 = vld [vmem:[%s1 + $0x7c] sm:$0xf]
  %v725 = vld [vmem:[%s1 + $0x80] sm:$0xf]
  %v726 = vld [vmem:[%s1 + $0x84] sm:$0xf]
  %v727 = vld [vmem:[%s1 + $0x88] sm:$0xf]
  %v728 = vld [vmem:[%s1 + $0x8c] sm:$0xf]
  %v729 = vld [vmem:[%s1 + $0x90] sm:$0xf]
  %v730 = vld [vmem:[%s1 + $0x94] sm:$0xf]
  %v731 = vld [vmem:[%s1 + $0x98] sm:$0xf]
  %v732 = vld [vmem:[%s1 + $0x9c] sm:$0xf]
  %v733 = vld [vmem:[%s1 + $0xa0] sm:$0xf]
  %v734 = vld [vmem:[%s1 + $0xa4] sm:$0xf]
  %v735 = vld [vmem:[%s1 + $0xa8] sm:$0xf]
  %v736 = vld [vmem:[%s1 + $0xac] sm:$0xf]
  %v737 = vld [vmem:[%s1 + $0xb0] sm:$0xf]
  %v738 = vld [vmem:[%s1 + $0xb4] sm:$0xf]
  %v739 = vld [vmem:[%s1 + $0xb8] sm:$0xf]
  %v740 = vld [vmem:[%s1 + $0xbc] sm:$0xf]
  %v741 = vld [vmem:[%s1 + $0xc0] sm:$0xf]
  %v742 = vld [vmem:[%s1 + $0xc4] sm:$0xf]
  %v743 = vld [vmem:[%s1 + $0xc8] sm:$0xf]
  %v744 = vld [vmem:[%s1 + $0xcc] sm:$0xf]
  %v745 = vld [vmem:[%s1 + $0xd0] sm:$0xf]
  %v746 = vld [vmem:[%s1 + $0xd4] sm:$0xf]
  %v747 = vld [vmem:[%s1 + $0xd8] sm:$0xf]
  %v748 = vld [vmem:[%s1 + $0xdc] sm:$0xf]
  %v749 = vld [vmem:[%s1 + $0xe0] sm:$0x1]
  %v750 = vunpack.c.l.bf16 %v721
  %v751 = vunpack.c.l.bf16 %v722
  %v752 = vunpack.c.l.bf16 %v723
  %v753 = vunpack.c.l.bf16 %v724
  %v754 = vunpack.c.l.bf16 %v725
  %v755 = vunpack.c.l.bf16 %v726
  %v756 = vunpack.c.l.bf16 %v727
  %v757 = vunpack.c.l.bf16 %v728
  %v758 = vunpack.c.l.bf16 %v729
  %v759 = vunpack.c.l.bf16 %v730
  %v760 = vunpack.c.l.bf16 %v731
  %v761 = vunpack.c.l.bf16 %v732
  %v762 = vunpack.c.l.bf16 %v733
  %v763 = vunpack.c.l.bf16 %v734
  %v764 = vunpack.c.l.bf16 %v735
  %v765 = vunpack.c.l.bf16 %v736
  %v766 = vunpack.c.l.bf16 %v737
  %v767 = vunpack.c.l.bf16 %v738
  %v768 = vunpack.c.l.bf16 %v739
  %v769 = vunpack.c.l.bf16 %v740
  %v770 = vunpack.c.l.bf16 %v741
  %v771 = vunpack.c.l.bf16 %v742
  %v772 = vunpack.c.l.bf16 %v743
  %v773 = vunpack.c.l.bf16 %v744
  %v774 = vunpack.c.l.bf16 %v745
  %v775 = vunpack.c.l.bf16 %v746
  %v776 = vunpack.c.l.bf16 %v747
  %v777 = vunpack.c.l.bf16 %v748
  %v778 = vunpack.c.l.bf16 %v749
  %v808 = vrot.slane %v750, 1
  %v809 = vrot.slane %v751, 1
  %v810 = vsel %vm598, %v808, %v809
  %v811 = vrot.slane %v752, 1
  %v812 = vsel %vm598, %v809, %v811
  %v813 = vrot.slane %v753, 1
  %v814 = vsel %vm598, %v811, %v813
  %v815 = vrot.slane %v754, 1
  %v816 = vsel %vm598, %v813, %v815
  %v817 = vrot.slane %v755, 1
  %v818 = vsel %vm598, %v815, %v817
  %v819 = vrot.slane %v756, 1
  %v820 = vsel %vm598, %v817, %v819
  %v821 = vrot.slane %v757, 1
  %v822 = vsel %vm598, %v819, %v821
  %v823 = vrot.slane %v758, 1
  %v824 = vsel %vm598, %v821, %v823
  %v825 = vrot.slane %v759, 1
  %v826 = vsel %vm598, %v823, %v825
  %v827 = vrot.slane %v760, 1
  %v828 = vsel %vm598, %v825, %v827
  %v829 = vrot.slane %v761, 1
  %v830 = vsel %vm598, %v827, %v829
  %v831 = vrot.slane %v762, 1
  %v832 = vsel %vm598, %v829, %v831
  %v833 = vrot.slane %v763, 1
  %v834 = vsel %vm598, %v831, %v833
  %v835 = vrot.slane %v764, 1
  %v836 = vsel %vm598, %v833, %v835
  %v837 = vrot.slane %v765, 1
  %v838 = vsel %vm598, %v835, %v837
  %v839 = vrot.slane %v766, 1
  %v840 = vsel %vm598, %v837, %v839
  %v841 = vrot.slane %v767, 1
  %v842 = vsel %vm598, %v839, %v841
  %v843 = vrot.slane %v768, 1
  %v844 = vsel %vm598, %v841, %v843
  %v845 = vrot.slane %v769, 1
  %v846 = vsel %vm598, %v843, %v845
  %v847 = vrot.slane %v770, 1
  %v848 = vsel %vm598, %v845, %v847
  %v849 = vrot.slane %v771, 1
  %v850 = vsel %vm598, %v847, %v849
  %v851 = vrot.slane %v772, 1
  %v852 = vsel %vm598, %v849, %v851
  %v853 = vrot.slane %v773, 1
  %v854 = vsel %vm598, %v851, %v853
  %v855 = vrot.slane %v774, 1
  %v856 = vsel %vm598, %v853, %v855
  %v857 = vrot.slane %v775, 1
  %v858 = vsel %vm598, %v855, %v857
  %v859 = vrot.slane %v776, 1
  %v860 = vsel %vm598, %v857, %v859
  %v861 = vrot.slane %v777, 1
  %v862 = vsel %vm598, %v859, %v861
  %v863 = vrot.slane %v778, 1
  %v864 = vsel %vm598, %v861, %v863
  %v894 = vadd.f32 %v810, %v812
  %v895 = vadd.f32 %v894, %v814
  %v896 = vadd.f32 %v895, %v816
  %v897 = vadd.f32 %v896, %v818
  %v898 = vadd.f32 %v897, %v820
  %v899 = vadd.f32 %v898, %v822
  %v900 = vadd.f32 %v899, %v824
  %v901 = vadd.f32 %v900, %v826
  %v902 = vadd.f32 %v901, %v828
  %v903 = vadd.f32 %v902, %v830
  %v904 = vadd.f32 %v903, %v832
  %v905 = vadd.f32 %v904, %v834
  %v906 = vadd.f32 %v905, %v836
  %v907 = vadd.f32 %v906, %v838
  %v908 = vadd.f32 %v907, %v840
  %v909 = vadd.f32 %v908, %v842
  %v910 = vadd.f32 %v909, %v844
  %v911 = vadd.f32 %v910, %v846
  %v912 = vadd.f32 %v911, %v848
  %v913 = vadd.f32 %v912, %v850
  %v914 = vadd.f32 %v913, %v852
  %v915 = vadd.f32 %v914, %v854
  %v916 = vadd.f32 %v915, %v856
  %v917 = vadd.f32 %v916, %v858
  %v918 = vadd.f32 %v917, %v860
  %v919 = vadd.f32 %v918, %v862
  %v920 = vadd.f32 %v919, %v864
  %v921 = vsel %vm99, %v863, 0.0
  %v922 = vadd.f32 %v920, %v921
  %v923 = vrot.slane %v922, 4
  %v924 = vadd.f32 %v922, %v923
  %v925 = vrot.slane %v924, 2
  %v926 = vadd.f32 %v924, %v925
  %v927 = vrot.slane %v926, 1
  %v928 = vadd.f32 %v926, %v927
  %v929 = vmul.f32 %v928, 0.0044444446
  %v930 = vld [vmem:[%s2 + $0x70] sm:$0xf]
  %v931 = vld [vmem:[%s2 + $0x74] sm:$0xf]
  %v932 = vld [vmem:[%s2 + $0x78] sm:$0xf]
  %v933 = vld [vmem:[%s2 + $0x7c] sm:$0xf]
  %v934 = vld [vmem:[%s2 + $0x80] sm:$0xf]
  %v935 = vld [vmem:[%s2 + $0x84] sm:$0xf]
  %v936 = vld [vmem:[%s2 + $0x88] sm:$0xf]
  %v937 = vld [vmem:[%s2 + $0x8c] sm:$0xf]
  %v938 = vld [vmem:[%s2 + $0x90] sm:$0xf]
  %v939 = vld [vmem:[%s2 + $0x94] sm:$0xf]
  %v940 = vld [vmem:[%s2 + $0x98] sm:$0xf]
  %v941 = vld [vmem:[%s2 + $0x9c] sm:$0xf]
  %v942 = vld [vmem:[%s2 + $0xa0] sm:$0xf]
  %v943 = vld [vmem:[%s2 + $0xa4] sm:$0xf]
  %v944 = vld [vmem:[%s2 + $0xa8] sm:$0xf]
  %v945 = vld [vmem:[%s2 + $0xac] sm:$0xf]
  %v946 = vld [vmem:[%s2 + $0xb0] sm:$0xf]
  %v947 = vld [vmem:[%s2 + $0xb4] sm:$0xf]
  %v948 = vld [vmem:[%s2 + $0xb8] sm:$0xf]
  %v949 = vld [vmem:[%s2 + $0xbc] sm:$0xf]
  %v950 = vld [vmem:[%s2 + $0xc0] sm:$0xf]
  %v951 = vld [vmem:[%s2 + $0xc4] sm:$0xf]
  %v952 = vld [vmem:[%s2 + $0xc8] sm:$0xf]
  %v953 = vld [vmem:[%s2 + $0xcc] sm:$0xf]
  %v954 = vld [vmem:[%s2 + $0xd0] sm:$0xf]
  %v955 = vld [vmem:[%s2 + $0xd4] sm:$0xf]
  %v956 = vld [vmem:[%s2 + $0xd8] sm:$0xf]
  %v957 = vld [vmem:[%s2 + $0xdc] sm:$0xf]
  %v958 = vld [vmem:[%s2 + $0xe0] sm:$0x1]
  %v959 = vunpack.c.l.bf16 %v930
  %v960 = vunpack.c.l.bf16 %v931
  %v961 = vunpack.c.l.bf16 %v932
  %v962 = vunpack.c.l.bf16 %v933
  %v963 = vunpack.c.l.bf16 %v934
  %v964 = vunpack.c.l.bf16 %v935
  %v965 = vunpack.c.l.bf16 %v936
  %v966 = vunpack.c.l.bf16 %v937
  %v967 = vunpack.c.l.bf16 %v938
  %v968 = vunpack.c.l.bf16 %v939
  %v969 = vunpack.c.l.bf16 %v940
  %v970 = vunpack.c.l.bf16 %v941
  %v971 = vunpack.c.l.bf16 %v942
  %v972 = vunpack.c.l.bf16 %v943
  %v973 = vunpack.c.l.bf16 %v944
  %v974 = vunpack.c.l.bf16 %v945
  %v975 = vunpack.c.l.bf16 %v946
  %v976 = vunpack.c.l.bf16 %v947
  %v977 = vunpack.c.l.bf16 %v948
  %v978 = vunpack.c.l.bf16 %v949
  %v979 = vunpack.c.l.bf16 %v950
  %v980 = vunpack.c.l.bf16 %v951
  %v981 = vunpack.c.l.bf16 %v952
  %v982 = vunpack.c.l.bf16 %v953
  %v983 = vunpack.c.l.bf16 %v954
  %v984 = vunpack.c.l.bf16 %v955
  %v985 = vunpack.c.l.bf16 %v956
  %v986 = vunpack.c.l.bf16 %v957
  %v987 = vunpack.c.l.bf16 %v958
  %v1017 = vrot.slane %v959, 1
  %v1018 = vrot.slane %v960, 1
  %v1019 = vsel %vm598, %v1017, %v1018
  %v1020 = vrot.slane %v961, 1
  %v1021 = vsel %vm598, %v1018, %v1020
  %v1022 = vrot.slane %v962, 1
  %v1023 = vsel %vm598, %v1020, %v1022
  %v1024 = vrot.slane %v963, 1
  %v1025 = vsel %vm598, %v1022, %v1024
  %v1026 = vrot.slane %v964, 1
  %v1027 = vsel %vm598, %v1024, %v1026
  %v1028 = vrot.slane %v965, 1
  %v1029 = vsel %vm598, %v1026, %v1028
  %v1030 = vrot.slane %v966, 1
  %v1031 = vsel %vm598, %v1028, %v1030
  %v1032 = vrot.slane %v967, 1
  %v1033 = vsel %vm598, %v1030, %v1032
  %v1034 = vrot.slane %v968, 1
  %v1035 = vsel %vm598, %v1032, %v1034
  %v1036 = vrot.slane %v969, 1
  %v1037 = vsel %vm598, %v1034, %v1036
  %v1038 = vrot.slane %v970, 1
  %v1039 = vsel %vm598, %v1036, %v1038
  %v1040 = vrot.slane %v971, 1
  %v1041 = vsel %vm598, %v1038, %v1040
  %v1042 = vrot.slane %v972, 1
  %v1043 = vsel %vm598, %v1040, %v1042
  %v1044 = vrot.slane %v973, 1
  %v1045 = vsel %vm598, %v1042, %v1044
  %v1046 = vrot.slane %v974, 1
  %v1047 = vsel %vm598, %v1044, %v1046
  %v1048 = vrot.slane %v975, 1
  %v1049 = vsel %vm598, %v1046, %v1048
  %v1050 = vrot.slane %v976, 1
  %v1051 = vsel %vm598, %v1048, %v1050
  %v1052 = vrot.slane %v977, 1
  %v1053 = vsel %vm598, %v1050, %v1052
  %v1054 = vrot.slane %v978, 1
  %v1055 = vsel %vm598, %v1052, %v1054
  %v1056 = vrot.slane %v979, 1
  %v1057 = vsel %vm598, %v1054, %v1056
  %v1058 = vrot.slane %v980, 1
  %v1059 = vsel %vm598, %v1056, %v1058
  %v1060 = vrot.slane %v981, 1
  %v1061 = vsel %vm598, %v1058, %v1060
  %v1062 = vrot.slane %v982, 1
  %v1063 = vsel %vm598, %v1060, %v1062
  %v1064 = vrot.slane %v983, 1
  %v1065 = vsel %vm598, %v1062, %v1064
  %v1066 = vrot.slane %v984, 1
  %v1067 = vsel %vm598, %v1064, %v1066
  %v1068 = vrot.slane %v985, 1
  %v1069 = vsel %vm598, %v1066, %v1068
  %v1070 = vrot.slane %v986, 1
  %v1071 = vsel %vm598, %v1068, %v1070
  %v1072 = vrot.slane %v987, 1
  %v1073 = vsel %vm598, %v1070, %v1072
  %v1103 = vadd.f32 %v1019, %v1021
  %v1104 = vadd.f32 %v1103, %v1023
  %v1105 = vadd.f32 %v1104, %v1025
  %v1106 = vadd.f32 %v1105, %v1027
  %v1107 = vadd.f32 %v1106, %v1029
  %v1108 = vadd.f32 %v1107, %v1031
  %v1109 = vadd.f32 %v1108, %v1033
  %v1110 = vadd.f32 %v1109, %v1035
  %v1111 = vadd.f32 %v1110, %v1037
  %v1112 = vadd.f32 %v1111, %v1039
  %v1113 = vadd.f32 %v1112, %v1041
  %v1114 = vadd.f32 %v1113, %v1043
  %v1115 = vadd.f32 %v1114, %v1045
  %v1116 = vadd.f32 %v1115, %v1047
  %v1117 = vadd.f32 %v1116, %v1049
  %v1118 = vadd.f32 %v1117, %v1051
  %v1119 = vadd.f32 %v1118, %v1053
  %v1120 = vadd.f32 %v1119, %v1055
  %v1121 = vadd.f32 %v1120, %v1057
  %v1122 = vadd.f32 %v1121, %v1059
  %v1123 = vadd.f32 %v1122, %v1061
  %v1124 = vadd.f32 %v1123, %v1063
  %v1125 = vadd.f32 %v1124, %v1065
  %v1126 = vadd.f32 %v1125, %v1067
  %v1127 = vadd.f32 %v1126, %v1069
  %v1128 = vadd.f32 %v1127, %v1071
  %v1129 = vadd.f32 %v1128, %v1073
  %v1130 = vsel %vm99, %v1072, 0.0
  %v1131 = vadd.f32 %v1129, %v1130
  %v1132 = vrot.slane %v1131, 4
  %v1133 = vadd.f32 %v1131, %v1132
  %v1134 = vrot.slane %v1133, 2
  %v1135 = vadd.f32 %v1133, %v1134
  %v1136 = vrot.slane %v1135, 1
  %v1137 = vadd.f32 %v1135, %v1136
  %v1138 = vmul.f32 %v1137, 0.0044444446
  %v1139 = vld [vmem:[%s0 + $0x150] sm:$0xe]
  %v1140 = vld [vmem:[%s0 + $0x154] sm:$0xf]
  %v1141 = vld [vmem:[%s0 + $0x158] sm:$0xf]
  %v1142 = vld [vmem:[%s0 + $0x15c] sm:$0xf]
  %v1143 = vld [vmem:[%s0 + $0x160] sm:$0xf]
  %v1144 = vld [vmem:[%s0 + $0x164] sm:$0xf]
  %v1145 = vld [vmem:[%s0 + $0x168] sm:$0xf]
  %v1146 = vld [vmem:[%s0 + $0x16c] sm:$0xf]
  %v1147 = vld [vmem:[%s0 + $0x170] sm:$0xf]
  %v1148 = vld [vmem:[%s0 + $0x174] sm:$0xf]
  %v1149 = vld [vmem:[%s0 + $0x178] sm:$0xf]
  %v1150 = vld [vmem:[%s0 + $0x17c] sm:$0xf]
  %v1151 = vld [vmem:[%s0 + $0x180] sm:$0xf]
  %v1152 = vld [vmem:[%s0 + $0x184] sm:$0xf]
  %v1153 = vld [vmem:[%s0 + $0x188] sm:$0xf]
  %v1154 = vld [vmem:[%s0 + $0x18c] sm:$0xf]
  %v1155 = vld [vmem:[%s0 + $0x190] sm:$0xf]
  %v1156 = vld [vmem:[%s0 + $0x194] sm:$0xf]
  %v1157 = vld [vmem:[%s0 + $0x198] sm:$0xf]
  %v1158 = vld [vmem:[%s0 + $0x19c] sm:$0xf]
  %v1159 = vld [vmem:[%s0 + $0x1a0] sm:$0xf]
  %v1160 = vld [vmem:[%s0 + $0x1a4] sm:$0xf]
  %v1161 = vld [vmem:[%s0 + $0x1a8] sm:$0xf]
  %v1162 = vld [vmem:[%s0 + $0x1ac] sm:$0xf]
  %v1163 = vld [vmem:[%s0 + $0x1b0] sm:$0xf]
  %v1164 = vld [vmem:[%s0 + $0x1b4] sm:$0xf]
  %v1165 = vld [vmem:[%s0 + $0x1b8] sm:$0xf]
  %v1166 = vld [vmem:[%s0 + $0x1bc] sm:$0xf]
  %v1167 = vld [vmem:[%s0 + $0x1c0] sm:$0x3]
  %v1168 = vunpack.c.l.bf16 %v1139
  %v1169 = vunpack.c.l.bf16 %v1140
  %v1170 = vunpack.c.l.bf16 %v1141
  %v1171 = vunpack.c.l.bf16 %v1142
  %v1172 = vunpack.c.l.bf16 %v1143
  %v1173 = vunpack.c.l.bf16 %v1144
  %v1174 = vunpack.c.l.bf16 %v1145
  %v1175 = vunpack.c.l.bf16 %v1146
  %v1176 = vunpack.c.l.bf16 %v1147
  %v1177 = vunpack.c.l.bf16 %v1148
  %v1178 = vunpack.c.l.bf16 %v1149
  %v1179 = vunpack.c.l.bf16 %v1150
  %v1180 = vunpack.c.l.bf16 %v1151
  %v1181 = vunpack.c.l.bf16 %v1152
  %v1182 = vunpack.c.l.bf16 %v1153
  %v1183 = vunpack.c.l.bf16 %v1154
  %v1184 = vunpack.c.l.bf16 %v1155
  %v1185 = vunpack.c.l.bf16 %v1156
  %v1186 = vunpack.c.l.bf16 %v1157
  %v1187 = vunpack.c.l.bf16 %v1158
  %v1188 = vunpack.c.l.bf16 %v1159
  %v1189 = vunpack.c.l.bf16 %v1160
  %v1190 = vunpack.c.l.bf16 %v1161
  %v1191 = vunpack.c.l.bf16 %v1162
  %v1192 = vunpack.c.l.bf16 %v1163
  %v1193 = vunpack.c.l.bf16 %v1164
  %v1194 = vunpack.c.l.bf16 %v1165
  %v1195 = vunpack.c.l.bf16 %v1166
  %v1196 = vunpack.c.l.bf16 %v1167
  %vm1226 = vcmask 1044480
  %v1227 = vrot.slane %v1168, 3
  %v1228 = vrot.slane %v1169, 3
  %v1229 = vsel %vm1226, %v1227, %v1228
  %v1230 = vrot.slane %v1170, 3
  %v1231 = vsel %vm1226, %v1228, %v1230
  %v1232 = vrot.slane %v1171, 3
  %v1233 = vsel %vm1226, %v1230, %v1232
  %v1234 = vrot.slane %v1172, 3
  %v1235 = vsel %vm1226, %v1232, %v1234
  %v1236 = vrot.slane %v1173, 3
  %v1237 = vsel %vm1226, %v1234, %v1236
  %v1238 = vrot.slane %v1174, 3
  %v1239 = vsel %vm1226, %v1236, %v1238
  %v1240 = vrot.slane %v1175, 3
  %v1241 = vsel %vm1226, %v1238, %v1240
  %v1242 = vrot.slane %v1176, 3
  %v1243 = vsel %vm1226, %v1240, %v1242
  %v1244 = vrot.slane %v1177, 3
  %v1245 = vsel %vm1226, %v1242, %v1244
  %v1246 = vrot.slane %v1178, 3
  %v1247 = vsel %vm1226, %v1244, %v1246
  %v1248 = vrot.slane %v1179, 3
  %v1249 = vsel %vm1226, %v1246, %v1248
  %v1250 = vrot.slane %v1180, 3
  %v1251 = vsel %vm1226, %v1248, %v1250
  %v1252 = vrot.slane %v1181, 3
  %v1253 = vsel %vm1226, %v1250, %v1252
  %v1254 = vrot.slane %v1182, 3
  %v1255 = vsel %vm1226, %v1252, %v1254
  %v1256 = vrot.slane %v1183, 3
  %v1257 = vsel %vm1226, %v1254, %v1256
  %v1258 = vrot.slane %v1184, 3
  %v1259 = vsel %vm1226, %v1256, %v1258
  %v1260 = vrot.slane %v1185, 3
  %v1261 = vsel %vm1226, %v1258, %v1260
  %v1262 = vrot.slane %v1186, 3
  %v1263 = vsel %vm1226, %v1260, %v1262
  %v1264 = vrot.slane %v1187, 3
  %v1265 = vsel %vm1226, %v1262, %v1264
  %v1266 = vrot.slane %v1188, 3
  %v1267 = vsel %vm1226, %v1264, %v1266
  %v1268 = vrot.slane %v1189, 3
  %v1269 = vsel %vm1226, %v1266, %v1268
  %v1270 = vrot.slane %v1190, 3
  %v1271 = vsel %vm1226, %v1268, %v1270
  %v1272 = vrot.slane %v1191, 3
  %v1273 = vsel %vm1226, %v1270, %v1272
  %v1274 = vrot.slane %v1192, 3
  %v1275 = vsel %vm1226, %v1272, %v1274
  %v1276 = vrot.slane %v1193, 3
  %v1277 = vsel %vm1226, %v1274, %v1276
  %v1278 = vrot.slane %v1194, 3
  %v1279 = vsel %vm1226, %v1276, %v1278
  %v1280 = vrot.slane %v1195, 3
  %v1281 = vsel %vm1226, %v1278, %v1280
  %v1282 = vrot.slane %v1196, 3
  %v1283 = vsel %vm1226, %v1280, %v1282
  %v1313 = vadd.f32 %v1229, %v1231
  %v1314 = vadd.f32 %v1313, %v1233
  %v1315 = vadd.f32 %v1314, %v1235
  %v1316 = vadd.f32 %v1315, %v1237
  %v1317 = vadd.f32 %v1316, %v1239
  %v1318 = vadd.f32 %v1317, %v1241
  %v1319 = vadd.f32 %v1318, %v1243
  %v1320 = vadd.f32 %v1319, %v1245
  %v1321 = vadd.f32 %v1320, %v1247
  %v1322 = vadd.f32 %v1321, %v1249
  %v1323 = vadd.f32 %v1322, %v1251
  %v1324 = vadd.f32 %v1323, %v1253
  %v1325 = vadd.f32 %v1324, %v1255
  %v1326 = vadd.f32 %v1325, %v1257
  %v1327 = vadd.f32 %v1326, %v1259
  %v1328 = vadd.f32 %v1327, %v1261
  %v1329 = vadd.f32 %v1328, %v1263
  %v1330 = vadd.f32 %v1329, %v1265
  %v1331 = vadd.f32 %v1330, %v1267
  %v1332 = vadd.f32 %v1331, %v1269
  %v1333 = vadd.f32 %v1332, %v1271
  %v1334 = vadd.f32 %v1333, %v1273
  %v1335 = vadd.f32 %v1334, %v1275
  %v1336 = vadd.f32 %v1335, %v1277
  %v1337 = vadd.f32 %v1336, %v1279
  %v1338 = vadd.f32 %v1337, %v1281
  %v1339 = vadd.f32 %v1338, %v1283
  %v1340 = vsel %vm99, %v1282, 0.0
  %v1341 = vadd.f32 %v1339, %v1340
  %v1342 = vrot.slane %v1341, 4
  %v1343 = vadd.f32 %v1341, %v1342
  %v1344 = vrot.slane %v1343, 2
  %v1345 = vadd.f32 %v1343, %v1344
  %v1346 = vrot.slane %v1345, 1
  %v1347 = vadd.f32 %v1345, %v1346
  %v1348 = vmul.f32 %v1347, 0.0044444446
  %1349 = vst [vmem:[%s3 + $0x1] sm:$0x1] %v720
  %1350 = vst [vmem:[%s3 + $0x3] sm:$0x1] %v929
  %1351 = vst [vmem:[%s3 + $0x5] sm:$0x1] %v1138
  %1352 = vst [vmem:[%s3 + $0x7] sm:$0x1] %v1348
  // Predicated region
  $region14: #{feature_extractor.11} parent=0 // pred_check
    _
  $region15: #{feature_extractor.11} parent=0 // pred_check_branch
    %1354 = sbr.rel (0) target = $region17
  $region16: #{feature_extractor.11} parent=0 // pred_region
    _
  $region17: #{feature_extractor.11} parent=0 // pred_fallthru
    _
  // Predicated region
  $region18: #{feature_extractor.11} parent=0 // pred_check
    _
  $region19: #{feature_extractor.11} parent=0 // pred_check_branch
    %1356 = sbr.rel (0) target = $region21
  $region20: #{feature_extractor.11} parent=0 // pred_region
    _
  $region21: #{feature_extractor.11} parent=0 // pred_fallthru
    _

</llo_original>
